<compile_context>
chip_gen: v6e
topology: v6e:2x2x1
jax: 0.10.0
libtpu: 0.0.40
codegen_flags: <defaults>
</compile_context>

<pallas_src>
import functools

import jax
import jax.numpy as jnp
from jax.experimental import pallas as pl
from jax.experimental.pallas import tpu as pltpu

_EPS = 1e-5
_LANE = 128   # channel dims are zero-padded to the 128-lane width


def _round_up(x, m):
    return (x + m - 1) // m * m


# ----------------------------------------------------------------------------
# Fused bottleneck kernel
#   inputs : x (N,H,W,Cp) bf16, [xs (N,Ho,Wo,Cp) bf16], weights bf16,
#            BN gamma/beta f32 (1, Cpad)
#   outputs: out = relu(preact) [, preact]   (M2, Ep) f32, lane-dense
#   scratch: zero-halo out1 slab (N, H+2, Wtot, Pp) bf16 (stride==1) / f32
# ----------------------------------------------------------------------------
def _bottleneck_kernel(*refs, n, h, w, stride, eps, downsample, fuse_sc,
                       emit_pre, wpad):
    it = iter(refs)
    x_ref = next(it)
    xs_ref = next(it) if (downsample and not fuse_sc) else None
    w1_ref = next(it); g1_ref = next(it); b1_ref = next(it)
    w2_ref = next(it); g2_ref = next(it); b2_ref = next(it)
    w3_ref = next(it); g3_ref = next(it); b3_ref = next(it)
    ws_ref = next(it) if (downsample and not fuse_sc) else None
    gs_ref = next(it) if downsample else None
    bs_ref = next(it) if downsample else None
    out_ref = next(it)
    pre_ref = next(it) if emit_pre else None
    pad_ref = next(it)

    ho = (h + 2 - 3) // stride + 1
    wo = (w + 2 - 3) // stride + 1
    m1 = n * h * w
    m2 = n * ho * wo
    pp = pad_ref.shape[-1]          # padded `planes`
    pdt = pad_ref.dtype

    def bn(y, g_ref, b_ref):
        # Training-mode BatchNorm, two-pass (cancellation-safe) batch stats
        # over the rows (per channel), f32 epilogue, biased variance.
        mu = jnp.mean(y, axis=0, keepdims=True)
        d = y - mu
        var = jnp.mean(d * d, axis=0, keepdims=True)
        return d * (g_ref[...] * jax.lax.rsqrt(var + eps)) + b_ref[...]

    # ---- conv1 (1x1) [+ fused 1x1 shortcut when stride==1] : one MXU matmul ----
    x4 = x_ref[...]                                   # (N,H,W,Cp) bf16
    x2d = x4.reshape(m1, x4.shape[-1])
    y1w = jnp.dot(x2d, w1_ref[...], preferred_element_type=jnp.float32)
    if fuse_sc:
        y1, ysc = y1w[:, :pp], y1w[:, pp:]            # lane-aligned split
    else:
        y1 = y1w
    o1 = jnp.maximum(bn(y1, g1_ref, b1_ref), 0.0)     # (M1, Pp) f32

    # ---- out1 -> halo-zeroed VMEM scratch (no HBM round trip, no im2col) ----
    # Only the ring actually read by the 3x3 taps is zeroed; the interior is
    # fully overwritten by the sublane-tile-aligned store below.
    zr = jnp.zeros((n, 1, w + 2, pp), pdt)
    pad_ref[:, 0:1, wpad - 1:wpad + w + 1, :] = zr
    pad_ref[:, h + 1:h + 2, wpad - 1:wpad + w + 1, :] = zr
    zc = jnp.zeros((n, h, 1, pp), pdt)
    pad_ref[:, 1:h + 1, wpad - 1:wpad, :] = zc
    pad_ref[:, 1:h + 1, wpad + w:wpad + w + 1, :] = zc
    pad_ref[:, 1:h + 1, wpad:wpad + w, :] = o1.reshape(n, h, w, pp).astype(pdt)

    # ---- conv2 (3x3, stride, pad=1) + bn2 + relu : 3 grouped matmuls (K=3*Pp) ----
    y2 = None
    for dy in range(3):
        taps = []
        for dx in range(3):
            x0 = wpad - 1 + dx
            if stride == 1:
                win = pad_ref[:, dy:dy + ho, x0:x0 + wo, :]
            else:
                win = pad_ref[:, pl.ds(dy, ho, stride=stride),
                              pl.ds(x0, wo, stride=stride), :]
            taps.append(win.reshape(m2, pp))
        grp = jnp.concatenate(taps, axis=-1).astype(jnp.bfloat16)   # (M2, 3*Pp)
        part = jnp.dot(grp, w2_ref[dy * 3 * pp:(dy + 1) * 3 * pp, :],
                       preferred_element_type=jnp.float32)
        y2 = part if y2 is None else y2 + part
    o2 = jnp.maximum(bn(y2, g2_ref, b2_ref), 0.0)                    # (M2, Pp) f32

    # ---- conv3 (1x1) + bn3 ----
    y3 = bn(jnp.dot(o2.astype(jnp.bfloat16), w3_ref[...],
                    preferred_element_type=jnp.float32), g3_ref, b3_ref)

    # ---- shortcut ----
    if downsample:
        if fuse_sc:
            sc = bn(ysc, gs_ref, bs_ref)
        else:
            xs2d = xs_ref[...].reshape(m2, xs_ref.shape[-1])
            sc = bn(jnp.dot(xs2d, ws_ref[...], preferred_element_type=jnp.float32),
                    gs_ref, bs_ref)
    else:
        sc = x2d.astype(jnp.float32)   # identity shortcut (bf16-rounded x)

    # ---- residual add + relu (lane-dense f32 outputs) ----
    pre = y3 + sc
    if emit_pre:
        pre_ref[...] = pre
    out_ref[...] = jnp.maximum(pre, 0.0)


# ----------------------------------------------------------------------------
# Parameter prep: canonical PyTorch layouts (OIHW / 1-D) -> padded MXU layouts
# ----------------------------------------------------------------------------
def prepare_params(p, *, cin, planes):
    exp = 4 * planes
    cp, pp, ep = (_round_up(c, _LANE) for c in (cin, planes, exp))

    def pad_mat(a, rows, cols):
        return jnp.pad(a, ((0, rows - a.shape[0]), (0, cols - a.shape[1])))

    def pad_vec(a, cols):
        return jnp.pad(a, (0, cols - a.shape[0])).reshape(1, cols).astype(jnp.float32)

    # 3x3 weights: OIHW -> (dy, dx, ci, co) -> (9*Pp, Pp); tap k = dy*3+dx
    # occupies rows [k*Pp, (k+1)*Pp), matching the kernel's lane-concatenated taps.
    w2t = jnp.transpose(p["w2"], (2, 3, 1, 0))
    w2t = jnp.pad(w2t, ((0, 0), (0, 0), (0, pp - planes), (0, pp - planes)))

    kp = {
        "w1": pad_mat(p["w1"][:, :, 0, 0].T, cp, pp).astype(jnp.bfloat16),
        "w2": w2t.reshape(9 * pp, pp).astype(jnp.bfloat16),
        "w3": pad_mat(p["w3"][:, :, 0, 0].T, pp, ep).astype(jnp.bfloat16),
        "g1": pad_vec(p["g1"], pp), "b1": pad_vec(p["b1"], pp),
        "g2": pad_vec(p["g2"], pp), "b2": pad_vec(p["b2"], pp),
        "g3": pad_vec(p["g3"], ep), "b3": pad_vec(p["b3"], ep),
    }
    if "ws" in p:
        kp["ws"] = pad_mat(p["ws"][:, :, 0, 0].T, cp, ep).astype(jnp.bfloat16)
        kp["gs"] = pad_vec(p["gs"], ep)
        kp["bs"] = pad_vec(p["bs"], ep)
    return kp


# ----------------------------------------------------------------------------
# Block forward (wrapper: layout glue + single pallas_call)
# ----------------------------------------------------------------------------
@functools.partial(jax.jit, static_argnames=("planes", "stride", "is_last"))
def bottleneck_cifar_forward(x_nchw, kp, *, planes, stride, is_last):
    n, cin, h, w = x_nchw.shape
    exp = 4 * planes
    cp, pp, ep = (_round_up(c, _LANE) for c in (cin, planes, exp))
    ho = (h + 2 - 3) // stride + 1
    wo = (w + 2 - 3) // stride + 1
    m1, m2 = n * h * w, n * ho * wo
    downsample = (stride != 1) or (cin != exp)
    fuse_sc = downsample and stride == 1

    # Layout glue (XLA): NCHW -> NHWC bf16 (the MXU operand dtype), channels
    # zero-padded to the 128-lane width.
    x = jnp.transpose(x_nchw, (0, 2, 3, 1)).astype(jnp.bfloat16)
    x = jnp.pad(x, ((0, 0), (0, 0), (0, 0), (0, cp - cin)))

    if downsample:
        assert "ws" in kp, "downsample block needs shortcut conv/BN parameters"
        if fuse_sc:
            # conv1 and the 1x1 shortcut fused into one (Cp, Pp+Ep) matmul.
            w1s = jnp.concatenate([kp["w1"], kp["ws"]], axis=1)
            args = (x, w1s, kp["g1"], kp["b1"], kp["w2"], kp["g2"], kp["b2"],
                    kp["w3"], kp["g3"], kp["b3"], kp["gs"], kp["bs"])
        else:
            xs = x[:, ::stride, ::stride, :]   # wrapper-side subsample for 1x1 shortcut
            args = (x, xs, kp["w1"], kp["g1"], kp["b1"], kp["w2"], kp["g2"],
                    kp["b2"], kp["w3"], kp["g3"], kp["b3"],
                    kp["ws"], kp["gs"], kp["bs"])
    else:
        args = (x, kp["w1"], kp["g1"], kp["b1"], kp["w2"], kp["g2"], kp["b2"],
                kp["w3"], kp["g3"], kp["b3"])

    # conv2 scratch: bf16 + unit-stride reads for stride==1; f32 for stride!=1
    # (keeps the strided sublane tap reads on the dense 32-bit path).
    sdt = jnp.bfloat16 if stride == 1 else jnp.float32
    scr_itemsize = 2 if stride == 1 else 4
    wpad = 16 if stride == 1 else 8           # sublane-tile aligned interior offset
    wtot = wpad + w + 8                       # right pad: only col wpad+w is read
    scratch = pltpu.VMEM((n, h + 2, wtot, pp), sdt)

    if is_last:
        out_shape = (jax.ShapeDtypeStruct((m2, ep), jnp.float32),
                     jax.ShapeDtypeStruct((m2, ep), jnp.float32))
    else:
        out_shape = jax.ShapeDtypeStruct((m2, ep), jnp.float32)

    vspec = pl.BlockSpec(memory_space=pltpu.MemorySpace.VMEM)
    out_specs = (vspec, vspec) if is_last else vspec

    # Scoped-VMEM budget from actual shapes (+ headroom for temporaries),
    # capped well below v7x's 64 MiB per-core VMEM.
    in_bytes = sum(a.size * a.dtype.itemsize for a in args)
    out_bytes = m2 * ep * 4 * (2 if is_last else 1)
    scr_bytes = n * (h + 2) * wtot * pp * scr_itemsize
    tmp_bytes = 4 * (m1 * (pp + ep) + m2 * (3 * pp + 3 * pp + 3 * ep))
    vmem_limit = int(min(max(2 * (in_bytes + out_bytes + scr_bytes + tmp_bytes),
                             16 << 20), 48 << 20))

    kernel = functools.partial(
        _bottleneck_kernel, n=n, h=h, w=w, stride=stride, eps=_EPS,
        downsample=downsample, fuse_sc=fuse_sc, emit_pre=is_last, wpad=wpad)

    res = pl.pallas_call(
        kernel,
        out_shape=out_shape,
        in_specs=[vspec] * len(args),
        out_specs=out_specs,
        scratch_shapes=[scratch],
        compiler_params=pltpu.CompilerParams(vmem_limit_bytes=vmem_limit),
    )(*args)

    # Strip channel padding, back to NCHW (layout glue).
    def to_nchw(a2d):
        return a2d[:, :exp].reshape(n, ho, wo, exp).transpose(0, 3, 1, 2)

    if is_last:
        return to_nchw(res[0]), to_nchw(res[1])
    return to_nchw(res)


# ----------------------------------------------------------------------------
# Pure-JAX reference (PyTorch semantics, NCHW, training-mode BN) for validation
# ----------------------------------------------------------------------------
def reference_forward(x, p, *, stride):
    def bn(y, g, b):
        mu = y.mean(axis=(0, 2, 3), keepdims=True)
        var = ((y - mu) ** 2).mean(axis=(0, 2, 3), keepdims=True)
        return ((y - mu) * jax.lax.rsqrt(var + _EPS) * g.reshape(1, -1, 1, 1)
                + b.reshape(1, -1, 1, 1))

    def conv(y, w, s, pad):
        return jax.lax.conv_general_dilated(
            y, w, (s, s), [(pad, pad), (pad, pad)],
            dimension_numbers=("NCHW", "OIHW", "NCHW"))

    out = jax.nn.relu(bn(conv(x, p["w1"], 1, 0), p["g1"], p["b1"]))
    out = jax.nn.relu(bn(conv(out, p["w2"], stride, 1), p["g2"], p["b2"]))
    out = bn(conv(out, p["w3"], 1, 0), p["g3"], p["b3"])
    sc = bn(conv(x, p["ws"], stride, 0), p["gs"], p["bs"]) if "ws" in p else x
    preact = out + sc
    return jax.nn.relu(preact), preact


def _bf16_exact(a):
    # round test data to bf16-representable values so the kernel's bf16 MXU
    # operands are exact and only intermediate-activation rounding remains
    return a.astype(jnp.bfloat16).astype(jnp.float32)


def _make_case(key, *, n, cin, planes, h, w, stride):
    exp = 4 * planes
    ks = jax.random.split(key, 13)
    x = _bf16_exact(jax.random.normal(ks[0], (n, cin, h, w), jnp.float32))
    p = {
        "w1": _bf16_exact(0.1 * jax.random.normal(ks[1], (planes, cin, 1, 1), jnp.float32)),
        "w2": _bf16_exact(0.1 * jax.random.normal(ks[2], (planes, planes, 3, 3), jnp.float32)),
        "w3": _bf16_exact(0.1 * jax.random.normal(ks[3], (exp, planes, 1, 1), jnp.float32)),
        "g1": _bf16_exact(1.0 + 0.1 * jax.random.normal(ks[4], (planes,), jnp.float32)),
        "b1": _bf16_exact(0.05 * jax.random.normal(ks[5], (planes,), jnp.float32)),
        "g2": _bf16_exact(1.0 + 0.1 * jax.random.normal(ks[6], (planes,), jnp.float32)),
        "b2": _bf16_exact(0.05 * jax.random.normal(ks[7], (planes,), jnp.float32)),
        "g3": _bf16_exact(1.0 + 0.1 * jax.random.normal(ks[8], (exp,), jnp.float32)),
        "b3": _bf16_exact(0.05 * jax.random.normal(ks[9], (exp,), jnp.float32)),
    }
    if stride != 1 or cin != exp:
        p["ws"] = _bf16_exact(0.1 * jax.random.normal(ks[10], (exp, cin, 1, 1), jnp.float32))
        p["gs"] = _bf16_exact(1.0 + 0.1 * jax.random.normal(ks[11], (exp,), jnp.float32))
        p["bs"] = _bf16_exact(0.05 * jax.random.normal(ks[12], (exp,), jnp.float32))
    return x, p


if __name__ == "__main__":
    key = jax.random.PRNGKey(0)
    k_a, k_b, k_c = jax.random.split(key, 3)

    # (name, key, n, in_planes, planes, h, w, stride, is_last)
    cases = [
        ("identity_shortcut_stride1", k_a, 2, 32, 8, 8, 8, 1, True),
        ("downsample_stride2",        k_b, 2, 16, 8, 16, 16, 2, True),
        ("downsample_stride1_mid",    k_c, 2, 16, 8, 8, 8, 1, False),
    ]

    for name, k, n, cin, planes, h, w, stride, is_last in cases:
        x, p = _make_case(k, n=n, cin=cin, planes=planes, h=h, w=w, stride=stride)
        kp = prepare_params(p, cin=cin, planes=planes)

        res = bottleneck_cifar_forward(x, kp, planes=planes, stride=stride,
                                       is_last=is_last)
        jax.block_until_ready(res)

        ref_out, ref_pre = reference_forward(x, p, stride=stride)
        if is_last:
            out, pre = res
            checks = ((out, ref_out), (pre, ref_pre))
        else:
            checks = ((res, ref_out),)
        for got, ref in checks:
            assert got.shape == ref.shape, name
            assert bool(jnp.all(jnp.isfinite(got))), name
            assert bool(jnp.allclose(got, ref, rtol=3e-2, atol=3e-2)), name

    print("KERNEL_OK")
</pallas_src>

<mosaic_0001>
module attributes {stable_mosaic.version = 11 : i64} {
  func.func @_bottleneck_kernel(%arg0: memref<2x8x8x128xbf16, #tpu.memory_space<vmem>>, %arg1: memref<128x128xbf16, #tpu.memory_space<vmem>>, %arg2: memref<1x128xf32, #tpu.memory_space<vmem>>, %arg3: memref<1x128xf32, #tpu.memory_space<vmem>>, %arg4: memref<1152x128xbf16, #tpu.memory_space<vmem>>, %arg5: memref<1x128xf32, #tpu.memory_space<vmem>>, %arg6: memref<1x128xf32, #tpu.memory_space<vmem>>, %arg7: memref<128x128xbf16, #tpu.memory_space<vmem>>, %arg8: memref<1x128xf32, #tpu.memory_space<vmem>>, %arg9: memref<1x128xf32, #tpu.memory_space<vmem>>, %arg10: memref<128x128xf32, #tpu.memory_space<vmem>>, %arg11: memref<128x128xf32, #tpu.memory_space<vmem>>, %arg12: memref<2x10x32x128xbf16, #tpu.memory_space<vmem>>) attributes {dimension_semantics = [], scalar_prefetch = 0 : i64, scratch_operands = 1 : i64, tpu.core_type = #tpu.core_type<tc>} {
    %c0 = arith.constant 0 : index
    %c0_0 = arith.constant 0 : index
    %c0_1 = arith.constant 0 : index
    %c0_2 = arith.constant 0 : index
    %0 = vector.load %arg0[%c0, %c0_0, %c0_1, %c0_2] : memref<2x8x8x128xbf16, #tpu.memory_space<vmem>>, vector<2x8x8x128xbf16>
    %1 = vector.shape_cast %0 : vector<2x8x8x128xbf16> to vector<128x128xbf16>
    %c0_3 = arith.constant 0 : index
    %c0_4 = arith.constant 0 : index
    %2 = vector.load %arg1[%c0_3, %c0_4] : memref<128x128xbf16, #tpu.memory_space<vmem>>, vector<128x128xbf16>
    %cst = arith.constant dense<0.000000e+00> : vector<128x128xf32>
    %3 = tpu.matmul %1, %2, %cst {dimension_numbers = #tpu.dot_dimension_numbers<[1], [0], [0], [1], [0, 0, 1, 1], [], []>} : vector<128x128xbf16>, vector<128x128xbf16>, vector<128x128xf32> -> vector<128x128xf32>
    %cst_5 = arith.constant dense<0.000000e+00> : vector<128xf32>
    %4 = vector.multi_reduction <add>, %3, %cst_5 [0] : vector<128x128xf32> to vector<128xf32>
    %5 = vector.shape_cast %4 : vector<128xf32> to vector<1x128xf32>
    %cst_6 = arith.constant 1.280000e+02 : f32
    %6 = vector.broadcast %cst_6 : f32 to vector<1x128xf32>
    %7 = arith.divf %5, %6 : vector<1x128xf32>
    %8 = vector.broadcast %7 : vector<1x128xf32> to vector<128x128xf32>
    %9 = arith.subf %3, %8 : vector<128x128xf32>
    %10 = arith.mulf %9, %9 : vector<128x128xf32>
    %cst_7 = arith.constant dense<0.000000e+00> : vector<128xf32>
    %11 = vector.multi_reduction <add>, %10, %cst_7 [0] : vector<128x128xf32> to vector<128xf32>
    %12 = vector.shape_cast %11 : vector<128xf32> to vector<1x128xf32>
    %cst_8 = arith.constant 1.280000e+02 : f32
    %13 = vector.broadcast %cst_8 : f32 to vector<1x128xf32>
    %14 = arith.divf %12, %13 : vector<1x128xf32>
    %c0_9 = arith.constant 0 : index
    %c0_10 = arith.constant 0 : index
    %15 = vector.load %arg2[%c0_9, %c0_10] : memref<1x128xf32, #tpu.memory_space<vmem>>, vector<1x128xf32>
    %cst_11 = arith.constant 9.99999974E-6 : f32
    %16 = vector.broadcast %cst_11 : f32 to vector<1x128xf32>
    %17 = arith.addf %14, %16 : vector<1x128xf32>
    %18 = math.rsqrt %17 : vector<1x128xf32>
    %19 = arith.mulf %15, %18 : vector<1x128xf32>
    %20 = vector.broadcast %19 : vector<1x128xf32> to vector<128x128xf32>
    %21 = arith.mulf %9, %20 : vector<128x128xf32>
    %c0_12 = arith.constant 0 : index
    %c0_13 = arith.constant 0 : index
    %22 = vector.load %arg3[%c0_12, %c0_13] : memref<1x128xf32, #tpu.memory_space<vmem>>, vector<1x128xf32>
    %23 = vector.broadcast %22 : vector<1x128xf32> to vector<128x128xf32>
    %24 = arith.addf %21, %23 : vector<128x128xf32>
    %cst_14 = arith.constant 0.000000e+00 : f32
    %25 = vector.broadcast %cst_14 : f32 to vector<128x128xf32>
    %26 = arith.maximumf %24, %25 : vector<128x128xf32>
    %cst_15 = arith.constant 0.000000e+00 : bf16
    %27 = vector.broadcast %cst_15 : bf16 to vector<2x1x10x128xbf16>
    %c0_16 = arith.constant 0 : index
    %c0_17 = arith.constant 0 : index
    %c15 = arith.constant 15 : index
    %c0_18 = arith.constant 0 : index
    %28 = vector.load %arg12[%c0_16, %c0_17, %c15, %c0_18] : memref<2x10x32x128xbf16, #tpu.memory_space<vmem>>, vector<2x1x10x128xbf16>
    tpu.vector_store %arg12[%c0_16, %c0_17, %c15, %c0_18], %27 {strides = array<i32>} : memref<2x10x32x128xbf16, #tpu.memory_space<vmem>>, vector<2x1x10x128xbf16>,
    %c0_19 = arith.constant 0 : index
    %c9 = arith.constant 9 : index
    %c15_20 = arith.constant 15 : index
    %c0_21 = arith.constant 0 : index
    %29 = vector.load %arg12[%c0_19, %c9, %c15_20, %c0_21] : memref<2x10x32x128xbf16, #tpu.memory_space<vmem>>, vector<2x1x10x128xbf16>
    tpu.vector_store %arg12[%c0_19, %c9, %c15_20, %c0_21], %27 {strides = array<i32>} : memref<2x10x32x128xbf16, #tpu.memory_space<vmem>>, vector<2x1x10x128xbf16>,
    %cst_22 = arith.constant 0.000000e+00 : bf16
    %30 = vector.broadcast %cst_22 : bf16 to vector<2x8x1x128xbf16>
    %c0_23 = arith.constant 0 : index
    %c1 = arith.constant 1 : index
    %c15_24 = arith.constant 15 : index
    %c0_25 = arith.constant 0 : index
    %31 = vector.load %arg12[%c0_23, %c1, %c15_24, %c0_25] : memref<2x10x32x128xbf16, #tpu.memory_space<vmem>>, vector<2x8x1x128xbf16>
    tpu.vector_store %arg12[%c0_23, %c1, %c15_24, %c0_25], %30 {strides = array<i32>} : memref<2x10x32x128xbf16, #tpu.memory_space<vmem>>, vector<2x8x1x128xbf16>,
    %c0_26 = arith.constant 0 : index
    %c1_27 = arith.constant 1 : index
    %c24 = arith.constant 24 : index
    %c0_28 = arith.constant 0 : index
    %32 = vector.load %arg12[%c0_26, %c1_27, %c24, %c0_28] : memref<2x10x32x128xbf16, #tpu.memory_space<vmem>>, vector<2x8x1x128xbf16>
    tpu.vector_store %arg12[%c0_26, %c1_27, %c24, %c0_28], %30 {strides = array<i32>} : memref<2x10x32x128xbf16, #tpu.memory_space<vmem>>, vector<2x8x1x128xbf16>,
    %33 = vector.shape_cast %26 : vector<128x128xf32> to vector<2x8x8x128xf32>
    %34 = arith.truncf %33 : vector<2x8x8x128xf32> to vector<2x8x8x128xbf16>
    %c0_29 = arith.constant 0 : index
    %c1_30 = arith.constant 1 : index
    %c16 = arith.constant 16 : index
    %c0_31 = arith.constant 0 : index
    %35 = vector.load %arg12[%c0_29, %c1_30, %c16, %c0_31] : memref<2x10x32x128xbf16, #tpu.memory_space<vmem>>, vector<2x8x8x128xbf16>
    tpu.vector_store %arg12[%c0_29, %c1_30, %c16, %c0_31], %34 {strides = array<i32>} : memref<2x10x32x128xbf16, #tpu.memory_space<vmem>>, vector<2x8x8x128xbf16>,
    %c0_32 = arith.constant 0 : index
    %c0_33 = arith.constant 0 : index
    %c15_34 = arith.constant 15 : index
    %c0_35 = arith.constant 0 : index
    %36 = vector.load %arg12[%c0_32, %c0_33, %c15_34, %c0_35] : memref<2x10x32x128xbf16, #tpu.memory_space<vmem>>, vector<2x8x8x128xbf16>
    %37 = vector.shape_cast %36 : vector<2x8x8x128xbf16> to vector<128x128xbf16>
    %c0_36 = arith.constant 0 : index
    %c0_37 = arith.constant 0 : index
    %c16_38 = arith.constant 16 : index
    %c0_39 = arith.constant 0 : index
    %38 = vector.load %arg12[%c0_36, %c0_37, %c16_38, %c0_39] : memref<2x10x32x128xbf16, #tpu.memory_space<vmem>>, vector<2x8x8x128xbf16>
    %39 = vector.shape_cast %38 : vector<2x8x8x128xbf16> to vector<128x128xbf16>
    %c0_40 = arith.constant 0 : index
    %c0_41 = arith.constant 0 : index
    %c17 = arith.constant 17 : index
    %c0_42 = arith.constant 0 : index
    %40 = vector.load %arg12[%c0_40, %c0_41, %c17, %c0_42] : memref<2x10x32x128xbf16, #tpu.memory_space<vmem>>, vector<2x8x8x128xbf16>
    %41 = vector.shape_cast %40 : vector<2x8x8x128xbf16> to vector<128x128xbf16>
    %42 = tpu.concatenate %37, %39, %41 in 1 : vector<128x128xbf16>, vector<128x128xbf16>, vector<128x128xbf16> -> vector<128x384xbf16>
    %c0_43 = arith.constant 0 : index
    %c0_44 = arith.constant 0 : index
    %43 = vector.load %arg4[%c0_43, %c0_44] : memref<1152x128xbf16, #tpu.memory_space<vmem>>, vector<384x128xbf16>
    %cst_45 = arith.constant dense<0.000000e+00> : vector<128x128xf32>
    %44 = tpu.matmul %42, %43, %cst_45 {dimension_numbers = #tpu.dot_dimension_numbers<[1], [0], [0], [1], [0, 0, 1, 1], [], []>} : vector<128x384xbf16>, vector<384x128xbf16>, vector<128x128xf32> -> vector<128x128xf32>
    %c0_46 = arith.constant 0 : index
    %c1_47 = arith.constant 1 : index
    %c15_48 = arith.constant 15 : index
    %c0_49 = arith.constant 0 : index
    %45 = vector.load %arg12[%c0_46, %c1_47, %c15_48, %c0_49] : memref<2x10x32x128xbf16, #tpu.memory_space<vmem>>, vector<2x8x8x128xbf16>
    %46 = vector.shape_cast %45 : vector<2x8x8x128xbf16> to vector<128x128xbf16>
    %c0_50 = arith.constant 0 : index
    %c1_51 = arith.constant 1 : index
    %c16_52 = arith.constant 16 : index
    %c0_53 = arith.constant 0 : index
    %47 = vector.load %arg12[%c0_50, %c1_51, %c16_52, %c0_53] : memref<2x10x32x128xbf16, #tpu.memory_space<vmem>>, vector<2x8x8x128xbf16>
    %48 = vector.shape_cast %47 : vector<2x8x8x128xbf16> to vector<128x128xbf16>
    %c0_54 = arith.constant 0 : index
    %c1_55 = arith.constant 1 : index
    %c17_56 = arith.constant 17 : index
    %c0_57 = arith.constant 0 : index
    %49 = vector.load %arg12[%c0_54, %c1_55, %c17_56, %c0_57] : memref<2x10x32x128xbf16, #tpu.memory_space<vmem>>, vector<2x8x8x128xbf16>
    %50 = vector.shape_cast %49 : vector<2x8x8x128xbf16> to vector<128x128xbf16>
    %51 = tpu.concatenate %46, %48, %50 in 1 : vector<128x128xbf16>, vector<128x128xbf16>, vector<128x128xbf16> -> vector<128x384xbf16>
    %c384 = arith.constant 384 : index
    %c0_58 = arith.constant 0 : index
    %52 = vector.load %arg4[%c384, %c0_58] : memref<1152x128xbf16, #tpu.memory_space<vmem>>, vector<384x128xbf16>
    %cst_59 = arith.constant dense<0.000000e+00> : vector<128x128xf32>
    %53 = tpu.matmul %51, %52, %cst_59 {dimension_numbers = #tpu.dot_dimension_numbers<[1], [0], [0], [1], [0, 0, 1, 1], [], []>} : vector<128x384xbf16>, vector<384x128xbf16>, vector<128x128xf32> -> vector<128x128xf32>
    %54 = arith.addf %44, %53 : vector<128x128xf32>
    %c0_60 = arith.constant 0 : index
    %c2 = arith.constant 2 : index
    %c15_61 = arith.constant 15 : index
    %c0_62 = arith.constant 0 : index
    %55 = vector.load %arg12[%c0_60, %c2, %c15_61, %c0_62] : memref<2x10x32x128xbf16, #tpu.memory_space<vmem>>, vector<2x8x8x128xbf16>
    %56 = vector.shape_cast %55 : vector<2x8x8x128xbf16> to vector<128x128xbf16>
    %c0_63 = arith.constant 0 : index
    %c2_64 = arith.constant 2 : index
    %c16_65 = arith.constant 16 : index
    %c0_66 = arith.constant 0 : index
    %57 = vector.load %arg12[%c0_63, %c2_64, %c16_65, %c0_66] : memref<2x10x32x128xbf16, #tpu.memory_space<vmem>>, vector<2x8x8x128xbf16>
    %58 = vector.shape_cast %57 : vector<2x8x8x128xbf16> to vector<128x128xbf16>
    %c0_67 = arith.constant 0 : index
    %c2_68 = arith.constant 2 : index
    %c17_69 = arith.constant 17 : index
    %c0_70 = arith.constant 0 : index
    %59 = vector.load %arg12[%c0_67, %c2_68, %c17_69, %c0_70] : memref<2x10x32x128xbf16, #tpu.memory_space<vmem>>, vector<2x8x8x128xbf16>
    %60 = vector.shape_cast %59 : vector<2x8x8x128xbf16> to vector<128x128xbf16>
    %61 = tpu.concatenate %56, %58, %60 in 1 : vector<128x128xbf16>, vector<128x128xbf16>, vector<128x128xbf16> -> vector<128x384xbf16>
    %c768 = arith.constant 768 : index
    %c0_71 = arith.constant 0 : index
    %62 = vector.load %arg4[%c768, %c0_71] : memref<1152x128xbf16, #tpu.memory_space<vmem>>, vector<384x128xbf16>
    %cst_72 = arith.constant dense<0.000000e+00> : vector<128x128xf32>
    %63 = tpu.matmul %61, %62, %cst_72 {dimension_numbers = #tpu.dot_dimension_numbers<[1], [0], [0], [1], [0, 0, 1, 1], [], []>} : vector<128x384xbf16>, vector<384x128xbf16>, vector<128x128xf32> -> vector<128x128xf32>
    %64 = arith.addf %54, %63 : vector<128x128xf32>
    %cst_73 = arith.constant dense<0.000000e+00> : vector<128xf32>
    %65 = vector.multi_reduction <add>, %64, %cst_73 [0] : vector<128x128xf32> to vector<128xf32>
    %66 = vector.shape_cast %65 : vector<128xf32> to vector<1x128xf32>
    %cst_74 = arith.constant 1.280000e+02 : f32
    %67 = vector.broadcast %cst_74 : f32 to vector<1x128xf32>
    %68 = arith.divf %66, %67 : vector<1x128xf32>
    %69 = vector.broadcast %68 : vector<1x128xf32> to vector<128x128xf32>
    %70 = arith.subf %64, %69 : vector<128x128xf32>
    %71 = arith.mulf %70, %70 : vector<128x128xf32>
    %cst_75 = arith.constant dense<0.000000e+00> : vector<128xf32>
    %72 = vector.multi_reduction <add>, %71, %cst_75 [0] : vector<128x128xf32> to vector<128xf32>
    %73 = vector.shape_cast %72 : vector<128xf32> to vector<1x128xf32>
    %cst_76 = arith.constant 1.280000e+02 : f32
    %74 = vector.broadcast %cst_76 : f32 to vector<1x128xf32>
    %75 = arith.divf %73, %74 : vector<1x128xf32>
    %c0_77 = arith.constant 0 : index
    %c0_78 = arith.constant 0 : index
    %76 = vector.load %arg5[%c0_77, %c0_78] : memref<1x128xf32, #tpu.memory_space<vmem>>, vector<1x128xf32>
    %cst_79 = arith.constant 9.99999974E-6 : f32
    %77 = vector.broadcast %cst_79 : f32 to vector<1x128xf32>
    %78 = arith.addf %75, %77 : vector<1x128xf32>
    %79 = math.rsqrt %78 : vector<1x128xf32>
    %80 = arith.mulf %76, %79 : vector<1x128xf32>
    %81 = vector.broadcast %80 : vector<1x128xf32> to vector<128x128xf32>
    %82 = arith.mulf %70, %81 : vector<128x128xf32>
    %c0_80 = arith.constant 0 : index
    %c0_81 = arith.constant 0 : index
    %83 = vector.load %arg6[%c0_80, %c0_81] : memref<1x128xf32, #tpu.memory_space<vmem>>, vector<1x128xf32>
    %84 = vector.broadcast %83 : vector<1x128xf32> to vector<128x128xf32>
    %85 = arith.addf %82, %84 : vector<128x128xf32>
    %cst_82 = arith.constant 0.000000e+00 : f32
    %86 = vector.broadcast %cst_82 : f32 to vector<128x128xf32>
    %87 = arith.maximumf %85, %86 : vector<128x128xf32>
    %88 = arith.truncf %87 : vector<128x128xf32> to vector<128x128xbf16>
    %c0_83 = arith.constant 0 : index
    %c0_84 = arith.constant 0 : index
    %89 = vector.load %arg7[%c0_83, %c0_84] : memref<128x128xbf16, #tpu.memory_space<vmem>>, vector<128x128xbf16>
    %cst_85 = arith.constant dense<0.000000e+00> : vector<128x128xf32>
    %90 = tpu.matmul %88, %89, %cst_85 {dimension_numbers = #tpu.dot_dimension_numbers<[1], [0], [0], [1], [0, 0, 1, 1], [], []>} : vector<128x128xbf16>, vector<128x128xbf16>, vector<128x128xf32> -> vector<128x128xf32>
    %cst_86 = arith.constant dense<0.000000e+00> : vector<128xf32>
    %91 = vector.multi_reduction <add>, %90, %cst_86 [0] : vector<128x128xf32> to vector<128xf32>
    %92 = vector.shape_cast %91 : vector<128xf32> to vector<1x128xf32>
    %cst_87 = arith.constant 1.280000e+02 : f32
    %93 = vector.broadcast %cst_87 : f32 to vector<1x128xf32>
    %94 = arith.divf %92, %93 : vector<1x128xf32>
    %95 = vector.broadcast %94 : vector<1x128xf32> to vector<128x128xf32>
    %96 = arith.subf %90, %95 : vector<128x128xf32>
    %97 = arith.mulf %96, %96 : vector<128x128xf32>
    %cst_88 = arith.constant dense<0.000000e+00> : vector<128xf32>
    %98 = vector.multi_reduction <add>, %97, %cst_88 [0] : vector<128x128xf32> to vector<128xf32>
    %99 = vector.shape_cast %98 : vector<128xf32> to vector<1x128xf32>
    %cst_89 = arith.constant 1.280000e+02 : f32
    %100 = vector.broadcast %cst_89 : f32 to vector<1x128xf32>
    %101 = arith.divf %99, %100 : vector<1x128xf32>
    %c0_90 = arith.constant 0 : index
    %c0_91 = arith.constant 0 : index
    %102 = vector.load %arg8[%c0_90, %c0_91] : memref<1x128xf32, #tpu.memory_space<vmem>>, vector<1x128xf32>
    %cst_92 = arith.constant 9.99999974E-6 : f32
    %103 = vector.broadcast %cst_92 : f32 to vector<1x128xf32>
    %104 = arith.addf %101, %103 : vector<1x128xf32>
    %105 = math.rsqrt %104 : vector<1x128xf32>
    %106 = arith.mulf %102, %105 : vector<1x128xf32>
    %107 = vector.broadcast %106 : vector<1x128xf32> to vector<128x128xf32>
    %108 = arith.mulf %96, %107 : vector<128x128xf32>
    %c0_93 = arith.constant 0 : index
    %c0_94 = arith.constant 0 : index
    %109 = vector.load %arg9[%c0_93, %c0_94] : memref<1x128xf32, #tpu.memory_space<vmem>>, vector<1x128xf32>
    %110 = vector.broadcast %109 : vector<1x128xf32> to vector<128x128xf32>
    %111 = arith.addf %108, %110 : vector<128x128xf32>
    %112 = arith.extf %1 : vector<128x128xbf16> to vector<128x128xf32>
    %113 = arith.addf %111, %112 : vector<128x128xf32>
    %c0_95 = arith.constant 0 : index
    %c0_96 = arith.constant 0 : index
    %114 = vector.load %arg11[%c0_95, %c0_96] : memref<128x128xf32, #tpu.memory_space<vmem>>, vector<128x128xf32>
    tpu.vector_store %arg11[%c0_95, %c0_96], %113 {strides = array<i32>} : memref<128x128xf32, #tpu.memory_space<vmem>>, vector<128x128xf32>,
    %cst_97 = arith.constant 0.000000e+00 : f32
    %115 = vector.broadcast %cst_97 : f32 to vector<128x128xf32>
    %116 = arith.maximumf %113, %115 : vector<128x128xf32>
    %c0_98 = arith.constant 0 : index
    %c0_99 = arith.constant 0 : index
    %117 = vector.load %arg10[%c0_98, %c0_99] : memref<128x128xf32, #tpu.memory_space<vmem>>, vector<128x128xf32>
    tpu.vector_store %arg10[%c0_98, %c0_99], %116 {strides = array<i32>} : memref<128x128xf32, #tpu.memory_space<vmem>>, vector<128x128xf32>,
    return
  }
}

</mosaic_0001>

<llo_original>
// kernel: bottleneck_cifar_forward.1
$region0: #{bottleneck_cifar_forward.1}
  #allocation0 [shape = 'u32[]', space=smem, size = 0x4, offset = 0x4, fixed_abs, tag = 'smem constant byte address 0x4 - core index']
  #allocation1 [shape = 'u32[144,128]{1,0:T(1,128)}', space=vmem, size = 0x12000, scoped, tag = 'internal scratch']
  #allocation2 [shape = 'bf16[2,10,32,128]{3,2,1,0:T(8,128)(2,1)}', space=vmem, size = 0x28000, scoped, tag = 'scratch operand']
  %s0 = inlined_call_operand.vmem [shape: bf16[2,8,8,128], index: 0, kind: input, shape index: {}]
  %s1 = inlined_call_operand.vmem [shape: bf16[128,128], index: 1, kind: input, shape index: {}]
  %s2 = inlined_call_operand.vmem [shape: f32[1,128], index: 2, kind: input, shape index: {}]
  %s3 = inlined_call_operand.vmem [shape: f32[1,128], index: 3, kind: input, shape index: {}]
  %s4 = inlined_call_operand.hbm [shape: bf16[1152,128], index: 4, kind: input, shape index: {}]
  %s5 = inlined_call_operand.vmem [shape: f32[1,128], index: 5, kind: input, shape index: {}]
  %s6 = inlined_call_operand.vmem [shape: f32[1,128], index: 6, kind: input, shape index: {}]
  %s7 = inlined_call_operand.vmem [shape: bf16[128,128], index: 7, kind: input, shape index: {}]
  %s8 = inlined_call_operand.vmem [shape: f32[1,128], index: 8, kind: input, shape index: {}]
  %s9 = inlined_call_operand.vmem [shape: f32[1,128], index: 9, kind: input, shape index: {}]
  %s10 = inlined_call_operand.hbm [shape: f32[128,128], index: 10, kind: output, shape index: {0}]
  %s11 = inlined_call_operand.hbm [shape: f32[128,128], index: 11, kind: output, shape index: {1}]
  %12 = xla_tuple %s10, %s11
  %s13 = sld [smem:[#allocation0]]
  $region62: #{bottleneck_cifar_forward.1} parent=0
    _
  %s15 = ssub.s32 1, %s13
  %s16 = scalar_select 0, %s15, %s13
  $region1: #{bottleneck_cifar_forward.1} parent=0
    #allocation3 [shape = 'u8[294912]{0}', space=vmem, size = 0x48000, scoped, tag = 'input window, operand 4, single buffered']
    #allocation4 [shape = 's32[1]{0}', space=sflag, size = 0x4, scoped, tag = 'scoped memory for bottleneck_cifar_forward.1']
    #allocation5 [shape = 's32[1]{0}', space=sflag, size = 0x4, scoped, tag = 'scoped memory for bottleneck_cifar_forward.1']
    #allocation6 [shape = 'u8[65536]{0}', space=vmem, size = 0x10000, scoped, tag = 'output window, operand 0, single buffered']
    #allocation7 [shape = 'u8[65536]{0}', space=vmem, size = 0x10000, scoped, tag = 'output window, operand 1, single buffered']
    #allocation8 [shape = 's32[1]{0}', space=sflag, size = 0x4, scoped, tag = 'scoped memory for bottleneck_cifar_forward.1']
    %17 = vsyncpa [#allocation4], 0
    %18 = vsyncpa [#allocation5], 0
    %19 = vsyncpa [#allocation8], 0
    // Predicated region
    $region2: #{bottleneck_cifar_forward.1} parent=1 // pred_check
      _
    $region3: #{bottleneck_cifar_forward.1} parent=1 // pred_check_branch
      %21 = sbr.rel (0) target = $region5
    $region4: #{bottleneck_cifar_forward.1} parent=1 // pred_region
      _
    $region5: #{bottleneck_cifar_forward.1} parent=1 // pred_fallthru
      _
    // Predicated region
    $region6: #{bottleneck_cifar_forward.1} parent=1 // pred_check
      _
    $region7: #{bottleneck_cifar_forward.1} parent=1 // pred_check_branch
      %23 = sbr.rel (0) target = $region9
    $region8: #{bottleneck_cifar_forward.1} parent=1 // pred_region
      _
    $region9: #{bottleneck_cifar_forward.1} parent=1 // pred_fallthru
      _
    // Predicated region
    $region10: #{bottleneck_cifar_forward.1} parent=1 // pred_check
      _
    $region11: #{bottleneck_cifar_forward.1} parent=1 // pred_check_branch
      %25 = sbr.rel (0) target = $region13
    $region12: #{bottleneck_cifar_forward.1} parent=1 // pred_region
      _
    $region13: #{bottleneck_cifar_forward.1} parent=1 // pred_fallthru
      _
    // Predicated region
    $region14: #{bottleneck_cifar_forward.1} parent=1 // pred_check
      _
    $region15: #{bottleneck_cifar_forward.1} parent=1 // pred_check_branch
      %27 = sbr.rel (0) target = $region17
    $region16: #{bottleneck_cifar_forward.1} parent=1 // pred_region
      _
    $region17: #{bottleneck_cifar_forward.1} parent=1 // pred_fallthru
      _
    // Predicated region
    $region18: #{bottleneck_cifar_forward.1} parent=1 // pred_check
      _
    $region19: #{bottleneck_cifar_forward.1} parent=1 // pred_check_branch
      %29 = sbr.rel (0) target = $region21
    $region20: #{bottleneck_cifar_forward.1} parent=1 // pred_region
      %s31 = ssub.s32 9216, 9216
      %32 = vsyncadd [#allocation4], %s31
      %s33 = sshll.u32 [#allocation3], 4
      %s34 = int_to_ptr.vmem [resolvable:$true] %s33
      %39 = dma.hbm_to_vmem [thread:$0]  %s4, 9216, %s34, [#allocation4], 64, 64, 4
    $region21: #{bottleneck_cifar_forward.1} parent=1 // pred_fallthru
      _
    // Predicated region
    $region22: #{bottleneck_cifar_forward.1} parent=1 // pred_check
      _
    $region23: #{bottleneck_cifar_forward.1} parent=1 // pred_check_branch
      %41 = sbr.rel (0) target = $region25
    $region24: #{bottleneck_cifar_forward.1} parent=1 // pred_region
      _
    $region25: #{bottleneck_cifar_forward.1} parent=1 // pred_fallthru
      _
    // Predicated region
    $region26: #{bottleneck_cifar_forward.1} parent=1 // pred_check
      _
    $region27: #{bottleneck_cifar_forward.1} parent=1 // pred_check_branch
      %43 = sbr.rel (0) target = $region29
    $region28: #{bottleneck_cifar_forward.1} parent=1 // pred_region
      _
    $region29: #{bottleneck_cifar_forward.1} parent=1 // pred_fallthru
      _
    // Predicated region
    $region30: #{bottleneck_cifar_forward.1} parent=1 // pred_check
      _
    $region31: #{bottleneck_cifar_forward.1} parent=1 // pred_check_branch
      %45 = sbr.rel (0) target = $region33
    $region32: #{bottleneck_cifar_forward.1} parent=1 // pred_region
      _
    $region33: #{bottleneck_cifar_forward.1} parent=1 // pred_fallthru
      _
    // Predicated region
    $region34: #{bottleneck_cifar_forward.1} parent=1 // pred_check
      _
    $region35: #{bottleneck_cifar_forward.1} parent=1 // pred_check_branch
      %47 = sbr.rel (0) target = $region37
    $region36: #{bottleneck_cifar_forward.1} parent=1 // pred_region
      _
    $region37: #{bottleneck_cifar_forward.1} parent=1 // pred_fallthru
      _
    // Predicated region
    $region38: #{bottleneck_cifar_forward.1} parent=1 // pred_check
      _
    $region39: #{bottleneck_cifar_forward.1} parent=1 // pred_check_branch
      %49 = sbr.rel (0) target = $region41
    $region40: #{bottleneck_cifar_forward.1} parent=1 // pred_region
      _
    $region41: #{bottleneck_cifar_forward.1} parent=1 // pred_fallthru
      _
    // Predicated region
    $region42: #{bottleneck_cifar_forward.1} parent=1 // pred_check
      _
    $region43: #{bottleneck_cifar_forward.1} parent=1 // pred_check_branch
      %51 = sbr.rel (0) target = $region45
    $region44: #{bottleneck_cifar_forward.1} parent=1 // pred_region
      %52 = dma.done [#allocation4], 9216
    $region45: #{bottleneck_cifar_forward.1} parent=1 // pred_fallthru
      _
    %v54 = vld [vmem:[%s0] sm:$0xf]
    %v55 = vld [vmem:[%s0 + $0x4] sm:$0xf]
    %v56 = vld [vmem:[%s0 + $0x8] sm:$0xf]
    %v57 = vld [vmem:[%s0 + $0xc] sm:$0xf]
    %v58 = vld [vmem:[%s0 + $0x10] sm:$0xf]
    %v59 = vld [vmem:[%s0 + $0x14] sm:$0xf]
    %v60 = vld [vmem:[%s0 + $0x18] sm:$0xf]
    %v61 = vld [vmem:[%s0 + $0x1c] sm:$0xf]
    %v62 = vld [vmem:[%s0 + $0x20] sm:$0xf]
    %v63 = vld [vmem:[%s0 + $0x24] sm:$0xf]
    %v64 = vld [vmem:[%s0 + $0x28] sm:$0xf]
    %v65 = vld [vmem:[%s0 + $0x2c] sm:$0xf]
    %v66 = vld [vmem:[%s0 + $0x30] sm:$0xf]
    %v67 = vld [vmem:[%s0 + $0x34] sm:$0xf]
    %v68 = vld [vmem:[%s0 + $0x38] sm:$0xf]
    %v69 = vld [vmem:[%s0 + $0x3c] sm:$0xf]
    %v70 = vld [vmem:[%s1] sm:$0xf]
    %v71 = vld [vmem:[%s1 + $0x4] sm:$0xf]
    %v72 = vld [vmem:[%s1 + $0x8] sm:$0xf]
    %v73 = vld [vmem:[%s1 + $0xc] sm:$0xf]
    %v74 = vld [vmem:[%s1 + $0x10] sm:$0xf]
    %v75 = vld [vmem:[%s1 + $0x14] sm:$0xf]
    %v76 = vld [vmem:[%s1 + $0x18] sm:$0xf]
    %v77 = vld [vmem:[%s1 + $0x1c] sm:$0xf]
    %v78 = vld [vmem:[%s1 + $0x20] sm:$0xf]
    %v79 = vld [vmem:[%s1 + $0x24] sm:$0xf]
    %v80 = vld [vmem:[%s1 + $0x28] sm:$0xf]
    %v81 = vld [vmem:[%s1 + $0x2c] sm:$0xf]
    %v82 = vld [vmem:[%s1 + $0x30] sm:$0xf]
    %v83 = vld [vmem:[%s1 + $0x34] sm:$0xf]
    %v84 = vld [vmem:[%s1 + $0x38] sm:$0xf]
    %v85 = vld [vmem:[%s1 + $0x3c] sm:$0xf]
    %v102 = vunpack.c.l.b16 %v54
    %v103 = vunpack.c.l.b16 %v55
    %v104 = vunpack.c.l.b16 %v56
    %v105 = vunpack.c.l.b16 %v57
    %v106 = vunpack.c.l.b16 %v58
    %v107 = vunpack.c.l.b16 %v59
    %v108 = vunpack.c.l.b16 %v60
    %v109 = vunpack.c.l.b16 %v61
    %v110 = vunpack.c.l.b16 %v62
    %v111 = vunpack.c.l.b16 %v63
    %v112 = vunpack.c.l.b16 %v64
    %v113 = vunpack.c.l.b16 %v65
    %v114 = vunpack.c.l.b16 %v66
    %v115 = vunpack.c.l.b16 %v67
    %v116 = vunpack.c.l.b16 %v68
    %v117 = vunpack.c.l.b16 %v69
    %v118 = vpack.c.b16 %v103, %v102
    %v119 = vpack.c.b16 %v105, %v104
    %v120 = vpack.c.b16 %v107, %v106
    %v121 = vpack.c.b16 %v109, %v108
    %v122 = vpack.c.b16 %v111, %v110
    %v123 = vpack.c.b16 %v113, %v112
    %v124 = vpack.c.b16 %v115, %v114
    %v125 = vpack.c.b16 %v117, %v116
    %v150 = vunpack.c.l.b16 %v70
    %v151 = vunpack.c.l.b16 %v71
    %v152 = vunpack.c.l.b16 %v72
    %v153 = vunpack.c.l.b16 %v73
    %v154 = vunpack.c.l.b16 %v74
    %v155 = vunpack.c.l.b16 %v75
    %v156 = vunpack.c.l.b16 %v76
    %v157 = vunpack.c.l.b16 %v77
    %v158 = vunpack.c.l.b16 %v78
    %v159 = vunpack.c.l.b16 %v79
    %v160 = vunpack.c.l.b16 %v80
    %v161 = vunpack.c.l.b16 %v81
    %v162 = vunpack.c.l.b16 %v82
    %v163 = vunpack.c.l.b16 %v83
    %v164 = vunpack.c.l.b16 %v84
    %v165 = vunpack.c.l.b16 %v85
    %v166 = vpack.c.b16 %v151, %v150
    %v167 = vpack.c.b16 %v153, %v152
    %v168 = vpack.c.b16 %v155, %v154
    %v169 = vpack.c.b16 %v157, %v156
    %v170 = vpack.c.b16 %v159, %v158
    %v171 = vpack.c.b16 %v161, %v160
    %v172 = vpack.c.b16 %v163, %v162
    %v173 = vpack.c.b16 %v165, %v164
    %182 = vmatprep.subr.bf16.mxu0 0
    %183 = vmatpush1.bf16.msra.mxu0 %v173
    %184 = vmatprep.subr.bf16.mxu0 0
    %185 = vmatpush1.bf16.msra.mxu0 %v172
    %186 = vmatprep.subr.bf16.mxu0 0
    %187 = vmatpush1.bf16.msra.mxu0 %v171
    %188 = vmatprep.subr.bf16.mxu0 0
    %189 = vmatpush1.bf16.msra.mxu0 %v170
    %190 = vmatprep.subr.bf16.mxu0 0
    %191 = vmatpush1.bf16.msra.mxu0 %v169
    %192 = vmatprep.subr.bf16.mxu0 0
    %193 = vmatpush1.bf16.msra.mxu0 %v168
    %194 = vmatprep.subr.bf16.mxu0 0
    %195 = vmatpush1.bf16.msra.mxu0 %v167
    %196 = vmatprep.subr.bf16.mxu0 0
    %197 = vmatpush1.bf16.msra.mxu0 %v166
    %198 = vmatprep.subr.bf16.mxu0 0
    %199 = vmatpush2.bf16.msra.mxu0 0
    %200 = vmatprep.subr.bf16.mxu0 0
    %201 = vmatpush2.bf16.msra.mxu0 0
    %202 = vmatprep.subr.bf16.mxu0 0
    %203 = vmatpush2.bf16.msra.mxu0 0
    %204 = vmatprep.subr.bf16.mxu0 0
    %205 = vmatpush2.bf16.msra.mxu0 0
    %206 = vmatprep.subr.bf16.mxu0 0
    %207 = vmatpush2.bf16.msra.mxu0 0
    %208 = vmatprep.subr.bf16.mxu0 0
    %209 = vmatpush2.bf16.msra.mxu0 0
    %210 = vmatprep.subr.bf16.mxu0 0
    %211 = vmatpush2.bf16.msra.mxu0 0
    %212 = vmatprep.subr.bf16.mxu0 0
    %213 = vmatpush2.bf16.msra.mxu0 0
    %214 = vmatprep.mubr.bf16.mxu0 0
    %215 = vmatmul.mubr.bf16.gmra.mxu0 %v118
    %v216 = vpop.f32.mrf.mxu0
    %v217 = vadd.f32 0.0, %v216
    %v218 = vpop.f32.mrf.mxu0
    %v219 = vpop.f32.mrf.mxu0
    %v220 = vadd.f32 0.0, %v219
    %v221 = vpop.f32.mrf.mxu0
    %222 = vmatprep.mubr.bf16.mxu0 0
    %223 = vmatmul.mubr.bf16.gmra.mxu0 %v119
    %v224 = vpop.f32.mrf.mxu0
    %v225 = vadd.f32 0.0, %v224
    %v226 = vpop.f32.mrf.mxu0
    %v227 = vpop.f32.mrf.mxu0
    %v228 = vadd.f32 0.0, %v227
    %v229 = vpop.f32.mrf.mxu0
    %230 = vmatprep.mubr.bf16.mxu0 0
    %231 = vmatmul.mubr.bf16.gmra.mxu0 %v120
    %v232 = vpop.f32.mrf.mxu0
    %v233 = vadd.f32 0.0, %v232
    %v234 = vpop.f32.mrf.mxu0
    %v235 = vpop.f32.mrf.mxu0
    %v236 = vadd.f32 0.0, %v235
    %v237 = vpop.f32.mrf.mxu0
    %238 = vmatprep.mubr.bf16.mxu0 0
    %239 = vmatmul.mubr.bf16.gmra.mxu0 %v121
    %v240 = vpop.f32.mrf.mxu0
    %v241 = vadd.f32 0.0, %v240
    %v242 = vpop.f32.mrf.mxu0
    %v243 = vpop.f32.mrf.mxu0
    %v244 = vadd.f32 0.0, %v243
    %v245 = vpop.f32.mrf.mxu0
    %246 = vmatprep.mubr.bf16.mxu0 0
    %247 = vmatmul.mubr.bf16.gmra.mxu0 %v122
    %v248 = vpop.f32.mrf.mxu0
    %v249 = vadd.f32 0.0, %v248
    %v250 = vpop.f32.mrf.mxu0
    %v251 = vpop.f32.mrf.mxu0
    %v252 = vadd.f32 0.0, %v251
    %v253 = vpop.f32.mrf.mxu0
    %254 = vmatprep.mubr.bf16.mxu0 0
    %255 = vmatmul.mubr.bf16.gmra.mxu0 %v123
    %v256 = vpop.f32.mrf.mxu0
    %v257 = vadd.f32 0.0, %v256
    %v258 = vpop.f32.mrf.mxu0
    %v259 = vpop.f32.mrf.mxu0
    %v260 = vadd.f32 0.0, %v259
    %v261 = vpop.f32.mrf.mxu0
    %262 = vmatprep.mubr.bf16.mxu0 0
    %263 = vmatmul.mubr.bf16.gmra.mxu0 %v124
    %v264 = vpop.f32.mrf.mxu0
    %v265 = vadd.f32 0.0, %v264
    %v266 = vpop.f32.mrf.mxu0
    %v267 = vpop.f32.mrf.mxu0
    %v268 = vadd.f32 0.0, %v267
    %v269 = vpop.f32.mrf.mxu0
    %270 = vmatprep.mubr.bf16.mxu0 0
    %271 = vmatmul.mubr.bf16.gmra.mxu0 %v125
    %v272 = vpop.f32.mrf.mxu0
    %v273 = vadd.f32 0.0, %v272
    %v274 = vpop.f32.mrf.mxu0
    %v275 = vpop.f32.mrf.mxu0
    %v276 = vadd.f32 0.0, %v275
    %v277 = vpop.f32.mrf.mxu0
    %278 = vdwg.mxu0
    %v279 = vadd.f32 %v217, %v220
    %v280 = vadd.f32 %v279, %v225
    %v281 = vadd.f32 %v280, %v228
    %v282 = vadd.f32 %v281, %v233
    %v283 = vadd.f32 %v282, %v236
    %v284 = vadd.f32 %v283, %v241
    %v285 = vadd.f32 %v284, %v244
    %v286 = vadd.f32 %v285, %v249
    %v287 = vadd.f32 %v286, %v252
    %v288 = vadd.f32 %v287, %v257
    %v289 = vadd.f32 %v288, %v260
    %v290 = vadd.f32 %v289, %v265
    %v291 = vadd.f32 %v290, %v268
    %v292 = vadd.f32 %v291, %v273
    %v293 = vadd.f32 %v292, %v276
    %v294 = vrot.slane %v293, 4
    %v295 = vadd.f32 %v293, %v294
    %v296 = vrot.slane %v295, 2
    %v297 = vadd.f32 %v295, %v296
    %v298 = vrot.slane %v297, 1
    %v299 = vadd.f32 %v297, %v298
    %v300 = vrcp.pop 128.0
    %v301 = vmul.f32 %v299, %v300
    %v302 = vsub.f32 %v217, %v301
    %v303 = vsub.f32 %v220, %v301
    %v304 = vsub.f32 %v225, %v301
    %v305 = vsub.f32 %v228, %v301
    %v306 = vsub.f32 %v233, %v301
    %v307 = vsub.f32 %v236, %v301
    %v308 = vsub.f32 %v241, %v301
    %v309 = vsub.f32 %v244, %v301
    %v310 = vsub.f32 %v249, %v301
    %v311 = vsub.f32 %v252, %v301
    %v312 = vsub.f32 %v257, %v301
    %v313 = vsub.f32 %v260, %v301
    %v314 = vsub.f32 %v265, %v301
    %v315 = vsub.f32 %v268, %v301
    %v316 = vsub.f32 %v273, %v301
    %v317 = vsub.f32 %v276, %v301
    %v318 = vmul.f32 %v302, %v302
    %v319 = vmul.f32 %v303, %v303
    %v320 = vmul.f32 %v304, %v304
    %v321 = vmul.f32 %v305, %v305
    %v322 = vmul.f32 %v306, %v306
    %v323 = vmul.f32 %v307, %v307
    %v324 = vmul.f32 %v308, %v308
    %v325 = vmul.f32 %v309, %v309
    %v326 = vmul.f32 %v310, %v310
    %v327 = vmul.f32 %v311, %v311
    %v328 = vmul.f32 %v312, %v312
    %v329 = vmul.f32 %v313, %v313
    %v330 = vmul.f32 %v314, %v314
    %v331 = vmul.f32 %v315, %v315
    %v332 = vmul.f32 %v316, %v316
    %v333 = vmul.f32 %v317, %v317
    %v334 = vadd.f32 %v318, %v319
    %v335 = vadd.f32 %v334, %v320
    %v336 = vadd.f32 %v335, %v321
    %v337 = vadd.f32 %v336, %v322
    %v338 = vadd.f32 %v337, %v323
    %v339 = vadd.f32 %v338, %v324
    %v340 = vadd.f32 %v339, %v325
    %v341 = vadd.f32 %v340, %v326
    %v342 = vadd.f32 %v341, %v327
    %v343 = vadd.f32 %v342, %v328
    %v344 = vadd.f32 %v343, %v329
    %v345 = vadd.f32 %v344, %v330
    %v346 = vadd.f32 %v345, %v331
    %v347 = vadd.f32 %v346, %v332
    %v348 = vadd.f32 %v347, %v333
    %v349 = vrot.slane %v348, 4
    %v350 = vadd.f32 %v348, %v349
    %v351 = vrot.slane %v350, 2
    %v352 = vadd.f32 %v350, %v351
    %v353 = vrot.slane %v352, 1
    %v354 = vadd.f32 %v352, %v353
    %v355 = vmul.f32 %v354, %v300
    %v356 = vld [vmem:[%s2] sm:$0x1]
    %v357 = vadd.f32 %v355, 1e-05
    %v358 = vrsqrt.pop %v357
    %v359 = vmul.f32 %v356, %v358
    %v361 = vlaneseq
    %v362 = vshrl.u32 %v361, 7
    %v363 = vsub.s32 0, %v362
    %v364 = vrot.slane %v359, %v363
    %v366 = vmul.f32 %v302, %v364
    %v367 = vmul.f32 %v303, %v364
    %v368 = vmul.f32 %v304, %v364
    %v369 = vmul.f32 %v305, %v364
    %v370 = vmul.f32 %v306, %v364
    %v371 = vmul.f32 %v307, %v364
    %v372 = vmul.f32 %v308, %v364
    %v373 = vmul.f32 %v309, %v364
    %v374 = vmul.f32 %v310, %v364
    %v375 = vmul.f32 %v311, %v364
    %v376 = vmul.f32 %v312, %v364
    %v377 = vmul.f32 %v313, %v364
    %v378 = vmul.f32 %v314, %v364
    %v379 = vmul.f32 %v315, %v364
    %v380 = vmul.f32 %v316, %v364
    %v381 = vmul.f32 %v317, %v364
    %v382 = vld [vmem:[%s3] sm:$0x1]
    %v384 = vlaneseq
    %v385 = vshrl.u32 %v384, 7
    %v386 = vsub.s32 0, %v385
    %v387 = vrot.slane %v382, %v386
    %v389 = vadd.f32 %v366, %v387
    %v390 = vadd.f32 %v367, %v387
    %v391 = vadd.f32 %v368, %v387
    %v392 = vadd.f32 %v369, %v387
    %v393 = vadd.f32 %v370, %v387
    %v394 = vadd.f32 %v371, %v387
    %v395 = vadd.f32 %v372, %v387
    %v396 = vadd.f32 %v373, %v387
    %v397 = vadd.f32 %v374, %v387
    %v398 = vadd.f32 %v375, %v387
    %v399 = vadd.f32 %v376, %v387
    %v400 = vadd.f32 %v377, %v387
    %v401 = vadd.f32 %v378, %v387
    %v402 = vadd.f32 %v379, %v387
    %v403 = vadd.f32 %v380, %v387
    %v404 = vadd.f32 %v381, %v387
    %v405 = vmax.f32 %v389, 0.0
    %v406 = vmax.f32 %v390, 0.0
    %v407 = vmax.f32 %v391, 0.0
    %v408 = vmax.f32 %v392, 0.0
    %v409 = vmax.f32 %v393, 0.0
    %v410 = vmax.f32 %v394, 0.0
    %v411 = vmax.f32 %v395, 0.0
    %v412 = vmax.f32 %v396, 0.0
    %v413 = vmax.f32 %v397, 0.0
    %v414 = vmax.f32 %v398, 0.0
    %v415 = vmax.f32 %v399, 0.0
    %v416 = vmax.f32 %v400, 0.0
    %v417 = vmax.f32 %v401, 0.0
    %v418 = vmax.f32 %v402, 0.0
    %v419 = vmax.f32 %v403, 0.0
    %v420 = vmax.f32 %v404, 0.0
    %vm421 = vcmask 1043459
    %vm422 = vsmask.f32 7950
    %vm423 = vmand %vm421, %vm422
    %v424 = vld [vmem:[#allocation2 + $0x4] sm:$0x8]
    %v425 = vsel %vm423, 0, %v424
    %426 = vst [vmem:[#allocation2 + $0x4] sm:$0x8] %v425
    %427 = vst [vmem:[#allocation2 + $0x8] sm:$0xf] 0
    %vm428 = vcmask 1040384
    %vm429 = vsmask.f32 256
    %vm430 = vmand %vm428, %vm429
    %v431 = vld [vmem:[#allocation2 + $0xc] sm:$0x1]
    %v432 = vsel %vm430, 0, %v431
    %433 = vst [vmem:[#allocation2 + $0xc] sm:$0x1] %v432
    %v434 = vld [vmem:[#allocation2 + $0xa4] sm:$0x8]
    %v435 = vsel %vm423, 0, %v434
    %436 = vst [vmem:[#allocation2 + $0xa4] sm:$0x8] %v435
    %437 = vst [vmem:[#allocation2 + $0xa8] sm:$0xf] 0
    %v438 = vld [vmem:[#allocation2 + $0xac] sm:$0x1]
    %v439 = vsel %vm430, 0, %v438
    %440 = vst [vmem:[#allocation2 + $0xac] sm:$0x1] %v439
    %s441 = scalar_lea.vmem [#allocation2], 144
    %v442 = vld [vmem:[%s441 + $0x4] sm:$0x8]
    %v443 = vsel %vm423, 0, %v442
    %444 = vst [vmem:[%s441 + $0x4] sm:$0x8] %v443
    %445 = vst [vmem:[%s441 + $0x8] sm:$0xf] 0
    %v446 = vld [vmem:[%s441 + $0xc] sm:$0x1]
    %v447 = vsel %vm430, 0, %v446
    %448 = vst [vmem:[%s441 + $0xc] sm:$0x1] %v447
    %v449 = vld [vmem:[%s441 + $0xa4] sm:$0x8]
    %v450 = vsel %vm423, 0, %v449
    %451 = vst [vmem:[%s441 + $0xa4] sm:$0x8] %v450
    %452 = vst [vmem:[%s441 + $0xa8] sm:$0xf] 0
    %v453 = vld [vmem:[%s441 + $0xac] sm:$0x1]
    %v454 = vsel %vm430, 0, %v453
    %455 = vst [vmem:[%s441 + $0xac] sm:$0x1] %v454
    %s456 = scalar_lea.vmem [#allocation2], 16
    %v457 = vld [vmem:[%s456 + $0x4] sm:$0x8]
    %v458 = vsel %vm423, 0, %v457
    %459 = vst [vmem:[%s456 + $0x4] sm:$0x8] %v458
    %v460 = vld [vmem:[%s456 + $0x14] sm:$0x8]
    %v461 = vsel %vm423, 0, %v460
    %462 = vst [vmem:[%s456 + $0x14] sm:$0x8] %v461
    %v463 = vld [vmem:[%s456 + $0x24] sm:$0x8]
    %v464 = vsel %vm423, 0, %v463
    %465 = vst [vmem:[%s456 + $0x24] sm:$0x8] %v464
    %v466 = vld [vmem:[%s456 + $0x34] sm:$0x8]
    %v467 = vsel %vm423, 0, %v466
    %468 = vst [vmem:[%s456 + $0x34] sm:$0x8] %v467
    %v469 = vld [vmem:[%s456 + $0x44] sm:$0x8]
    %v470 = vsel %vm423, 0, %v469
    %471 = vst [vmem:[%s456 + $0x44] sm:$0x8] %v470
    %v472 = vld [vmem:[%s456 + $0x54] sm:$0x8]
    %v473 = vsel %vm423, 0, %v472
    %474 = vst [vmem:[%s456 + $0x54] sm:$0x8] %v473
    %v475 = vld [vmem:[%s456 + $0x64] sm:$0x8]
    %v476 = vsel %vm423, 0, %v475
    %477 = vst [vmem:[%s456 + $0x64] sm:$0x8] %v476
    %v478 = vld [vmem:[%s456 + $0x74] sm:$0x8]
    %v479 = vsel %vm423, 0, %v478
    %480 = vst [vmem:[%s456 + $0x74] sm:$0x8] %v479
    %v481 = vld [vmem:[%s456 + $0xa4] sm:$0x8]
    %v482 = vsel %vm423, 0, %v481
    %483 = vst [vmem:[%s456 + $0xa4] sm:$0x8] %v482
    %v484 = vld [vmem:[%s456 + $0xb4] sm:$0x8]
    %v485 = vsel %vm423, 0, %v484
    %486 = vst [vmem:[%s456 + $0xb4] sm:$0x8] %v485
    %v487 = vld [vmem:[%s456 + $0xc4] sm:$0x8]
    %v488 = vsel %vm423, 0, %v487
    %489 = vst [vmem:[%s456 + $0xc4] sm:$0x8] %v488
    %v490 = vld [vmem:[%s456 + $0xd4] sm:$0x8]
    %v491 = vsel %vm423, 0, %v490
    %492 = vst [vmem:[%s456 + $0xd4] sm:$0x8] %v491
    %v493 = vld [vmem:[%s456 + $0xe4] sm:$0x8]
    %v494 = vsel %vm423, 0, %v493
    %495 = vst [vmem:[%s456 + $0xe4] sm:$0x8] %v494
    %v496 = vld [vmem:[%s456 + $0xf4] sm:$0x8]
    %v497 = vsel %vm423, 0, %v496
    %498 = vst [vmem:[%s456 + $0xf4] sm:$0x8] %v497
    %v499 = vld [vmem:[%s456 + $0x104] sm:$0x8]
    %v500 = vsel %vm423, 0, %v499
    %501 = vst [vmem:[%s456 + $0x104] sm:$0x8] %v500
    %v502 = vld [vmem:[%s456 + $0x114] sm:$0x8]
    %v503 = vsel %vm423, 0, %v502
    %504 = vst [vmem:[%s456 + $0x114] sm:$0x8] %v503
    %v505 = vld [vmem:[%s456 + $0xc] sm:$0x1]
    %v506 = vsel %vm430, 0, %v505
    %507 = vst [vmem:[%s456 + $0xc] sm:$0x1] %v506
    %v508 = vld [vmem:[%s456 + $0x1c] sm:$0x1]
    %v509 = vsel %vm430, 0, %v508
    %510 = vst [vmem:[%s456 + $0x1c] sm:$0x1] %v509
    %v511 = vld [vmem:[%s456 + $0x2c] sm:$0x1]
    %v512 = vsel %vm430, 0, %v511
    %513 = vst [vmem:[%s456 + $0x2c] sm:$0x1] %v512
    %v514 = vld [vmem:[%s456 + $0x3c] sm:$0x1]
    %v515 = vsel %vm430, 0, %v514
    %516 = vst [vmem:[%s456 + $0x3c] sm:$0x1] %v515
    %v517 = vld [vmem:[%s456 + $0x4c] sm:$0x1]
    %v518 = vsel %vm430, 0, %v517
    %519 = vst [vmem:[%s456 + $0x4c] sm:$0x1] %v518
    %v520 = vld [vmem:[%s456 + $0x5c] sm:$0x1]
    %v521 = vsel %vm430, 0, %v520
    %522 = vst [vmem:[%s456 + $0x5c] sm:$0x1] %v521
    %v523 = vld [vmem:[%s456 + $0x6c] sm:$0x1]
    %v524 = vsel %vm430, 0, %v523
    %525 = vst [vmem:[%s456 + $0x6c] sm:$0x1] %v524
    %v526 = vld [vmem:[%s456 + $0x7c] sm:$0x1]
    %v527 = vsel %vm430, 0, %v526
    %528 = vst [vmem:[%s456 + $0x7c] sm:$0x1] %v527
    %v529 = vld [vmem:[%s456 + $0xac] sm:$0x1]
    %v530 = vsel %vm430, 0, %v529
    %531 = vst [vmem:[%s456 + $0xac] sm:$0x1] %v530
    %v532 = vld [vmem:[%s456 + $0xbc] sm:$0x1]
    %v533 = vsel %vm430, 0, %v532
    %534 = vst [vmem:[%s456 + $0xbc] sm:$0x1] %v533
    %v535 = vld [vmem:[%s456 + $0xcc] sm:$0x1]
    %v536 = vsel %vm430, 0, %v535
    %537 = vst [vmem:[%s456 + $0xcc] sm:$0x1] %v536
    %v538 = vld [vmem:[%s456 + $0xdc] sm:$0x1]
    %v539 = vsel %vm430, 0, %v538
    %540 = vst [vmem:[%s456 + $0xdc] sm:$0x1] %v539
    %v541 = vld [vmem:[%s456 + $0xec] sm:$0x1]
    %v542 = vsel %vm430, 0, %v541
    %543 = vst [vmem:[%s456 + $0xec] sm:$0x1] %v542
    %v544 = vld [vmem:[%s456 + $0xfc] sm:$0x1]
    %v545 = vsel %vm430, 0, %v544
    %546 = vst [vmem:[%s456 + $0xfc] sm:$0x1] %v545
    %v547 = vld [vmem:[%s456 + $0x10c] sm:$0x1]
    %v548 = vsel %vm430, 0, %v547
    %549 = vst [vmem:[%s456 + $0x10c] sm:$0x1] %v548
    %v550 = vld [vmem:[%s456 + $0x11c] sm:$0x1]
    %v551 = vsel %vm430, 0, %v550
    %552 = vst [vmem:[%s456 + $0x11c] sm:$0x1] %v551
    %v553 = vpack.c.bf16 %v405, %v405
    %v554 = vpack.c.bf16 %v406, %v406
    %v555 = vpack.c.bf16 %v407, %v407
    %v556 = vpack.c.bf16 %v408, %v408
    %v557 = vpack.c.bf16 %v409, %v409
    %v558 = vpack.c.bf16 %v410, %v410
    %v559 = vpack.c.bf16 %v411, %v411
    %v560 = vpack.c.bf16 %v412, %v412
    %v561 = vpack.c.bf16 %v413, %v413
    %v562 = vpack.c.bf16 %v414, %v414
    %v563 = vpack.c.bf16 %v415, %v415
    %v564 = vpack.c.bf16 %v416, %v416
    %v565 = vpack.c.bf16 %v417, %v417
    %v566 = vpack.c.bf16 %v418, %v418
    %v567 = vpack.c.bf16 %v419, %v419
    %v568 = vpack.c.bf16 %v420, %v420
    %569 = vst [vmem:[%s456 + $0x8] sm:$0xf] %v553
    %570 = vst [vmem:[%s456 + $0x18] sm:$0xf] %v554
    %571 = vst [vmem:[%s456 + $0x28] sm:$0xf] %v555
    %572 = vst [vmem:[%s456 + $0x38] sm:$0xf] %v556
    %573 = vst [vmem:[%s456 + $0x48] sm:$0xf] %v557
    %574 = vst [vmem:[%s456 + $0x58] sm:$0xf] %v558
    %575 = vst [vmem:[%s456 + $0x68] sm:$0xf] %v559
    %576 = vst [vmem:[%s456 + $0x78] sm:$0xf] %v560
    %577 = vst [vmem:[%s456 + $0xa8] sm:$0xf] %v561
    %578 = vst [vmem:[%s456 + $0xb8] sm:$0xf] %v562
    %579 = vst [vmem:[%s456 + $0xc8] sm:$0xf] %v563
    %580 = vst [vmem:[%s456 + $0xd8] sm:$0xf] %v564
    %581 = vst [vmem:[%s456 + $0xe8] sm:$0xf] %v565
    %582 = vst [vmem:[%s456 + $0xf8] sm:$0xf] %v566
    %583 = vst [vmem:[%s456 + $0x108] sm:$0xf] %v567
    %584 = vst [vmem:[%s456 + $0x118] sm:$0xf] %v568
    %v585 = vld [vmem:[#allocation2 + $0x4] sm:$0x8]
    %v586 = vld [vmem:[#allocation2 + $0x8] sm:$0xf]
    %v587 = vld [vmem:[#allocation2 + $0x14] sm:$0x8]
    %v588 = vld [vmem:[#allocation2 + $0x18] sm:$0xf]
    %v589 = vld [vmem:[#allocation2 + $0x24] sm:$0x8]
    %v590 = vld [vmem:[#allocation2 + $0x28] sm:$0xf]
    %v591 = vld [vmem:[#allocation2 + $0x34] sm:$0x8]
    %v592 = vld [vmem:[#allocation2 + $0x38] sm:$0xf]
    %v593 = vld [vmem:[#allocation2 + $0x44] sm:$0x8]
    %v594 = vld [vmem:[#allocation2 + $0x48] sm:$0xf]
    %v595 = vld [vmem:[#allocation2 + $0x54] sm:$0x8]
    %v596 = vld [vmem:[#allocation2 + $0x58] sm:$0xf]
    %v597 = vld [vmem:[#allocation2 + $0x64] sm:$0x8]
    %v598 = vld [vmem:[#allocation2 + $0x68] sm:$0xf]
    %v599 = vld [vmem:[#allocation2 + $0x74] sm:$0x8]
    %v600 = vld [vmem:[#allocation2 + $0x78] sm:$0xf]
    %v601 = vld [vmem:[#allocation2 + $0xa4] sm:$0x8]
    %v602 = vld [vmem:[#allocation2 + $0xa8] sm:$0xf]
    %v603 = vld [vmem:[#allocation2 + $0xb4] sm:$0x8]
    %v604 = vld [vmem:[#allocation2 + $0xb8] sm:$0xf]
    %v605 = vld [vmem:[#allocation2 + $0xc4] sm:$0x8]
    %v606 = vld [vmem:[#allocation2 + $0xc8] sm:$0xf]
    %v607 = vld [vmem:[#allocation2 + $0xd4] sm:$0x8]
    %v608 = vld [vmem:[#allocation2 + $0xd8] sm:$0xf]
    %v609 = vld [vmem:[#allocation2 + $0xe4] sm:$0x8]
    %v610 = vld [vmem:[#allocation2 + $0xe8] sm:$0xf]
    %v611 = vld [vmem:[#allocation2 + $0xf4] sm:$0x8]
    %v612 = vld [vmem:[#allocation2 + $0xf8] sm:$0xf]
    %v613 = vld [vmem:[#allocation2 + $0x104] sm:$0x8]
    %v614 = vld [vmem:[#allocation2 + $0x108] sm:$0xf]
    %v615 = vld [vmem:[#allocation2 + $0x114] sm:$0x8]
    %v616 = vld [vmem:[#allocation2 + $0x118] sm:$0xf]
    %vm617 = vsmask.f32 4368
    %vm618 = vmor %vm429, %vm617
    %v620 = vshrl.u32 %v585, 16
    %v622 = vrot.slane %v620, 7
    %v623 = vrot.slane %v622, 4
    %v625 = vshrl.u32 %v586, 16
    %v627 = vrot.slane %v625, 7
    %v628 = vshll.u32 %v586, 16
    %v630 = vor.u32 %v627, %v628
    %v631 = vsel %vm618, %v623, %v630
    %v633 = vshrl.u32 %v587, 16
    %v635 = vrot.slane %v633, 7
    %v636 = vrot.slane %v635, 4
    %v638 = vshrl.u32 %v588, 16
    %v640 = vrot.slane %v638, 7
    %v641 = vshll.u32 %v588, 16
    %v643 = vor.u32 %v640, %v641
    %v644 = vsel %vm618, %v636, %v643
    %v646 = vshrl.u32 %v589, 16
    %v648 = vrot.slane %v646, 7
    %v649 = vrot.slane %v648, 4
    %v651 = vshrl.u32 %v590, 16
    %v653 = vrot.slane %v651, 7
    %v654 = vshll.u32 %v590, 16
    %v656 = vor.u32 %v653, %v654
    %v657 = vsel %vm618, %v649, %v656
    %v659 = vshrl.u32 %v591, 16
    %v661 = vrot.slane %v659, 7
    %v662 = vrot.slane %v661, 4
    %v664 = vshrl.u32 %v592, 16
    %v666 = vrot.slane %v664, 7
    %v667 = vshll.u32 %v592, 16
    %v669 = vor.u32 %v666, %v667
    %v670 = vsel %vm618, %v662, %v669
    %v672 = vshrl.u32 %v593, 16
    %v674 = vrot.slane %v672, 7
    %v675 = vrot.slane %v674, 4
    %v677 = vshrl.u32 %v594, 16
    %v679 = vrot.slane %v677, 7
    %v680 = vshll.u32 %v594, 16
    %v682 = vor.u32 %v679, %v680
    %v683 = vsel %vm618, %v675, %v682
    %v685 = vshrl.u32 %v595, 16
    %v687 = vrot.slane %v685, 7
    %v688 = vrot.slane %v687, 4
    %v690 = vshrl.u32 %v596, 16
    %v692 = vrot.slane %v690, 7
    %v693 = vshll.u32 %v596, 16
    %v695 = vor.u32 %v692, %v693
    %v696 = vsel %vm618, %v688, %v695
    %v698 = vshrl.u32 %v597, 16
    %v700 = vrot.slane %v698, 7
    %v701 = vrot.slane %v700, 4
    %v703 = vshrl.u32 %v598, 16
    %v705 = vrot.slane %v703, 7
    %v706 = vshll.u32 %v598, 16
    %v708 = vor.u32 %v705, %v706
    %v709 = vsel %vm618, %v701, %v708
    %v711 = vshrl.u32 %v599, 16
    %v713 = vrot.slane %v711, 7
    %v714 = vrot.slane %v713, 4
    %v716 = vshrl.u32 %v600, 16
    %v718 = vrot.slane %v716, 7
    %v719 = vshll.u32 %v600, 16
    %v721 = vor.u32 %v718, %v719
    %v722 = vsel %vm618, %v714, %v721
    %v724 = vshrl.u32 %v601, 16
    %v726 = vrot.slane %v724, 7
    %v727 = vrot.slane %v726, 4
    %v729 = vshrl.u32 %v602, 16
    %v731 = vrot.slane %v729, 7
    %v732 = vshll.u32 %v602, 16
    %v734 = vor.u32 %v731, %v732
    %v735 = vsel %vm618, %v727, %v734
    %v737 = vshrl.u32 %v603, 16
    %v739 = vrot.slane %v737, 7
    %v740 = vrot.slane %v739, 4
    %v742 = vshrl.u32 %v604, 16
    %v744 = vrot.slane %v742, 7
    %v745 = vshll.u32 %v604, 16
    %v747 = vor.u32 %v744, %v745
    %v748 = vsel %vm618, %v740, %v747
    %v750 = vshrl.u32 %v605, 16
    %v752 = vrot.slane %v750, 7
    %v753 = vrot.slane %v752, 4
    %v755 = vshrl.u32 %v606, 16
    %v757 = vrot.slane %v755, 7
    %v758 = vshll.u32 %v606, 16
    %v760 = vor.u32 %v757, %v758
    %v761 = vsel %vm618, %v753, %v760
    %v763 = vshrl.u32 %v607, 16
    %v765 = vrot.slane %v763, 7
    %v766 = vrot.slane %v765, 4
    %v768 = vshrl.u32 %v608, 16
    %v770 = vrot.slane %v768, 7
    %v771 = vshll.u32 %v608, 16
    %v773 = vor.u32 %v770, %v771
    %v774 = vsel %vm618, %v766, %v773
    %v776 = vshrl.u32 %v609, 16
    %v778 = vrot.slane %v776, 7
    %v779 = vrot.slane %v778, 4
    %v781 = vshrl.u32 %v610, 16
    %v783 = vrot.slane %v781, 7
    %v784 = vshll.u32 %v610, 16
    %v786 = vor.u32 %v783, %v784
    %v787 = vsel %vm618, %v779, %v786
    %v789 = vshrl.u32 %v611, 16
    %v791 = vrot.slane %v789, 7
    %v792 = vrot.slane %v791, 4
    %v794 = vshrl.u32 %v612, 16
    %v796 = vrot.slane %v794, 7
    %v797 = vshll.u32 %v612, 16
    %v799 = vor.u32 %v796, %v797
    %v800 = vsel %vm618, %v792, %v799
    %v802 = vshrl.u32 %v613, 16
    %v804 = vrot.slane %v802, 7
    %v805 = vrot.slane %v804, 4
    %v807 = vshrl.u32 %v614, 16
    %v809 = vrot.slane %v807, 7
    %v810 = vshll.u32 %v614, 16
    %v812 = vor.u32 %v809, %v810
    %v813 = vsel %vm618, %v805, %v812
    %v815 = vshrl.u32 %v615, 16
    %v817 = vrot.slane %v815, 7
    %v818 = vrot.slane %v817, 4
    %v820 = vshrl.u32 %v616, 16
    %v822 = vrot.slane %v820, 7
    %v823 = vshll.u32 %v616, 16
    %v825 = vor.u32 %v822, %v823
    %v826 = vsel %vm618, %v818, %v825
    %v827 = vld [vmem:[#allocation2 + $0xc] sm:$0x1]
    %v828 = vld [vmem:[#allocation2 + $0x1c] sm:$0x1]
    %v829 = vld [vmem:[#allocation2 + $0x2c] sm:$0x1]
    %v830 = vld [vmem:[#allocation2 + $0x3c] sm:$0x1]
    %v831 = vld [vmem:[#allocation2 + $0x4c] sm:$0x1]
    %v832 = vld [vmem:[#allocation2 + $0x5c] sm:$0x1]
    %v833 = vld [vmem:[#allocation2 + $0x6c] sm:$0x1]
    %v834 = vld [vmem:[#allocation2 + $0x7c] sm:$0x1]
    %v835 = vld [vmem:[#allocation2 + $0xac] sm:$0x1]
    %v836 = vld [vmem:[#allocation2 + $0xbc] sm:$0x1]
    %v837 = vld [vmem:[#allocation2 + $0xcc] sm:$0x1]
    %v838 = vld [vmem:[#allocation2 + $0xdc] sm:$0x1]
    %v839 = vld [vmem:[#allocation2 + $0xec] sm:$0x1]
    %v840 = vld [vmem:[#allocation2 + $0xfc] sm:$0x1]
    %v841 = vld [vmem:[#allocation2 + $0x10c] sm:$0x1]
    %v842 = vld [vmem:[#allocation2 + $0x11c] sm:$0x1]
    %vm843 = vsmask.f32 3328
    %vm844 = vsmask.f32 7440
    %vm845 = vmor %vm843, %vm844
    %v846 = vrot.slane %v625, 4
    %v847 = vrot.slane %v628, 5
    %v848 = vor.u32 %v846, %v847
    %v849 = vrot.slane %v848, 4
    %v851 = vshll.u32 %v827, 16
    %v853 = vrot.slane %v851, 5
    %v854 = vsel %vm845, %v849, %v853
    %v855 = vrot.slane %v638, 4
    %v856 = vrot.slane %v641, 5
    %v857 = vor.u32 %v855, %v856
    %v858 = vrot.slane %v857, 4
    %v860 = vshll.u32 %v828, 16
    %v862 = vrot.slane %v860, 5
    %v863 = vsel %vm845, %v858, %v862
    %v864 = vrot.slane %v651, 4
    %v865 = vrot.slane %v654, 5
    %v866 = vor.u32 %v864, %v865
    %v867 = vrot.slane %v866, 4
    %v869 = vshll.u32 %v829, 16
    %v871 = vrot.slane %v869, 5
    %v872 = vsel %vm845, %v867, %v871
    %v873 = vrot.slane %v664, 4
    %v874 = vrot.slane %v667, 5
    %v875 = vor.u32 %v873, %v874
    %v876 = vrot.slane %v875, 4
    %v878 = vshll.u32 %v830, 16
    %v880 = vrot.slane %v878, 5
    %v881 = vsel %vm845, %v876, %v880
    %v882 = vrot.slane %v677, 4
    %v883 = vrot.slane %v680, 5
    %v884 = vor.u32 %v882, %v883
    %v885 = vrot.slane %v884, 4
    %v887 = vshll.u32 %v831, 16
    %v889 = vrot.slane %v887, 5
    %v890 = vsel %vm845, %v885, %v889
    %v891 = vrot.slane %v690, 4
    %v892 = vrot.slane %v693, 5
    %v893 = vor.u32 %v891, %v892
    %v894 = vrot.slane %v893, 4
    %v896 = vshll.u32 %v832, 16
    %v898 = vrot.slane %v896, 5
    %v899 = vsel %vm845, %v894, %v898
    %v900 = vrot.slane %v703, 4
    %v901 = vrot.slane %v706, 5
    %v902 = vor.u32 %v900, %v901
    %v903 = vrot.slane %v902, 4
    %v905 = vshll.u32 %v833, 16
    %v907 = vrot.slane %v905, 5
    %v908 = vsel %vm845, %v903, %v907
    %v909 = vrot.slane %v716, 4
    %v910 = vrot.slane %v719, 5
    %v911 = vor.u32 %v909, %v910
    %v912 = vrot.slane %v911, 4
    %v914 = vshll.u32 %v834, 16
    %v916 = vrot.slane %v914, 5
    %v917 = vsel %vm845, %v912, %v916
    %v918 = vrot.slane %v729, 4
    %v919 = vrot.slane %v732, 5
    %v920 = vor.u32 %v918, %v919
    %v921 = vrot.slane %v920, 4
    %v923 = vshll.u32 %v835, 16
    %v925 = vrot.slane %v923, 5
    %v926 = vsel %vm845, %v921, %v925
    %v927 = vrot.slane %v742, 4
    %v928 = vrot.slane %v745, 5
    %v929 = vor.u32 %v927, %v928
    %v930 = vrot.slane %v929, 4
    %v932 = vshll.u32 %v836, 16
    %v934 = vrot.slane %v932, 5
    %v935 = vsel %vm845, %v930, %v934
    %v936 = vrot.slane %v755, 4
    %v937 = vrot.slane %v758, 5
    %v938 = vor.u32 %v936, %v937
    %v939 = vrot.slane %v938, 4
    %v941 = vshll.u32 %v837, 16
    %v943 = vrot.slane %v941, 5
    %v944 = vsel %vm845, %v939, %v943
    %v945 = vrot.slane %v768, 4
    %v946 = vrot.slane %v771, 5
    %v947 = vor.u32 %v945, %v946
    %v948 = vrot.slane %v947, 4
    %v950 = vshll.u32 %v838, 16
    %v952 = vrot.slane %v950, 5
    %v953 = vsel %vm845, %v948, %v952
    %v954 = vrot.slane %v781, 4
    %v955 = vrot.slane %v784, 5
    %v956 = vor.u32 %v954, %v955
    %v957 = vrot.slane %v956, 4
    %v959 = vshll.u32 %v839, 16
    %v961 = vrot.slane %v959, 5
    %v962 = vsel %vm845, %v957, %v961
    %v963 = vrot.slane %v794, 4
    %v964 = vrot.slane %v797, 5
    %v965 = vor.u32 %v963, %v964
    %v966 = vrot.slane %v965, 4
    %v968 = vshll.u32 %v840, 16
    %v970 = vrot.slane %v968, 5
    %v971 = vsel %vm845, %v966, %v970
    %v972 = vrot.slane %v807, 4
    %v973 = vrot.slane %v810, 5
    %v974 = vor.u32 %v972, %v973
    %v975 = vrot.slane %v974, 4
    %v977 = vshll.u32 %v841, 16
    %v979 = vrot.slane %v977, 5
    %v980 = vsel %vm845, %v975, %v979
    %v981 = vrot.slane %v820, 4
    %v982 = vrot.slane %v823, 5
    %v983 = vor.u32 %v981, %v982
    %v984 = vrot.slane %v983, 4
    %v986 = vshll.u32 %v842, 16
    %v988 = vrot.slane %v986, 5
    %v989 = vsel %vm845, %v984, %v988
    %v990 = vunpack.c.l.b16 %v631
    %v991 = vunpack.c.l.b16 %v644
    %v992 = vunpack.c.l.b16 %v657
    %v993 = vunpack.c.l.b16 %v670
    %v994 = vunpack.c.l.b16 %v683
    %v995 = vunpack.c.l.b16 %v696
    %v996 = vunpack.c.l.b16 %v709
    %v997 = vunpack.c.l.b16 %v722
    %v998 = vunpack.c.l.b16 %v735
    %v999 = vunpack.c.l.b16 %v748
    %v1000 = vunpack.c.l.b16 %v761
    %v1001 = vunpack.c.l.b16 %v774
    %v1002 = vunpack.c.l.b16 %v787
    %v1003 = vunpack.c.l.b16 %v800
    %v1004 = vunpack.c.l.b16 %v813
    %v1005 = vunpack.c.l.b16 %v826
    %v1006 = vpack.c.b16 %v991, %v990
    %v1007 = vpack.c.b16 %v993, %v992
    %v1008 = vpack.c.b16 %v995, %v994
    %v1009 = vpack.c.b16 %v997, %v996
    %v1010 = vpack.c.b16 %v999, %v998
    %v1011 = vpack.c.b16 %v1001, %v1000
    %v1012 = vpack.c.b16 %v1003, %v1002
    %v1013 = vpack.c.b16 %v1005, %v1004
    %v1038 = vunpack.c.l.b16 %v586
    %v1039 = vunpack.c.l.b16 %v588
    %v1040 = vunpack.c.l.b16 %v590
    %v1041 = vunpack.c.l.b16 %v592
    %v1042 = vunpack.c.l.b16 %v594
    %v1043 = vunpack.c.l.b16 %v596
    %v1044 = vunpack.c.l.b16 %v598
    %v1045 = vunpack.c.l.b16 %v600
    %v1046 = vunpack.c.l.b16 %v602
    %v1047 = vunpack.c.l.b16 %v604
    %v1048 = vunpack.c.l.b16 %v606
    %v1049 = vunpack.c.l.b16 %v608
    %v1050 = vunpack.c.l.b16 %v610
    %v1051 = vunpack.c.l.b16 %v612
    %v1052 = vunpack.c.l.b16 %v614
    %v1053 = vunpack.c.l.b16 %v616
    %v1054 = vpack.c.b16 %v1039, %v1038
    %v1055 = vpack.c.b16 %v1041, %v1040
    %v1056 = vpack.c.b16 %v1043, %v1042
    %v1057 = vpack.c.b16 %v1045, %v1044
    %v1058 = vpack.c.b16 %v1047, %v1046
    %v1059 = vpack.c.b16 %v1049, %v1048
    %v1060 = vpack.c.b16 %v1051, %v1050
    %v1061 = vpack.c.b16 %v1053, %v1052
    %v1070 = vunpack.c.l.b16 %v854
    %v1071 = vunpack.c.l.b16 %v863
    %v1072 = vunpack.c.l.b16 %v872
    %v1073 = vunpack.c.l.b16 %v881
    %v1074 = vunpack.c.l.b16 %v890
    %v1075 = vunpack.c.l.b16 %v899
    %v1076 = vunpack.c.l.b16 %v908
    %v1077 = vunpack.c.l.b16 %v917
    %v1078 = vunpack.c.l.b16 %v926
    %v1079 = vunpack.c.l.b16 %v935
    %v1080 = vunpack.c.l.b16 %v944
    %v1081 = vunpack.c.l.b16 %v953
    %v1082 = vunpack.c.l.b16 %v962
    %v1083 = vunpack.c.l.b16 %v971
    %v1084 = vunpack.c.l.b16 %v980
    %v1085 = vunpack.c.l.b16 %v989
    %v1086 = vpack.c.b16 %v1071, %v1070
    %v1087 = vpack.c.b16 %v1073, %v1072
    %v1088 = vpack.c.b16 %v1075, %v1074
    %v1089 = vpack.c.b16 %v1077, %v1076
    %v1090 = vpack.c.b16 %v1079, %v1078
    %v1091 = vpack.c.b16 %v1081, %v1080
    %v1092 = vpack.c.b16 %v1083, %v1082
    %v1093 = vpack.c.b16 %v1085, %v1084
    %v1102 = vld [vmem:[#allocation3] sm:$0xf]
    %v1103 = vld [vmem:[#allocation3 + $0x4] sm:$0xf]
    %v1104 = vld [vmem:[#allocation3 + $0x8] sm:$0xf]
    %v1105 = vld [vmem:[#allocation3 + $0xc] sm:$0xf]
    %v1106 = vld [vmem:[#allocation3 + $0x10] sm:$0xf]
    %v1107 = vld [vmem:[#allocation3 + $0x14] sm:$0xf]
    %v1108 = vld [vmem:[#allocation3 + $0x18] sm:$0xf]
    %v1109 = vld [vmem:[#allocation3 + $0x1c] sm:$0xf]
    %v1110 = vld [vmem:[#allocation3 + $0x20] sm:$0xf]
    %v1111 = vld [vmem:[#allocation3 + $0x24] sm:$0xf]
    %v1112 = vld [vmem:[#allocation3 + $0x28] sm:$0xf]
    %v1113 = vld [vmem:[#allocation3 + $0x2c] sm:$0xf]
    %v1114 = vld [vmem:[#allocation3 + $0x30] sm:$0xf]
    %v1115 = vld [vmem:[#allocation3 + $0x34] sm:$0xf]
    %v1116 = vld [vmem:[#allocation3 + $0x38] sm:$0xf]
    %v1117 = vld [vmem:[#allocation3 + $0x3c] sm:$0xf]
    %v1118 = vld [vmem:[#allocation3 + $0x40] sm:$0xf]
    %v1119 = vld [vmem:[#allocation3 + $0x44] sm:$0xf]
    %v1120 = vld [vmem:[#allocation3 + $0x48] sm:$0xf]
    %v1121 = vld [vmem:[#allocation3 + $0x4c] sm:$0xf]
    %v1122 = vld [vmem:[#allocation3 + $0x50] sm:$0xf]
    %v1123 = vld [vmem:[#allocation3 + $0x54] sm:$0xf]
    %v1124 = vld [vmem:[#allocation3 + $0x58] sm:$0xf]
    %v1125 = vld [vmem:[#allocation3 + $0x5c] sm:$0xf]
    %v1126 = vld [vmem:[#allocation3 + $0x60] sm:$0xf]
    %v1127 = vld [vmem:[#allocation3 + $0x64] sm:$0xf]
    %v1128 = vld [vmem:[#allocation3 + $0x68] sm:$0xf]
    %v1129 = vld [vmem:[#allocation3 + $0x6c] sm:$0xf]
    %v1130 = vld [vmem:[#allocation3 + $0x70] sm:$0xf]
    %v1131 = vld [vmem:[#allocation3 + $0x74] sm:$0xf]
    %v1132 = vld [vmem:[#allocation3 + $0x78] sm:$0xf]
    %v1133 = vld [vmem:[#allocation3 + $0x7c] sm:$0xf]
    %v1134 = vld [vmem:[#allocation3 + $0x80] sm:$0xf]
    %v1135 = vld [vmem:[#allocation3 + $0x84] sm:$0xf]
    %v1136 = vld [vmem:[#allocation3 + $0x88] sm:$0xf]
    %v1137 = vld [vmem:[#allocation3 + $0x8c] sm:$0xf]
    %v1138 = vld [vmem:[#allocation3 + $0x90] sm:$0xf]
    %v1139 = vld [vmem:[#allocation3 + $0x94] sm:$0xf]
    %v1140 = vld [vmem:[#allocation3 + $0x98] sm:$0xf]
    %v1141 = vld [vmem:[#allocation3 + $0x9c] sm:$0xf]
    %v1142 = vld [vmem:[#allocation3 + $0xa0] sm:$0xf]
    %v1143 = vld [vmem:[#allocation3 + $0xa4] sm:$0xf]
    %v1144 = vld [vmem:[#allocation3 + $0xa8] sm:$0xf]
    %v1145 = vld [vmem:[#allocation3 + $0xac] sm:$0xf]
    %v1146 = vld [vmem:[#allocation3 + $0xb0] sm:$0xf]
    %v1147 = vld [vmem:[#allocation3 + $0xb4] sm:$0xf]
    %v1148 = vld [vmem:[#allocation3 + $0xb8] sm:$0xf]
    %v1149 = vld [vmem:[#allocation3 + $0xbc] sm:$0xf]
    %v1150 = vld [vmem:[%s456 + $0x4] sm:$0x8]
    %v1151 = vld [vmem:[%s456 + $0x8] sm:$0xf]
    %v1152 = vld [vmem:[%s456 + $0x14] sm:$0x8]
    %v1153 = vld [vmem:[%s456 + $0x18] sm:$0xf]
    %v1154 = vld [vmem:[%s456 + $0x24] sm:$0x8]
    %v1155 = vld [vmem:[%s456 + $0x28] sm:$0xf]
    %v1156 = vld [vmem:[%s456 + $0x34] sm:$0x8]
    %v1157 = vld [vmem:[%s456 + $0x38] sm:$0xf]
    %v1158 = vld [vmem:[%s456 + $0x44] sm:$0x8]
    %v1159 = vld [vmem:[%s456 + $0x48] sm:$0xf]
    %v1160 = vld [vmem:[%s456 + $0x54] sm:$0x8]
    %v1161 = vld [vmem:[%s456 + $0x58] sm:$0xf]
    %v1162 = vld [vmem:[%s456 + $0x64] sm:$0x8]
    %v1163 = vld [vmem:[%s456 + $0x68] sm:$0xf]
    %v1164 = vld [vmem:[%s456 + $0x74] sm:$0x8]
    %v1165 = vld [vmem:[%s456 + $0x78] sm:$0xf]
    %v1166 = vld [vmem:[%s456 + $0xa4] sm:$0x8]
    %v1167 = vld [vmem:[%s456 + $0xa8] sm:$0xf]
    %v1168 = vld [vmem:[%s456 + $0xb4] sm:$0x8]
    %v1169 = vld [vmem:[%s456 + $0xb8] sm:$0xf]
    %v1170 = vld [vmem:[%s456 + $0xc4] sm:$0x8]
    %v1171 = vld [vmem:[%s456 + $0xc8] sm:$0xf]
    %v1172 = vld [vmem:[%s456 + $0xd4] sm:$0x8]
    %v1173 = vld [vmem:[%s456 + $0xd8] sm:$0xf]
    %v1174 = vld [vmem:[%s456 + $0xe4] sm:$0x8]
    %v1175 = vld [vmem:[%s456 + $0xe8] sm:$0xf]
    %v1176 = vld [vmem:[%s456 + $0xf4] sm:$0x8]
    %v1177 = vld [vmem:[%s456 + $0xf8] sm:$0xf]
    %v1178 = vld [vmem:[%s456 + $0x104] sm:$0x8]
    %v1179 = vld [vmem:[%s456 + $0x108] sm:$0xf]
    %v1180 = vld [vmem:[%s456 + $0x114] sm:$0x8]
    %v1181 = vld [vmem:[%s456 + $0x118] sm:$0xf]
    %v1183 = vshrl.u32 %v1150, 16
    %v1185 = vrot.slane %v1183, 7
    %v1186 = vrot.slane %v1185, 4
    %v1188 = vshrl.u32 %v1151, 16
    %v1190 = vrot.slane %v1188, 7
    %v1191 = vshll.u32 %v1151, 16
    %v1193 = vor.u32 %v1190, %v1191
    %v1194 = vsel %vm618, %v1186, %v1193
    %v1196 = vshrl.u32 %v1152, 16
    %v1198 = vrot.slane %v1196, 7
    %v1199 = vrot.slane %v1198, 4
    %v1201 = vshrl.u32 %v1153, 16
    %v1203 = vrot.slane %v1201, 7
    %v1204 = vshll.u32 %v1153, 16
    %v1206 = vor.u32 %v1203, %v1204
    %v1207 = vsel %vm618, %v1199, %v1206
    %v1209 = vshrl.u32 %v1154, 16
    %v1211 = vrot.slane %v1209, 7
    %v1212 = vrot.slane %v1211, 4
    %v1214 = vshrl.u32 %v1155, 16
    %v1216 = vrot.slane %v1214, 7
    %v1217 = vshll.u32 %v1155, 16
    %v1219 = vor.u32 %v1216, %v1217
    %v1220 = vsel %vm618, %v1212, %v1219
    %v1222 = vshrl.u32 %v1156, 16
    %v1224 = vrot.slane %v1222, 7
    %v1225 = vrot.slane %v1224, 4
    %v1227 = vshrl.u32 %v1157, 16
    %v1229 = vrot.slane %v1227, 7
    %v1230 = vshll.u32 %v1157, 16
    %v1232 = vor.u32 %v1229, %v1230
    %v1233 = vsel %vm618, %v1225, %v1232
    %v1235 = vshrl.u32 %v1158, 16
    %v1237 = vrot.slane %v1235, 7
    %v1238 = vrot.slane %v1237, 4
    %v1240 = vshrl.u32 %v1159, 16
    %v1242 = vrot.slane %v1240, 7
    %v1243 = vshll.u32 %v1159, 16
    %v1245 = vor.u32 %v1242, %v1243
    %v1246 = vsel %vm618, %v1238, %v1245
    %v1248 = vshrl.u32 %v1160, 16
    %v1250 = vrot.slane %v1248, 7
    %v1251 = vrot.slane %v1250, 4
    %v1253 = vshrl.u32 %v1161, 16
    %v1255 = vrot.slane %v1253, 7
    %v1256 = vshll.u32 %v1161, 16
    %v1258 = vor.u32 %v1255, %v1256
    %v1259 = vsel %vm618, %v1251, %v1258
    %v1261 = vshrl.u32 %v1162, 16
    %v1263 = vrot.slane %v1261, 7
    %v1264 = vrot.slane %v1263, 4
    %v1266 = vshrl.u32 %v1163, 16
    %v1268 = vrot.slane %v1266, 7
    %v1269 = vshll.u32 %v1163, 16
    %v1271 = vor.u32 %v1268, %v1269
    %v1272 = vsel %vm618, %v1264, %v1271
    %v1274 = vshrl.u32 %v1164, 16
    %v1276 = vrot.slane %v1274, 7
    %v1277 = vrot.slane %v1276, 4
    %v1279 = vshrl.u32 %v1165, 16
    %v1281 = vrot.slane %v1279, 7
    %v1282 = vshll.u32 %v1165, 16
    %v1284 = vor.u32 %v1281, %v1282
    %v1285 = vsel %vm618, %v1277, %v1284
    %v1287 = vshrl.u32 %v1166, 16
    %v1289 = vrot.slane %v1287, 7
    %v1290 = vrot.slane %v1289, 4
    %v1292 = vshrl.u32 %v1167, 16
    %v1294 = vrot.slane %v1292, 7
    %v1295 = vshll.u32 %v1167, 16
    %v1297 = vor.u32 %v1294, %v1295
    %v1298 = vsel %vm618, %v1290, %v1297
    %v1300 = vshrl.u32 %v1168, 16
    %v1302 = vrot.slane %v1300, 7
    %v1303 = vrot.slane %v1302, 4
    %v1305 = vshrl.u32 %v1169, 16
    %v1307 = vrot.slane %v1305, 7
    %v1308 = vshll.u32 %v1169, 16
    %v1310 = vor.u32 %v1307, %v1308
    %v1311 = vsel %vm618, %v1303, %v1310
    %v1313 = vshrl.u32 %v1170, 16
    %v1315 = vrot.slane %v1313, 7
    %v1316 = vrot.slane %v1315, 4
    %v1318 = vshrl.u32 %v1171, 16
    %v1320 = vrot.slane %v1318, 7
    %v1321 = vshll.u32 %v1171, 16
    %v1323 = vor.u32 %v1320, %v1321
    %v1324 = vsel %vm618, %v1316, %v1323
    %v1326 = vshrl.u32 %v1172, 16
    %v1328 = vrot.slane %v1326, 7
    %v1329 = vrot.slane %v1328, 4
    %v1331 = vshrl.u32 %v1173, 16
    %v1333 = vrot.slane %v1331, 7
    %v1334 = vshll.u32 %v1173, 16
    %v1336 = vor.u32 %v1333, %v1334
    %v1337 = vsel %vm618, %v1329, %v1336
    %v1339 = vshrl.u32 %v1174, 16
    %v1341 = vrot.slane %v1339, 7
    %v1342 = vrot.slane %v1341, 4
    %v1344 = vshrl.u32 %v1175, 16
    %v1346 = vrot.slane %v1344, 7
    %v1347 = vshll.u32 %v1175, 16
    %v1349 = vor.u32 %v1346, %v1347
    %v1350 = vsel %vm618, %v1342, %v1349
    %v1352 = vshrl.u32 %v1176, 16
    %v1354 = vrot.slane %v1352, 7
    %v1355 = vrot.slane %v1354, 4
    %v1357 = vshrl.u32 %v1177, 16
    %v1359 = vrot.slane %v1357, 7
    %v1360 = vshll.u32 %v1177, 16
    %v1362 = vor.u32 %v1359, %v1360
    %v1363 = vsel %vm618, %v1355, %v1362
    %v1365 = vshrl.u32 %v1178, 16
    %v1367 = vrot.slane %v1365, 7
    %v1368 = vrot.slane %v1367, 4
    %v1370 = vshrl.u32 %v1179, 16
    %v1372 = vrot.slane %v1370, 7
    %v1373 = vshll.u32 %v1179, 16
    %v1375 = vor.u32 %v1372, %v1373
    %v1376 = vsel %vm618, %v1368, %v1375
    %v1378 = vshrl.u32 %v1180, 16
    %v1380 = vrot.slane %v1378, 7
    %v1381 = vrot.slane %v1380, 4
    %v1383 = vshrl.u32 %v1181, 16
    %v1385 = vrot.slane %v1383, 7
    %v1386 = vshll.u32 %v1181, 16
    %v1388 = vor.u32 %v1385, %v1386
    %v1389 = vsel %vm618, %v1381, %v1388
    %v1390 = vld [vmem:[%s456 + $0xc] sm:$0x1]
    %v1391 = vld [vmem:[%s456 + $0x1c] sm:$0x1]
    %v1392 = vld [vmem:[%s456 + $0x2c] sm:$0x1]
    %v1393 = vld [vmem:[%s456 + $0x3c] sm:$0x1]
    %v1394 = vld [vmem:[%s456 + $0x4c] sm:$0x1]
    %v1395 = vld [vmem:[%s456 + $0x5c] sm:$0x1]
    %v1396 = vld [vmem:[%s456 + $0x6c] sm:$0x1]
    %v1397 = vld [vmem:[%s456 + $0x7c] sm:$0x1]
    %v1398 = vld [vmem:[%s456 + $0xac] sm:$0x1]
    %v1399 = vld [vmem:[%s456 + $0xbc] sm:$0x1]
    %v1400 = vld [vmem:[%s456 + $0xcc] sm:$0x1]
    %v1401 = vld [vmem:[%s456 + $0xdc] sm:$0x1]
    %v1402 = vld [vmem:[%s456 + $0xec] sm:$0x1]
    %v1403 = vld [vmem:[%s456 + $0xfc] sm:$0x1]
    %v1404 = vld [vmem:[%s456 + $0x10c] sm:$0x1]
    %v1405 = vld [vmem:[%s456 + $0x11c] sm:$0x1]
    %v1406 = vrot.slane %v1188, 4
    %v1407 = vrot.slane %v1191, 5
    %v1408 = vor.u32 %v1406, %v1407
    %v1409 = vrot.slane %v1408, 4
    %v1411 = vshll.u32 %v1390, 16
    %v1413 = vrot.slane %v1411, 5
    %v1414 = vsel %vm845, %v1409, %v1413
    %v1415 = vrot.slane %v1201, 4
    %v1416 = vrot.slane %v1204, 5
    %v1417 = vor.u32 %v1415, %v1416
    %v1418 = vrot.slane %v1417, 4
    %v1420 = vshll.u32 %v1391, 16
    %v1422 = vrot.slane %v1420, 5
    %v1423 = vsel %vm845, %v1418, %v1422
    %v1424 = vrot.slane %v1214, 4
    %v1425 = vrot.slane %v1217, 5
    %v1426 = vor.u32 %v1424, %v1425
    %v1427 = vrot.slane %v1426, 4
    %v1429 = vshll.u32 %v1392, 16
    %v1431 = vrot.slane %v1429, 5
    %v1432 = vsel %vm845, %v1427, %v1431
    %v1433 = vrot.slane %v1227, 4
    %v1434 = vrot.slane %v1230, 5
    %v1435 = vor.u32 %v1433, %v1434
    %v1436 = vrot.slane %v1435, 4
    %v1438 = vshll.u32 %v1393, 16
    %v1440 = vrot.slane %v1438, 5
    %v1441 = vsel %vm845, %v1436, %v1440
    %v1442 = vrot.slane %v1240, 4
    %v1443 = vrot.slane %v1243, 5
    %v1444 = vor.u32 %v1442, %v1443
    %v1445 = vrot.slane %v1444, 4
    %v1447 = vshll.u32 %v1394, 16
    %v1449 = vrot.slane %v1447, 5
    %v1450 = vsel %vm845, %v1445, %v1449
    %v1451 = vrot.slane %v1253, 4
    %v1452 = vrot.slane %v1256, 5
    %v1453 = vor.u32 %v1451, %v1452
    %v1454 = vrot.slane %v1453, 4
    %v1456 = vshll.u32 %v1395, 16
    %v1458 = vrot.slane %v1456, 5
    %v1459 = vsel %vm845, %v1454, %v1458
    %v1460 = vrot.slane %v1266, 4
    %v1461 = vrot.slane %v1269, 5
    %v1462 = vor.u32 %v1460, %v1461
    %v1463 = vrot.slane %v1462, 4
    %v1465 = vshll.u32 %v1396, 16
    %v1467 = vrot.slane %v1465, 5
    %v1468 = vsel %vm845, %v1463, %v1467
    %v1469 = vrot.slane %v1279, 4
    %v1470 = vrot.slane %v1282, 5
    %v1471 = vor.u32 %v1469, %v1470
    %v1472 = vrot.slane %v1471, 4
    %v1474 = vshll.u32 %v1397, 16
    %v1476 = vrot.slane %v1474, 5
    %v1477 = vsel %vm845, %v1472, %v1476
    %v1478 = vrot.slane %v1292, 4
    %v1479 = vrot.slane %v1295, 5
    %v1480 = vor.u32 %v1478, %v1479
    %v1481 = vrot.slane %v1480, 4
    %v1483 = vshll.u32 %v1398, 16
    %v1485 = vrot.slane %v1483, 5
    %v1486 = vsel %vm845, %v1481, %v1485
    %v1487 = vrot.slane %v1305, 4
    %v1488 = vrot.slane %v1308, 5
    %v1489 = vor.u32 %v1487, %v1488
    %v1490 = vrot.slane %v1489, 4
    %v1492 = vshll.u32 %v1399, 16
    %v1494 = vrot.slane %v1492, 5
    %v1495 = vsel %vm845, %v1490, %v1494
    %v1496 = vrot.slane %v1318, 4
    %v1497 = vrot.slane %v1321, 5
    %v1498 = vor.u32 %v1496, %v1497
    %v1499 = vrot.slane %v1498, 4
    %v1501 = vshll.u32 %v1400, 16
    %v1503 = vrot.slane %v1501, 5
    %v1504 = vsel %vm845, %v1499, %v1503
    %v1505 = vrot.slane %v1331, 4
    %v1506 = vrot.slane %v1334, 5
    %v1507 = vor.u32 %v1505, %v1506
    %v1508 = vrot.slane %v1507, 4
    %v1510 = vshll.u32 %v1401, 16
    %v1512 = vrot.slane %v1510, 5
    %v1513 = vsel %vm845, %v1508, %v1512
    %v1514 = vrot.slane %v1344, 4
    %v1515 = vrot.slane %v1347, 5
    %v1516 = vor.u32 %v1514, %v1515
    %v1517 = vrot.slane %v1516, 4
    %v1519 = vshll.u32 %v1402, 16
    %v1521 = vrot.slane %v1519, 5
    %v1522 = vsel %vm845, %v1517, %v1521
    %v1523 = vrot.slane %v1357, 4
    %v1524 = vrot.slane %v1360, 5
    %v1525 = vor.u32 %v1523, %v1524
    %v1526 = vrot.slane %v1525, 4
    %v1528 = vshll.u32 %v1403, 16
    %v1530 = vrot.slane %v1528, 5
    %v1531 = vsel %vm845, %v1526, %v1530
    %v1532 = vrot.slane %v1370, 4
    %v1533 = vrot.slane %v1373, 5
    %v1534 = vor.u32 %v1532, %v1533
    %v1535 = vrot.slane %v1534, 4
    %v1537 = vshll.u32 %v1404, 16
    %v1539 = vrot.slane %v1537, 5
    %v1540 = vsel %vm845, %v1535, %v1539
    %v1541 = vrot.slane %v1383, 4
    %v1542 = vrot.slane %v1386, 5
    %v1543 = vor.u32 %v1541, %v1542
    %v1544 = vrot.slane %v1543, 4
    %v1546 = vshll.u32 %v1405, 16
    %v1548 = vrot.slane %v1546, 5
    %v1549 = vsel %vm845, %v1544, %v1548
    %v1550 = vunpack.c.l.b16 %v1194
    %v1551 = vunpack.c.l.b16 %v1207
    %v1552 = vunpack.c.l.b16 %v1220
    %v1553 = vunpack.c.l.b16 %v1233
    %v1554 = vunpack.c.l.b16 %v1246
    %v1555 = vunpack.c.l.b16 %v1259
    %v1556 = vunpack.c.l.b16 %v1272
    %v1557 = vunpack.c.l.b16 %v1285
    %v1558 = vunpack.c.l.b16 %v1298
    %v1559 = vunpack.c.l.b16 %v1311
    %v1560 = vunpack.c.l.b16 %v1324
    %v1561 = vunpack.c.l.b16 %v1337
    %v1562 = vunpack.c.l.b16 %v1350
    %v1563 = vunpack.c.l.b16 %v1363
    %v1564 = vunpack.c.l.b16 %v1376
    %v1565 = vunpack.c.l.b16 %v1389
    %v1566 = vpack.c.b16 %v1551, %v1550
    %v1567 = vpack.c.b16 %v1553, %v1552
    %v1568 = vpack.c.b16 %v1555, %v1554
    %v1569 = vpack.c.b16 %v1557, %v1556
    %v1570 = vpack.c.b16 %v1559, %v1558
    %v1571 = vpack.c.b16 %v1561, %v1560
    %v1572 = vpack.c.b16 %v1563, %v1562
    %v1573 = vpack.c.b16 %v1565, %v1564
    %v1598 = vunpack.c.l.b16 %v1151
    %v1599 = vunpack.c.l.b16 %v1153
    %v1600 = vunpack.c.l.b16 %v1155
    %v1601 = vunpack.c.l.b16 %v1157
    %v1602 = vunpack.c.l.b16 %v1159
    %v1603 = vunpack.c.l.b16 %v1161
    %v1604 = vunpack.c.l.b16 %v1163
    %v1605 = vunpack.c.l.b16 %v1165
    %v1606 = vunpack.c.l.b16 %v1167
    %v1607 = vunpack.c.l.b16 %v1169
    %v1608 = vunpack.c.l.b16 %v1171
    %v1609 = vunpack.c.l.b16 %v1173
    %v1610 = vunpack.c.l.b16 %v1175
    %v1611 = vunpack.c.l.b16 %v1177
    %v1612 = vunpack.c.l.b16 %v1179
    %v1613 = vunpack.c.l.b16 %v1181
    %v1614 = vpack.c.b16 %v1599, %v1598
    %v1615 = vpack.c.b16 %v1601, %v1600
    %v1616 = vpack.c.b16 %v1603, %v1602
    %v1617 = vpack.c.b16 %v1605, %v1604
    %v1618 = vpack.c.b16 %v1607, %v1606
    %v1619 = vpack.c.b16 %v1609, %v1608
    %v1620 = vpack.c.b16 %v1611, %v1610
    %v1621 = vpack.c.b16 %v1613, %v1612
    %v1630 = vunpack.c.l.b16 %v1414
    %v1631 = vunpack.c.l.b16 %v1423
    %v1632 = vunpack.c.l.b16 %v1432
    %v1633 = vunpack.c.l.b16 %v1441
    %v1634 = vunpack.c.l.b16 %v1450
    %v1635 = vunpack.c.l.b16 %v1459
    %v1636 = vunpack.c.l.b16 %v1468
    %v1637 = vunpack.c.l.b16 %v1477
    %v1638 = vunpack.c.l.b16 %v1486
    %v1639 = vunpack.c.l.b16 %v1495
    %v1640 = vunpack.c.l.b16 %v1504
    %v1641 = vunpack.c.l.b16 %v1513
    %v1642 = vunpack.c.l.b16 %v1522
    %v1643 = vunpack.c.l.b16 %v1531
    %v1644 = vunpack.c.l.b16 %v1540
    %v1645 = vunpack.c.l.b16 %v1549
    %v1646 = vpack.c.b16 %v1631, %v1630
    %v1647 = vpack.c.b16 %v1633, %v1632
    %v1648 = vpack.c.b16 %v1635, %v1634
    %v1649 = vpack.c.b16 %v1637, %v1636
    %v1650 = vpack.c.b16 %v1639, %v1638
    %v1651 = vpack.c.b16 %v1641, %v1640
    %v1652 = vpack.c.b16 %v1643, %v1642
    %v1653 = vpack.c.b16 %v1645, %v1644
    %v1662 = vld [vmem:[#allocation3 + $0xc0] sm:$0xf]
    %v1663 = vld [vmem:[#allocation3 + $0xc4] sm:$0xf]
    %v1664 = vld [vmem:[#allocation3 + $0xc8] sm:$0xf]
    %v1665 = vld [vmem:[#allocation3 + $0xcc] sm:$0xf]
    %v1666 = vld [vmem:[#allocation3 + $0xd0] sm:$0xf]
    %v1667 = vld [vmem:[#allocation3 + $0xd4] sm:$0xf]
    %v1668 = vld [vmem:[#allocation3 + $0xd8] sm:$0xf]
    %v1669 = vld [vmem:[#allocation3 + $0xdc] sm:$0xf]
    %v1670 = vld [vmem:[#allocation3 + $0xe0] sm:$0xf]
    %v1671 = vld [vmem:[#allocation3 + $0xe4] sm:$0xf]
    %v1672 = vld [vmem:[#allocation3 + $0xe8] sm:$0xf]
    %v1673 = vld [vmem:[#allocation3 + $0xec] sm:$0xf]
    %v1674 = vld [vmem:[#allocation3 + $0xf0] sm:$0xf]
    %v1675 = vld [vmem:[#allocation3 + $0xf4] sm:$0xf]
    %v1676 = vld [vmem:[#allocation3 + $0xf8] sm:$0xf]
    %v1677 = vld [vmem:[#allocation3 + $0xfc] sm:$0xf]
    %v1678 = vld [vmem:[#allocation3 + $0x100] sm:$0xf]
    %v1679 = vld [vmem:[#allocation3 + $0x104] sm:$0xf]
    %v1680 = vld [vmem:[#allocation3 + $0x108] sm:$0xf]
    %v1681 = vld [vmem:[#allocation3 + $0x10c] sm:$0xf]
    %v1682 = vld [vmem:[#allocation3 + $0x110] sm:$0xf]
    %v1683 = vld [vmem:[#allocation3 + $0x114] sm:$0xf]
    %v1684 = vld [vmem:[#allocation3 + $0x118] sm:$0xf]
    %v1685 = vld [vmem:[#allocation3 + $0x11c] sm:$0xf]
    %v1686 = vld [vmem:[#allocation3 + $0x120] sm:$0xf]
    %v1687 = vld [vmem:[#allocation3 + $0x124] sm:$0xf]
    %v1688 = vld [vmem:[#allocation3 + $0x128] sm:$0xf]
    %v1689 = vld [vmem:[#allocation3 + $0x12c] sm:$0xf]
    %v1690 = vld [vmem:[#allocation3 + $0x130] sm:$0xf]
    %v1691 = vld [vmem:[#allocation3 + $0x134] sm:$0xf]
    %v1692 = vld [vmem:[#allocation3 + $0x138] sm:$0xf]
    %v1693 = vld [vmem:[#allocation3 + $0x13c] sm:$0xf]
    %v1694 = vld [vmem:[#allocation3 + $0x140] sm:$0xf]
    %v1695 = vld [vmem:[#allocation3 + $0x144] sm:$0xf]
    %v1696 = vld [vmem:[#allocation3 + $0x148] sm:$0xf]
    %v1697 = vld [vmem:[#allocation3 + $0x14c] sm:$0xf]
    %v1698 = vld [vmem:[#allocation3 + $0x150] sm:$0xf]
    %v1699 = vld [vmem:[#allocation3 + $0x154] sm:$0xf]
    %v1700 = vld [vmem:[#allocation3 + $0x158] sm:$0xf]
    %v1701 = vld [vmem:[#allocation3 + $0x15c] sm:$0xf]
    %v1702 = vld [vmem:[#allocation3 + $0x160] sm:$0xf]
    %v1703 = vld [vmem:[#allocation3 + $0x164] sm:$0xf]
    %v1704 = vld [vmem:[#allocation3 + $0x168] sm:$0xf]
    %v1705 = vld [vmem:[#allocation3 + $0x16c] sm:$0xf]
    %v1706 = vld [vmem:[#allocation3 + $0x170] sm:$0xf]
    %v1707 = vld [vmem:[#allocation3 + $0x174] sm:$0xf]
    %v1708 = vld [vmem:[#allocation3 + $0x178] sm:$0xf]
    %v1709 = vld [vmem:[#allocation3 + $0x17c] sm:$0xf]
    %v1758 = vunpack.c.l.b16 %v1662
    %v1759 = vunpack.c.l.b16 %v1663
    %v1760 = vunpack.c.l.b16 %v1664
    %v1761 = vunpack.c.l.b16 %v1665
    %v1762 = vunpack.c.l.b16 %v1666
    %v1763 = vunpack.c.l.b16 %v1667
    %v1764 = vunpack.c.l.b16 %v1668
    %v1765 = vunpack.c.l.b16 %v1669
    %v1766 = vunpack.c.l.b16 %v1670
    %v1767 = vunpack.c.l.b16 %v1671
    %v1768 = vunpack.c.l.b16 %v1672
    %v1769 = vunpack.c.l.b16 %v1673
    %v1770 = vunpack.c.l.b16 %v1674
    %v1771 = vunpack.c.l.b16 %v1675
    %v1772 = vunpack.c.l.b16 %v1676
    %v1773 = vunpack.c.l.b16 %v1677
    %v1774 = vunpack.c.l.b16 %v1678
    %v1775 = vunpack.c.l.b16 %v1679
    %v1776 = vunpack.c.l.b16 %v1680
    %v1777 = vunpack.c.l.b16 %v1681
    %v1778 = vunpack.c.l.b16 %v1682
    %v1779 = vunpack.c.l.b16 %v1683
    %v1780 = vunpack.c.l.b16 %v1684
    %v1781 = vunpack.c.l.b16 %v1685
    %v1782 = vunpack.c.l.b16 %v1686
    %v1783 = vunpack.c.l.b16 %v1687
    %v1784 = vunpack.c.l.b16 %v1688
    %v1785 = vunpack.c.l.b16 %v1689
    %v1786 = vunpack.c.l.b16 %v1690
    %v1787 = vunpack.c.l.b16 %v1691
    %v1788 = vunpack.c.l.b16 %v1692
    %v1789 = vunpack.c.l.b16 %v1693
    %v1790 = vunpack.c.l.b16 %v1694
    %v1791 = vunpack.c.l.b16 %v1695
    %v1792 = vunpack.c.l.b16 %v1696
    %v1793 = vunpack.c.l.b16 %v1697
    %v1794 = vunpack.c.l.b16 %v1698
    %v1795 = vunpack.c.l.b16 %v1699
    %v1796 = vunpack.c.l.b16 %v1700
    %v1797 = vunpack.c.l.b16 %v1701
    %v1798 = vunpack.c.l.b16 %v1702
    %v1799 = vunpack.c.l.b16 %v1703
    %v1800 = vunpack.c.l.b16 %v1704
    %v1801 = vunpack.c.l.b16 %v1705
    %v1802 = vunpack.c.l.b16 %v1706
    %v1803 = vunpack.c.l.b16 %v1707
    %v1804 = vunpack.c.l.b16 %v1708
    %v1805 = vunpack.c.l.b16 %v1709
    %v1806 = vpack.c.b16 %v1759, %v1758
    %v1807 = vpack.c.b16 %v1761, %v1760
    %v1808 = vpack.c.b16 %v1763, %v1762
    %v1809 = vpack.c.b16 %v1765, %v1764
    %v1810 = vpack.c.b16 %v1767, %v1766
    %v1811 = vpack.c.b16 %v1769, %v1768
    %v1812 = vpack.c.b16 %v1771, %v1770
    %v1813 = vpack.c.b16 %v1773, %v1772
    %v1814 = vpack.c.b16 %v1775, %v1774
    %v1815 = vpack.c.b16 %v1777, %v1776
    %v1816 = vpack.c.b16 %v1779, %v1778
    %v1817 = vpack.c.b16 %v1781, %v1780
    %v1818 = vpack.c.b16 %v1783, %v1782
    %v1819 = vpack.c.b16 %v1785, %v1784
    %v1820 = vpack.c.b16 %v1787, %v1786
    %v1821 = vpack.c.b16 %v1789, %v1788
    %v1822 = vpack.c.b16 %v1791, %v1790
    %v1823 = vpack.c.b16 %v1793, %v1792
    %v1824 = vpack.c.b16 %v1795, %v1794
    %v1825 = vpack.c.b16 %v1797, %v1796
    %v1826 = vpack.c.b16 %v1799, %v1798
    %v1827 = vpack.c.b16 %v1801, %v1800
    %v1828 = vpack.c.b16 %v1803, %v1802
    %v1829 = vpack.c.b16 %v1805, %v1804
    %1854 = vmatprep.subr.bf16.mxu0 0
    %1855 = vmatpush1.bf16.msra.mxu0 %v1813
    %1856 = vmatprep.subr.bf16.mxu0 0
    %1857 = vmatpush1.bf16.msra.mxu0 %v1812
    %1858 = vmatprep.subr.bf16.mxu0 0
    %1859 = vmatpush1.bf16.msra.mxu0 %v1811
    %1860 = vmatprep.subr.bf16.mxu0 0
    %1861 = vmatpush1.bf16.msra.mxu0 %v1810
    %1862 = vmatprep.subr.bf16.mxu0 0
    %1863 = vmatpush1.bf16.msra.mxu0 %v1809
    %1864 = vmatprep.subr.bf16.mxu0 0
    %1865 = vmatpush1.bf16.msra.mxu0 %v1808
    %1866 = vmatprep.subr.bf16.mxu0 0
    %1867 = vmatpush1.bf16.msra.mxu0 %v1807
    %1868 = vmatprep.subr.bf16.mxu0 0
    %1869 = vmatpush1.bf16.msra.mxu0 %v1806
    %1870 = vmatprep.subr.bf16.mxu0 0
    %1871 = vmatpush2.bf16.msra.mxu0 %v1821
    %1872 = vmatprep.subr.bf16.mxu0 0
    %1873 = vmatpush2.bf16.msra.mxu0 %v1820
    %1874 = vmatprep.subr.bf16.mxu0 0
    %1875 = vmatpush2.bf16.msra.mxu0 %v1819
    %1876 = vmatprep.subr.bf16.mxu0 0
    %1877 = vmatpush2.bf16.msra.mxu0 %v1818
    %1878 = vmatprep.subr.bf16.mxu0 0
    %1879 = vmatpush2.bf16.msra.mxu0 %v1817
    %1880 = vmatprep.subr.bf16.mxu0 0
    %1881 = vmatpush2.bf16.msra.mxu0 %v1816
    %1882 = vmatprep.subr.bf16.mxu0 0
    %1883 = vmatpush2.bf16.msra.mxu0 %v1815
    %1884 = vmatprep.subr.bf16.mxu0 0
    %1885 = vmatpush2.bf16.msra.mxu0 %v1814
    %1886 = vmatprep.mubr.bf16.mxu0 %v1614
    %1887 = vmatmul.mubr.bf16.gmra.mxu0 %v1566
    %v1888 = vpop.f32.mrf.mxu0
    %v1889 = vadd.f32 0.0, %v1888
    %v1890 = vpop.f32.mrf.mxu0
    %v1891 = vpop.f32.mrf.mxu0
    %v1892 = vadd.f32 0.0, %v1891
    %v1893 = vpop.f32.mrf.mxu0
    %1894 = vmatprep.mubr.bf16.mxu0 %v1615
    %1895 = vmatmul.mubr.bf16.gmra.mxu0 %v1567
    %v1896 = vpop.f32.mrf.mxu0
    %v1897 = vadd.f32 0.0, %v1896
    %v1898 = vpop.f32.mrf.mxu0
    %v1899 = vpop.f32.mrf.mxu0
    %v1900 = vadd.f32 0.0, %v1899
    %v1901 = vpop.f32.mrf.mxu0
    %1902 = vmatprep.mubr.bf16.mxu0 %v1616
    %1903 = vmatmul.mubr.bf16.gmra.mxu0 %v1568
    %v1904 = vpop.f32.mrf.mxu0
    %v1905 = vadd.f32 0.0, %v1904
    %v1906 = vpop.f32.mrf.mxu0
    %v1907 = vpop.f32.mrf.mxu0
    %v1908 = vadd.f32 0.0, %v1907
    %v1909 = vpop.f32.mrf.mxu0
    %1910 = vmatprep.mubr.bf16.mxu0 %v1617
    %1911 = vmatmul.mubr.bf16.gmra.mxu0 %v1569
    %v1912 = vpop.f32.mrf.mxu0
    %v1913 = vadd.f32 0.0, %v1912
    %v1914 = vpop.f32.mrf.mxu0
    %v1915 = vpop.f32.mrf.mxu0
    %v1916 = vadd.f32 0.0, %v1915
    %v1917 = vpop.f32.mrf.mxu0
    %1918 = vmatprep.mubr.bf16.mxu0 %v1618
    %1919 = vmatmul.mubr.bf16.gmra.mxu0 %v1570
    %v1920 = vpop.f32.mrf.mxu0
    %v1921 = vadd.f32 0.0, %v1920
    %v1922 = vpop.f32.mrf.mxu0
    %v1923 = vpop.f32.mrf.mxu0
    %v1924 = vadd.f32 0.0, %v1923
    %v1925 = vpop.f32.mrf.mxu0
    %1926 = vmatprep.mubr.bf16.mxu0 %v1619
    %1927 = vmatmul.mubr.bf16.gmra.mxu0 %v1571
    %v1928 = vpop.f32.mrf.mxu0
    %v1929 = vadd.f32 0.0, %v1928
    %v1930 = vpop.f32.mrf.mxu0
    %v1931 = vpop.f32.mrf.mxu0
    %v1932 = vadd.f32 0.0, %v1931
    %v1933 = vpop.f32.mrf.mxu0
    %1934 = vmatprep.mubr.bf16.mxu0 %v1620
    %1935 = vmatmul.mubr.bf16.gmra.mxu0 %v1572
    %v1936 = vpop.f32.mrf.mxu0
    %v1937 = vadd.f32 0.0, %v1936
    %v1938 = vpop.f32.mrf.mxu0
    %v1939 = vpop.f32.mrf.mxu0
    %v1940 = vadd.f32 0.0, %v1939
    %v1941 = vpop.f32.mrf.mxu0
    %1942 = vmatprep.mubr.bf16.mxu0 %v1621
    %1943 = vmatmul.mubr.bf16.gmra.mxu0 %v1573
    %v1944 = vpop.f32.mrf.mxu0
    %v1945 = vadd.f32 0.0, %v1944
    %v1946 = vpop.f32.mrf.mxu0
    %v1947 = vpop.f32.mrf.mxu0
    %v1948 = vadd.f32 0.0, %v1947
    %v1949 = vpop.f32.mrf.mxu0
    %1950 = vdwg.mxu0
    %1951 = vmatprep.subr.bf16.mxu0 0
    %1952 = vmatpush1.bf16.msra.mxu0 %v1829
    %1953 = vmatprep.subr.bf16.mxu0 0
    %1954 = vmatpush1.bf16.msra.mxu0 %v1828
    %1955 = vmatprep.subr.bf16.mxu0 0
    %1956 = vmatpush1.bf16.msra.mxu0 %v1827
    %1957 = vmatprep.subr.bf16.mxu0 0
    %1958 = vmatpush1.bf16.msra.mxu0 %v1826
    %1959 = vmatprep.subr.bf16.mxu0 0
    %1960 = vmatpush1.bf16.msra.mxu0 %v1825
    %1961 = vmatprep.subr.bf16.mxu0 0
    %1962 = vmatpush1.bf16.msra.mxu0 %v1824
    %1963 = vmatprep.subr.bf16.mxu0 0
    %1964 = vmatpush1.bf16.msra.mxu0 %v1823
    %1965 = vmatprep.subr.bf16.mxu0 0
    %1966 = vmatpush1.bf16.msra.mxu0 %v1822
    %1967 = vmatprep.subr.bf16.mxu0 0
    %1968 = vmatpush2.bf16.msra.mxu0 0
    %1969 = vmatprep.subr.bf16.mxu0 0
    %1970 = vmatpush2.bf16.msra.mxu0 0
    %1971 = vmatprep.subr.bf16.mxu0 0
    %1972 = vmatpush2.bf16.msra.mxu0 0
    %1973 = vmatprep.subr.bf16.mxu0 0
    %1974 = vmatpush2.bf16.msra.mxu0 0
    %1975 = vmatprep.subr.bf16.mxu0 0
    %1976 = vmatpush2.bf16.msra.mxu0 0
    %1977 = vmatprep.subr.bf16.mxu0 0
    %1978 = vmatpush2.bf16.msra.mxu0 0
    %1979 = vmatprep.subr.bf16.mxu0 0
    %1980 = vmatpush2.bf16.msra.mxu0 0
    %1981 = vmatprep.subr.bf16.mxu0 0
    %1982 = vmatpush2.bf16.msra.mxu0 0
    %1983 = vmatprep.mubr.bf16.mxu0 0
    %1984 = vmatmul.mubr.bf16.gmra.mxu0 %v1646
    %v1985 = vpop.f32.mrf.mxu0
    %v1986 = vadd.f32 %v1889, %v1985
    %v1987 = vpop.f32.mrf.mxu0
    %v1988 = vpop.f32.mrf.mxu0
    %v1989 = vadd.f32 %v1892, %v1988
    %v1990 = vpop.f32.mrf.mxu0
    %1991 = vmatprep.mubr.bf16.mxu0 0
    %1992 = vmatmul.mubr.bf16.gmra.mxu0 %v1647
    %v1993 = vpop.f32.mrf.mxu0
    %v1994 = vadd.f32 %v1897, %v1993
    %v1995 = vpop.f32.mrf.mxu0
    %v1996 = vpop.f32.mrf.mxu0
    %v1997 = vadd.f32 %v1900, %v1996
    %v1998 = vpop.f32.mrf.mxu0
    %1999 = vmatprep.mubr.bf16.mxu0 0
    %2000 = vmatmul.mubr.bf16.gmra.mxu0 %v1648
    %v2001 = vpop.f32.mrf.mxu0
    %v2002 = vadd.f32 %v1905, %v2001
    %v2003 = vpop.f32.mrf.mxu0
    %v2004 = vpop.f32.mrf.mxu0
    %v2005 = vadd.f32 %v1908, %v2004
    %v2006 = vpop.f32.mrf.mxu0
    %2007 = vmatprep.mubr.bf16.mxu0 0
    %2008 = vmatmul.mubr.bf16.gmra.mxu0 %v1649
    %v2009 = vpop.f32.mrf.mxu0
    %v2010 = vadd.f32 %v1913, %v2009
    %v2011 = vpop.f32.mrf.mxu0
    %v2012 = vpop.f32.mrf.mxu0
    %v2013 = vadd.f32 %v1916, %v2012
    %v2014 = vpop.f32.mrf.mxu0
    %2015 = vmatprep.mubr.bf16.mxu0 0
    %2016 = vmatmul.mubr.bf16.gmra.mxu0 %v1650
    %v2017 = vpop.f32.mrf.mxu0
    %v2018 = vadd.f32 %v1921, %v2017
    %v2019 = vpop.f32.mrf.mxu0
    %v2020 = vpop.f32.mrf.mxu0
    %v2021 = vadd.f32 %v1924, %v2020
    %v2022 = vpop.f32.mrf.mxu0
    %2023 = vmatprep.mubr.bf16.mxu0 0
    %2024 = vmatmul.mubr.bf16.gmra.mxu0 %v1651
    %v2025 = vpop.f32.mrf.mxu0
    %v2026 = vadd.f32 %v1929, %v2025
    %v2027 = vpop.f32.mrf.mxu0
    %v2028 = vpop.f32.mrf.mxu0
    %v2029 = vadd.f32 %v1932, %v2028
    %v2030 = vpop.f32.mrf.mxu0
    %2031 = vmatprep.mubr.bf16.mxu0 0
    %2032 = vmatmul.mubr.bf16.gmra.mxu0 %v1652
    %v2033 = vpop.f32.mrf.mxu0
    %v2034 = vadd.f32 %v1937, %v2033
    %v2035 = vpop.f32.mrf.mxu0
    %v2036 = vpop.f32.mrf.mxu0
    %v2037 = vadd.f32 %v1940, %v2036
    %v2038 = vpop.f32.mrf.mxu0
    %2039 = vmatprep.mubr.bf16.mxu0 0
    %2040 = vmatmul.mubr.bf16.gmra.mxu0 %v1653
    %v2041 = vpop.f32.mrf.mxu0
    %v2042 = vadd.f32 %v1945, %v2041
    %v2043 = vpop.f32.mrf.mxu0
    %v2044 = vpop.f32.mrf.mxu0
    %v2045 = vadd.f32 %v1948, %v2044
    %v2046 = vpop.f32.mrf.mxu0
    %2047 = vdwg.mxu0
    %v2096 = vunpack.c.l.b16 %v1102
    %v2097 = vunpack.c.l.b16 %v1103
    %v2098 = vunpack.c.l.b16 %v1104
    %v2099 = vunpack.c.l.b16 %v1105
    %v2100 = vunpack.c.l.b16 %v1106
    %v2101 = vunpack.c.l.b16 %v1107
    %v2102 = vunpack.c.l.b16 %v1108
    %v2103 = vunpack.c.l.b16 %v1109
    %v2104 = vunpack.c.l.b16 %v1110
    %v2105 = vunpack.c.l.b16 %v1111
    %v2106 = vunpack.c.l.b16 %v1112
    %v2107 = vunpack.c.l.b16 %v1113
    %v2108 = vunpack.c.l.b16 %v1114
    %v2109 = vunpack.c.l.b16 %v1115
    %v2110 = vunpack.c.l.b16 %v1116
    %v2111 = vunpack.c.l.b16 %v1117
    %v2112 = vunpack.c.l.b16 %v1118
    %v2113 = vunpack.c.l.b16 %v1119
    %v2114 = vunpack.c.l.b16 %v1120
    %v2115 = vunpack.c.l.b16 %v1121
    %v2116 = vunpack.c.l.b16 %v1122
    %v2117 = vunpack.c.l.b16 %v1123
    %v2118 = vunpack.c.l.b16 %v1124
    %v2119 = vunpack.c.l.b16 %v1125
    %v2120 = vunpack.c.l.b16 %v1126
    %v2121 = vunpack.c.l.b16 %v1127
    %v2122 = vunpack.c.l.b16 %v1128
    %v2123 = vunpack.c.l.b16 %v1129
    %v2124 = vunpack.c.l.b16 %v1130
    %v2125 = vunpack.c.l.b16 %v1131
    %v2126 = vunpack.c.l.b16 %v1132
    %v2127 = vunpack.c.l.b16 %v1133
    %v2128 = vunpack.c.l.b16 %v1134
    %v2129 = vunpack.c.l.b16 %v1135
    %v2130 = vunpack.c.l.b16 %v1136
    %v2131 = vunpack.c.l.b16 %v1137
    %v2132 = vunpack.c.l.b16 %v1138
    %v2133 = vunpack.c.l.b16 %v1139
    %v2134 = vunpack.c.l.b16 %v1140
    %v2135 = vunpack.c.l.b16 %v1141
    %v2136 = vunpack.c.l.b16 %v1142
    %v2137 = vunpack.c.l.b16 %v1143
    %v2138 = vunpack.c.l.b16 %v1144
    %v2139 = vunpack.c.l.b16 %v1145
    %v2140 = vunpack.c.l.b16 %v1146
    %v2141 = vunpack.c.l.b16 %v1147
    %v2142 = vunpack.c.l.b16 %v1148
    %v2143 = vunpack.c.l.b16 %v1149
    %v2144 = vpack.c.b16 %v2097, %v2096
    %v2145 = vpack.c.b16 %v2099, %v2098
    %v2146 = vpack.c.b16 %v2101, %v2100
    %v2147 = vpack.c.b16 %v2103, %v2102
    %v2148 = vpack.c.b16 %v2105, %v2104
    %v2149 = vpack.c.b16 %v2107, %v2106
    %v2150 = vpack.c.b16 %v2109, %v2108
    %v2151 = vpack.c.b16 %v2111, %v2110
    %v2152 = vpack.c.b16 %v2113, %v2112
    %v2153 = vpack.c.b16 %v2115, %v2114
    %v2154 = vpack.c.b16 %v2117, %v2116
    %v2155 = vpack.c.b16 %v2119, %v2118
    %v2156 = vpack.c.b16 %v2121, %v2120
    %v2157 = vpack.c.b16 %v2123, %v2122
    %v2158 = vpack.c.b16 %v2125, %v2124
    %v2159 = vpack.c.b16 %v2127, %v2126
    %v2160 = vpack.c.b16 %v2129, %v2128
    %v2161 = vpack.c.b16 %v2131, %v2130
    %v2162 = vpack.c.b16 %v2133, %v2132
    %v2163 = vpack.c.b16 %v2135, %v2134
    %v2164 = vpack.c.b16 %v2137, %v2136
    %v2165 = vpack.c.b16 %v2139, %v2138
    %v2166 = vpack.c.b16 %v2141, %v2140
    %v2167 = vpack.c.b16 %v2143, %v2142
    %2192 = vmatprep.subr.bf16.mxu0 0
    %2193 = vmatpush1.bf16.msra.mxu0 %v2151
    %2194 = vmatprep.subr.bf16.mxu0 0
    %2195 = vmatpush1.bf16.msra.mxu0 %v2150
    %2196 = vmatprep.subr.bf16.mxu0 0
    %2197 = vmatpush1.bf16.msra.mxu0 %v2149
    %2198 = vmatprep.subr.bf16.mxu0 0
    %2199 = vmatpush1.bf16.msra.mxu0 %v2148
    %2200 = vmatprep.subr.bf16.mxu0 0
    %2201 = vmatpush1.bf16.msra.mxu0 %v2147
    %2202 = vmatprep.subr.bf16.mxu0 0
    %2203 = vmatpush1.bf16.msra.mxu0 %v2146
    %2204 = vmatprep.subr.bf16.mxu0 0
    %2205 = vmatpush1.bf16.msra.mxu0 %v2145
    %2206 = vmatprep.subr.bf16.mxu0 0
    %2207 = vmatpush1.bf16.msra.mxu0 %v2144
    %2208 = vmatprep.subr.bf16.mxu0 0
    %2209 = vmatpush2.bf16.msra.mxu0 %v2159
    %2210 = vmatprep.subr.bf16.mxu0 0
    %2211 = vmatpush2.bf16.msra.mxu0 %v2158
    %2212 = vmatprep.subr.bf16.mxu0 0
    %2213 = vmatpush2.bf16.msra.mxu0 %v2157
    %2214 = vmatprep.subr.bf16.mxu0 0
    %2215 = vmatpush2.bf16.msra.mxu0 %v2156
    %2216 = vmatprep.subr.bf16.mxu0 0
    %2217 = vmatpush2.bf16.msra.mxu0 %v2155
    %2218 = vmatprep.subr.bf16.mxu0 0
    %2219 = vmatpush2.bf16.msra.mxu0 %v2154
    %2220 = vmatprep.subr.bf16.mxu0 0
    %2221 = vmatpush2.bf16.msra.mxu0 %v2153
    %2222 = vmatprep.subr.bf16.mxu0 0
    %2223 = vmatpush2.bf16.msra.mxu0 %v2152
    %2224 = vmatprep.mubr.bf16.mxu0 %v1054
    %2225 = vmatmul.mubr.bf16.gmra.mxu0 %v1006
    %v2226 = vpop.f32.mrf.mxu0
    %v2227 = vadd.f32 %v1986, %v2226
    %v2228 = vpop.f32.mrf.mxu0
    %v2229 = vpop.f32.mrf.mxu0
    %v2230 = vadd.f32 %v1989, %v2229
    %v2231 = vpop.f32.mrf.mxu0
    %2232 = vmatprep.mubr.bf16.mxu0 %v1055
    %2233 = vmatmul.mubr.bf16.gmra.mxu0 %v1007
    %v2234 = vpop.f32.mrf.mxu0
    %v2235 = vadd.f32 %v1994, %v2234
    %v2236 = vpop.f32.mrf.mxu0
    %v2237 = vpop.f32.mrf.mxu0
    %v2238 = vadd.f32 %v1997, %v2237
    %v2239 = vpop.f32.mrf.mxu0
    %2240 = vmatprep.mubr.bf16.mxu0 %v1056
    %2241 = vmatmul.mubr.bf16.gmra.mxu0 %v1008
    %v2242 = vpop.f32.mrf.mxu0
    %v2243 = vadd.f32 %v2002, %v2242
    %v2244 = vpop.f32.mrf.mxu0
    %v2245 = vpop.f32.mrf.mxu0
    %v2246 = vadd.f32 %v2005, %v2245
    %v2247 = vpop.f32.mrf.mxu0
    %2248 = vmatprep.mubr.bf16.mxu0 %v1057
    %2249 = vmatmul.mubr.bf16.gmra.mxu0 %v1009
    %v2250 = vpop.f32.mrf.mxu0
    %v2251 = vadd.f32 %v2010, %v2250
    %v2252 = vpop.f32.mrf.mxu0
    %v2253 = vpop.f32.mrf.mxu0
    %v2254 = vadd.f32 %v2013, %v2253
    %v2255 = vpop.f32.mrf.mxu0
    %2256 = vmatprep.mubr.bf16.mxu0 %v1058
    %2257 = vmatmul.mubr.bf16.gmra.mxu0 %v1010
    %v2258 = vpop.f32.mrf.mxu0
    %v2259 = vadd.f32 %v2018, %v2258
    %v2260 = vpop.f32.mrf.mxu0
    %v2261 = vpop.f32.mrf.mxu0
    %v2262 = vadd.f32 %v2021, %v2261
    %v2263 = vpop.f32.mrf.mxu0
    %2264 = vmatprep.mubr.bf16.mxu0 %v1059
    %2265 = vmatmul.mubr.bf16.gmra.mxu0 %v1011
    %v2266 = vpop.f32.mrf.mxu0
    %v2267 = vadd.f32 %v2026, %v2266
    %v2268 = vpop.f32.mrf.mxu0
    %v2269 = vpop.f32.mrf.mxu0
    %v2270 = vadd.f32 %v2029, %v2269
    %v2271 = vpop.f32.mrf.mxu0
    %2272 = vmatprep.mubr.bf16.mxu0 %v1060
    %2273 = vmatmul.mubr.bf16.gmra.mxu0 %v1012
    %v2274 = vpop.f32.mrf.mxu0
    %v2275 = vadd.f32 %v2034, %v2274
    %v2276 = vpop.f32.mrf.mxu0
    %v2277 = vpop.f32.mrf.mxu0
    %v2278 = vadd.f32 %v2037, %v2277
    %v2279 = vpop.f32.mrf.mxu0
    %2280 = vmatprep.mubr.bf16.mxu0 %v1061
    %2281 = vmatmul.mubr.bf16.gmra.mxu0 %v1013
    %v2282 = vpop.f32.mrf.mxu0
    %v2283 = vadd.f32 %v2042, %v2282
    %v2284 = vpop.f32.mrf.mxu0
    %v2285 = vpop.f32.mrf.mxu0
    %v2286 = vadd.f32 %v2045, %v2285
    %v2287 = vpop.f32.mrf.mxu0
    %2288 = vdwg.mxu0
    %2289 = vmatprep.subr.bf16.mxu0 0
    %2290 = vmatpush1.bf16.msra.mxu0 %v2167
    %2291 = vmatprep.subr.bf16.mxu0 0
    %2292 = vmatpush1.bf16.msra.mxu0 %v2166
    %2293 = vmatprep.subr.bf16.mxu0 0
    %2294 = vmatpush1.bf16.msra.mxu0 %v2165
    %2295 = vmatprep.subr.bf16.mxu0 0
    %2296 = vmatpush1.bf16.msra.mxu0 %v2164
    %2297 = vmatprep.subr.bf16.mxu0 0
    %2298 = vmatpush1.bf16.msra.mxu0 %v2163
    %2299 = vmatprep.subr.bf16.mxu0 0
    %2300 = vmatpush1.bf16.msra.mxu0 %v2162
    %2301 = vmatprep.subr.bf16.mxu0 0
    %2302 = vmatpush1.bf16.msra.mxu0 %v2161
    %2303 = vmatprep.subr.bf16.mxu0 0
    %2304 = vmatpush1.bf16.msra.mxu0 %v2160
    %2305 = vmatprep.subr.bf16.mxu0 0
    %2306 = vmatpush2.bf16.msra.mxu0 0
    %2307 = vmatprep.subr.bf16.mxu0 0
    %2308 = vmatpush2.bf16.msra.mxu0 0
    %2309 = vmatprep.subr.bf16.mxu0 0
    %2310 = vmatpush2.bf16.msra.mxu0 0
    %2311 = vmatprep.subr.bf16.mxu0 0
    %2312 = vmatpush2.bf16.msra.mxu0 0
    %2313 = vmatprep.subr.bf16.mxu0 0
    %2314 = vmatpush2.bf16.msra.mxu0 0
    %2315 = vmatprep.subr.bf16.mxu0 0
    %2316 = vmatpush2.bf16.msra.mxu0 0
    %2317 = vmatprep.subr.bf16.mxu0 0
    %2318 = vmatpush2.bf16.msra.mxu0 0
    %2319 = vmatprep.subr.bf16.mxu0 0
    %2320 = vmatpush2.bf16.msra.mxu0 0
    %2321 = vmatprep.mubr.bf16.mxu0 0
    %2322 = vmatmul.mubr.bf16.gmra.mxu0 %v1086
    %v2323 = vpop.f32.mrf.mxu0
    %v2324 = vadd.f32 %v2227, %v2323
    %v2325 = vpop.f32.mrf.mxu0
    %v2326 = vpop.f32.mrf.mxu0
    %v2327 = vadd.f32 %v2230, %v2326
    %v2328 = vpop.f32.mrf.mxu0
    %2329 = vmatprep.mubr.bf16.mxu0 0
    %2330 = vmatmul.mubr.bf16.gmra.mxu0 %v1087
    %v2331 = vpop.f32.mrf.mxu0
    %v2332 = vadd.f32 %v2235, %v2331
    %v2333 = vpop.f32.mrf.mxu0
    %v2334 = vpop.f32.mrf.mxu0
    %v2335 = vadd.f32 %v2238, %v2334
    %v2336 = vpop.f32.mrf.mxu0
    %2337 = vmatprep.mubr.bf16.mxu0 0
    %2338 = vmatmul.mubr.bf16.gmra.mxu0 %v1088
    %v2339 = vpop.f32.mrf.mxu0
    %v2340 = vadd.f32 %v2243, %v2339
    %v2341 = vpop.f32.mrf.mxu0
    %v2342 = vpop.f32.mrf.mxu0
    %v2343 = vadd.f32 %v2246, %v2342
    %v2344 = vpop.f32.mrf.mxu0
    %2345 = vmatprep.mubr.bf16.mxu0 0
    %2346 = vmatmul.mubr.bf16.gmra.mxu0 %v1089
    %v2347 = vpop.f32.mrf.mxu0
    %v2348 = vadd.f32 %v2251, %v2347
    %v2349 = vpop.f32.mrf.mxu0
    %v2350 = vpop.f32.mrf.mxu0
    %v2351 = vadd.f32 %v2254, %v2350
    %v2352 = vpop.f32.mrf.mxu0
    %2353 = vmatprep.mubr.bf16.mxu0 0
    %2354 = vmatmul.mubr.bf16.gmra.mxu0 %v1090
    %v2355 = vpop.f32.mrf.mxu0
    %v2356 = vadd.f32 %v2259, %v2355
    %v2357 = vpop.f32.mrf.mxu0
    %v2358 = vpop.f32.mrf.mxu0
    %v2359 = vadd.f32 %v2262, %v2358
    %v2360 = vpop.f32.mrf.mxu0
    %2361 = vmatprep.mubr.bf16.mxu0 0
    %2362 = vmatmul.mubr.bf16.gmra.mxu0 %v1091
    %v2363 = vpop.f32.mrf.mxu0
    %v2364 = vadd.f32 %v2267, %v2363
    %v2365 = vpop.f32.mrf.mxu0
    %v2366 = vpop.f32.mrf.mxu0
    %v2367 = vadd.f32 %v2270, %v2366
    %v2368 = vpop.f32.mrf.mxu0
    %2369 = vmatprep.mubr.bf16.mxu0 0
    %2370 = vmatmul.mubr.bf16.gmra.mxu0 %v1092
    %v2371 = vpop.f32.mrf.mxu0
    %v2372 = vadd.f32 %v2275, %v2371
    %v2373 = vpop.f32.mrf.mxu0
    %v2374 = vpop.f32.mrf.mxu0
    %v2375 = vadd.f32 %v2278, %v2374
    %v2376 = vpop.f32.mrf.mxu0
    %2377 = vmatprep.mubr.bf16.mxu0 0
    %2378 = vmatmul.mubr.bf16.gmra.mxu0 %v1093
    %v2379 = vpop.f32.mrf.mxu0
    %v2380 = vadd.f32 %v2283, %v2379
    %v2381 = vpop.f32.mrf.mxu0
    %v2382 = vpop.f32.mrf.mxu0
    %v2383 = vadd.f32 %v2286, %v2382
    %v2384 = vpop.f32.mrf.mxu0
    %2385 = vdwg.mxu0
    %s2386 = scalar_lea.vmem [#allocation2], 32
    %v2387 = vld [vmem:[%s2386 + $0x4] sm:$0x8]
    %v2388 = vld [vmem:[%s2386 + $0x8] sm:$0xf]
    %v2389 = vld [vmem:[%s2386 + $0x14] sm:$0x8]
    %v2390 = vld [vmem:[%s2386 + $0x18] sm:$0xf]
    %v2391 = vld [vmem:[%s2386 + $0x24] sm:$0x8]
    %v2392 = vld [vmem:[%s2386 + $0x28] sm:$0xf]
    %v2393 = vld [vmem:[%s2386 + $0x34] sm:$0x8]
    %v2394 = vld [vmem:[%s2386 + $0x38] sm:$0xf]
    %v2395 = vld [vmem:[%s2386 + $0x44] sm:$0x8]
    %v2396 = vld [vmem:[%s2386 + $0x48] sm:$0xf]
    %v2397 = vld [vmem:[%s2386 + $0x54] sm:$0x8]
    %v2398 = vld [vmem:[%s2386 + $0x58] sm:$0xf]
    %v2399 = vld [vmem:[%s2386 + $0x64] sm:$0x8]
    %v2400 = vld [vmem:[%s2386 + $0x68] sm:$0xf]
    %v2401 = vld [vmem:[%s2386 + $0x74] sm:$0x8]
    %v2402 = vld [vmem:[%s2386 + $0x78] sm:$0xf]
    %v2403 = vld [vmem:[%s2386 + $0xa4] sm:$0x8]
    %v2404 = vld [vmem:[%s2386 + $0xa8] sm:$0xf]
    %v2405 = vld [vmem:[%s2386 + $0xb4] sm:$0x8]
    %v2406 = vld [vmem:[%s2386 + $0xb8] sm:$0xf]
    %v2407 = vld [vmem:[%s2386 + $0xc4] sm:$0x8]
    %v2408 = vld [vmem:[%s2386 + $0xc8] sm:$0xf]
    %v2409 = vld [vmem:[%s2386 + $0xd4] sm:$0x8]
    %v2410 = vld [vmem:[%s2386 + $0xd8] sm:$0xf]
    %v2411 = vld [vmem:[%s2386 + $0xe4] sm:$0x8]
    %v2412 = vld [vmem:[%s2386 + $0xe8] sm:$0xf]
    %v2413 = vld [vmem:[%s2386 + $0xf4] sm:$0x8]
    %v2414 = vld [vmem:[%s2386 + $0xf8] sm:$0xf]
    %v2415 = vld [vmem:[%s2386 + $0x104] sm:$0x8]
    %v2416 = vld [vmem:[%s2386 + $0x108] sm:$0xf]
    %v2417 = vld [vmem:[%s2386 + $0x114] sm:$0x8]
    %v2418 = vld [vmem:[%s2386 + $0x118] sm:$0xf]
    %v2420 = vshrl.u32 %v2387, 16
    %v2422 = vrot.slane %v2420, 7
    %v2423 = vrot.slane %v2422, 4
    %v2425 = vshrl.u32 %v2388, 16
    %v2427 = vrot.slane %v2425, 7
    %v2428 = vshll.u32 %v2388, 16
    %v2430 = vor.u32 %v2427, %v2428
    %v2431 = vsel %vm618, %v2423, %v2430
    %v2433 = vshrl.u32 %v2389, 16
    %v2435 = vrot.slane %v2433, 7
    %v2436 = vrot.slane %v2435, 4
    %v2438 = vshrl.u32 %v2390, 16
    %v2440 = vrot.slane %v2438, 7
    %v2441 = vshll.u32 %v2390, 16
    %v2443 = vor.u32 %v2440, %v2441
    %v2444 = vsel %vm618, %v2436, %v2443
    %v2446 = vshrl.u32 %v2391, 16
    %v2448 = vrot.slane %v2446, 7
    %v2449 = vrot.slane %v2448, 4
    %v2451 = vshrl.u32 %v2392, 16
    %v2453 = vrot.slane %v2451, 7
    %v2454 = vshll.u32 %v2392, 16
    %v2456 = vor.u32 %v2453, %v2454
    %v2457 = vsel %vm618, %v2449, %v2456
    %v2459 = vshrl.u32 %v2393, 16
    %v2461 = vrot.slane %v2459, 7
    %v2462 = vrot.slane %v2461, 4
    %v2464 = vshrl.u32 %v2394, 16
    %v2466 = vrot.slane %v2464, 7
    %v2467 = vshll.u32 %v2394, 16
    %v2469 = vor.u32 %v2466, %v2467
    %v2470 = vsel %vm618, %v2462, %v2469
    %v2472 = vshrl.u32 %v2395, 16
    %v2474 = vrot.slane %v2472, 7
    %v2475 = vrot.slane %v2474, 4
    %v2477 = vshrl.u32 %v2396, 16
    %v2479 = vrot.slane %v2477, 7
    %v2480 = vshll.u32 %v2396, 16
    %v2482 = vor.u32 %v2479, %v2480
    %v2483 = vsel %vm618, %v2475, %v2482
    %v2485 = vshrl.u32 %v2397, 16
    %v2487 = vrot.slane %v2485, 7
    %v2488 = vrot.slane %v2487, 4
    %v2490 = vshrl.u32 %v2398, 16
    %v2492 = vrot.slane %v2490, 7
    %v2493 = vshll.u32 %v2398, 16
    %v2495 = vor.u32 %v2492, %v2493
    %v2496 = vsel %vm618, %v2488, %v2495
    %v2498 = vshrl.u32 %v2399, 16
    %v2500 = vrot.slane %v2498, 7
    %v2501 = vrot.slane %v2500, 4
    %v2503 = vshrl.u32 %v2400, 16
    %v2505 = vrot.slane %v2503, 7
    %v2506 = vshll.u32 %v2400, 16
    %v2508 = vor.u32 %v2505, %v2506
    %v2509 = vsel %vm618, %v2501, %v2508
    %v2511 = vshrl.u32 %v2401, 16
    %v2513 = vrot.slane %v2511, 7
    %v2514 = vrot.slane %v2513, 4
    %v2516 = vshrl.u32 %v2402, 16
    %v2518 = vrot.slane %v2516, 7
    %v2519 = vshll.u32 %v2402, 16
    %v2521 = vor.u32 %v2518, %v2519
    %v2522 = vsel %vm618, %v2514, %v2521
    %v2524 = vshrl.u32 %v2403, 16
    %v2526 = vrot.slane %v2524, 7
    %v2527 = vrot.slane %v2526, 4
    %v2529 = vshrl.u32 %v2404, 16
    %v2531 = vrot.slane %v2529, 7
    %v2532 = vshll.u32 %v2404, 16
    %v2534 = vor.u32 %v2531, %v2532
    %v2535 = vsel %vm618, %v2527, %v2534
    %v2537 = vshrl.u32 %v2405, 16
    %v2539 = vrot.slane %v2537, 7
    %v2540 = vrot.slane %v2539, 4
    %v2542 = vshrl.u32 %v2406, 16
    %v2544 = vrot.slane %v2542, 7
    %v2545 = vshll.u32 %v2406, 16
    %v2547 = vor.u32 %v2544, %v2545
    %v2548 = vsel %vm618, %v2540, %v2547
    %v2550 = vshrl.u32 %v2407, 16
    %v2552 = vrot.slane %v2550, 7
    %v2553 = vrot.slane %v2552, 4
    %v2555 = vshrl.u32 %v2408, 16
    %v2557 = vrot.slane %v2555, 7
    %v2558 = vshll.u32 %v2408, 16
    %v2560 = vor.u32 %v2557, %v2558
    %v2561 = vsel %vm618, %v2553, %v2560
    %v2563 = vshrl.u32 %v2409, 16
    %v2565 = vrot.slane %v2563, 7
    %v2566 = vrot.slane %v2565, 4
    %v2568 = vshrl.u32 %v2410, 16
    %v2570 = vrot.slane %v2568, 7
    %v2571 = vshll.u32 %v2410, 16
    %v2573 = vor.u32 %v2570, %v2571
    %v2574 = vsel %vm618, %v2566, %v2573
    %v2576 = vshrl.u32 %v2411, 16
    %v2578 = vrot.slane %v2576, 7
    %v2579 = vrot.slane %v2578, 4
    %v2581 = vshrl.u32 %v2412, 16
    %v2583 = vrot.slane %v2581, 7
    %v2584 = vshll.u32 %v2412, 16
    %v2586 = vor.u32 %v2583, %v2584
    %v2587 = vsel %vm618, %v2579, %v2586
    %v2589 = vshrl.u32 %v2413, 16
    %v2591 = vrot.slane %v2589, 7
    %v2592 = vrot.slane %v2591, 4
    %v2594 = vshrl.u32 %v2414, 16
    %v2596 = vrot.slane %v2594, 7
    %v2597 = vshll.u32 %v2414, 16
    %v2599 = vor.u32 %v2596, %v2597
    %v2600 = vsel %vm618, %v2592, %v2599
    %v2602 = vshrl.u32 %v2415, 16
    %v2604 = vrot.slane %v2602, 7
    %v2605 = vrot.slane %v2604, 4
    %v2607 = vshrl.u32 %v2416, 16
    %v2609 = vrot.slane %v2607, 7
    %v2610 = vshll.u32 %v2416, 16
    %v2612 = vor.u32 %v2609, %v2610
    %v2613 = vsel %vm618, %v2605, %v2612
    %v2615 = vshrl.u32 %v2417, 16
    %v2617 = vrot.slane %v2615, 7
    %v2618 = vrot.slane %v2617, 4
    %v2620 = vshrl.u32 %v2418, 16
    %v2622 = vrot.slane %v2620, 7
    %v2623 = vshll.u32 %v2418, 16
    %v2625 = vor.u32 %v2622, %v2623
    %v2626 = vsel %vm618, %v2618, %v2625
    %v2627 = vld [vmem:[%s2386 + $0xc] sm:$0x1]
    %v2628 = vld [vmem:[%s2386 + $0x1c] sm:$0x1]
    %v2629 = vld [vmem:[%s2386 + $0x2c] sm:$0x1]
    %v2630 = vld [vmem:[%s2386 + $0x3c] sm:$0x1]
    %v2631 = vld [vmem:[%s2386 + $0x4c] sm:$0x1]
    %v2632 = vld [vmem:[%s2386 + $0x5c] sm:$0x1]
    %v2633 = vld [vmem:[%s2386 + $0x6c] sm:$0x1]
    %v2634 = vld [vmem:[%s2386 + $0x7c] sm:$0x1]
    %v2635 = vld [vmem:[%s2386 + $0xac] sm:$0x1]
    %v2636 = vld [vmem:[%s2386 + $0xbc] sm:$0x1]
    %v2637 = vld [vmem:[%s2386 + $0xcc] sm:$0x1]
    %v2638 = vld [vmem:[%s2386 + $0xdc] sm:$0x1]
    %v2639 = vld [vmem:[%s2386 + $0xec] sm:$0x1]
    %v2640 = vld [vmem:[%s2386 + $0xfc] sm:$0x1]
    %v2641 = vld [vmem:[%s2386 + $0x10c] sm:$0x1]
    %v2642 = vld [vmem:[%s2386 + $0x11c] sm:$0x1]
    %v2643 = vrot.slane %v2425, 4
    %v2644 = vrot.slane %v2428, 5
    %v2645 = vor.u32 %v2643, %v2644
    %v2646 = vrot.slane %v2645, 4
    %v2648 = vshll.u32 %v2627, 16
    %v2650 = vrot.slane %v2648, 5
    %v2651 = vsel %vm845, %v2646, %v2650
    %v2652 = vrot.slane %v2438, 4
    %v2653 = vrot.slane %v2441, 5
    %v2654 = vor.u32 %v2652, %v2653
    %v2655 = vrot.slane %v2654, 4
    %v2657 = vshll.u32 %v2628, 16
    %v2659 = vrot.slane %v2657, 5
    %v2660 = vsel %vm845, %v2655, %v2659
    %v2661 = vrot.slane %v2451, 4
    %v2662 = vrot.slane %v2454, 5
    %v2663 = vor.u32 %v2661, %v2662
    %v2664 = vrot.slane %v2663, 4
    %v2666 = vshll.u32 %v2629, 16
    %v2668 = vrot.slane %v2666, 5
    %v2669 = vsel %vm845, %v2664, %v2668
    %v2670 = vrot.slane %v2464, 4
    %v2671 = vrot.slane %v2467, 5
    %v2672 = vor.u32 %v2670, %v2671
    %v2673 = vrot.slane %v2672, 4
    %v2675 = vshll.u32 %v2630, 16
    %v2677 = vrot.slane %v2675, 5
    %v2678 = vsel %vm845, %v2673, %v2677
    %v2679 = vrot.slane %v2477, 4
    %v2680 = vrot.slane %v2480, 5
    %v2681 = vor.u32 %v2679, %v2680
    %v2682 = vrot.slane %v2681, 4
    %v2684 = vshll.u32 %v2631, 16
    %v2686 = vrot.slane %v2684, 5
    %v2687 = vsel %vm845, %v2682, %v2686
    %v2688 = vrot.slane %v2490, 4
    %v2689 = vrot.slane %v2493, 5
    %v2690 = vor.u32 %v2688, %v2689
    %v2691 = vrot.slane %v2690, 4
    %v2693 = vshll.u32 %v2632, 16
    %v2695 = vrot.slane %v2693, 5
    %v2696 = vsel %vm845, %v2691, %v2695
    %v2697 = vrot.slane %v2503, 4
    %v2698 = vrot.slane %v2506, 5
    %v2699 = vor.u32 %v2697, %v2698
    %v2700 = vrot.slane %v2699, 4
    %v2702 = vshll.u32 %v2633, 16
    %v2704 = vrot.slane %v2702, 5
    %v2705 = vsel %vm845, %v2700, %v2704
    %v2706 = vrot.slane %v2516, 4
    %v2707 = vrot.slane %v2519, 5
    %v2708 = vor.u32 %v2706, %v2707
    %v2709 = vrot.slane %v2708, 4
    %v2711 = vshll.u32 %v2634, 16
    %v2713 = vrot.slane %v2711, 5
    %v2714 = vsel %vm845, %v2709, %v2713
    %v2715 = vrot.slane %v2529, 4
    %v2716 = vrot.slane %v2532, 5
    %v2717 = vor.u32 %v2715, %v2716
    %v2718 = vrot.slane %v2717, 4
    %v2720 = vshll.u32 %v2635, 16
    %v2722 = vrot.slane %v2720, 5
    %v2723 = vsel %vm845, %v2718, %v2722
    %v2724 = vrot.slane %v2542, 4
    %v2725 = vrot.slane %v2545, 5
    %v2726 = vor.u32 %v2724, %v2725
    %v2727 = vrot.slane %v2726, 4
    %v2729 = vshll.u32 %v2636, 16
    %v2731 = vrot.slane %v2729, 5
    %v2732 = vsel %vm845, %v2727, %v2731
    %v2733 = vrot.slane %v2555, 4
    %v2734 = vrot.slane %v2558, 5
    %v2735 = vor.u32 %v2733, %v2734
    %v2736 = vrot.slane %v2735, 4
    %v2738 = vshll.u32 %v2637, 16
    %v2740 = vrot.slane %v2738, 5
    %v2741 = vsel %vm845, %v2736, %v2740
    %v2742 = vrot.slane %v2568, 4
    %v2743 = vrot.slane %v2571, 5
    %v2744 = vor.u32 %v2742, %v2743
    %v2745 = vrot.slane %v2744, 4
    %v2747 = vshll.u32 %v2638, 16
    %v2749 = vrot.slane %v2747, 5
    %v2750 = vsel %vm845, %v2745, %v2749
    %v2751 = vrot.slane %v2581, 4
    %v2752 = vrot.slane %v2584, 5
    %v2753 = vor.u32 %v2751, %v2752
    %v2754 = vrot.slane %v2753, 4
    %v2756 = vshll.u32 %v2639, 16
    %v2758 = vrot.slane %v2756, 5
    %v2759 = vsel %vm845, %v2754, %v2758
    %v2760 = vrot.slane %v2594, 4
    %v2761 = vrot.slane %v2597, 5
    %v2762 = vor.u32 %v2760, %v2761
    %v2763 = vrot.slane %v2762, 4
    %v2765 = vshll.u32 %v2640, 16
    %v2767 = vrot.slane %v2765, 5
    %v2768 = vsel %vm845, %v2763, %v2767
    %v2769 = vrot.slane %v2607, 4
    %v2770 = vrot.slane %v2610, 5
    %v2771 = vor.u32 %v2769, %v2770
    %v2772 = vrot.slane %v2771, 4
    %v2774 = vshll.u32 %v2641, 16
    %v2776 = vrot.slane %v2774, 5
    %v2777 = vsel %vm845, %v2772, %v2776
    %v2778 = vrot.slane %v2620, 4
    %v2779 = vrot.slane %v2623, 5
    %v2780 = vor.u32 %v2778, %v2779
    %v2781 = vrot.slane %v2780, 4
    %v2783 = vshll.u32 %v2642, 16
    %v2785 = vrot.slane %v2783, 5
    %v2786 = vsel %vm845, %v2781, %v2785
    %v2787 = vunpack.c.l.b16 %v2431
    %v2788 = vunpack.c.l.b16 %v2444
    %v2789 = vunpack.c.l.b16 %v2457
    %v2790 = vunpack.c.l.b16 %v2470
    %v2791 = vunpack.c.l.b16 %v2483
    %v2792 = vunpack.c.l.b16 %v2496
    %v2793 = vunpack.c.l.b16 %v2509
    %v2794 = vunpack.c.l.b16 %v2522
    %v2795 = vunpack.c.l.b16 %v2535
    %v2796 = vunpack.c.l.b16 %v2548
    %v2797 = vunpack.c.l.b16 %v2561
    %v2798 = vunpack.c.l.b16 %v2574
    %v2799 = vunpack.c.l.b16 %v2587
    %v2800 = vunpack.c.l.b16 %v2600
    %v2801 = vunpack.c.l.b16 %v2613
    %v2802 = vunpack.c.l.b16 %v2626
    %v2803 = vpack.c.b16 %v2788, %v2787
    %v2804 = vpack.c.b16 %v2790, %v2789
    %v2805 = vpack.c.b16 %v2792, %v2791
    %v2806 = vpack.c.b16 %v2794, %v2793
    %v2807 = vpack.c.b16 %v2796, %v2795
    %v2808 = vpack.c.b16 %v2798, %v2797
    %v2809 = vpack.c.b16 %v2800, %v2799
    %v2810 = vpack.c.b16 %v2802, %v2801
    %v2835 = vunpack.c.l.b16 %v2388
    %v2836 = vunpack.c.l.b16 %v2390
    %v2837 = vunpack.c.l.b16 %v2392
    %v2838 = vunpack.c.l.b16 %v2394
    %v2839 = vunpack.c.l.b16 %v2396
    %v2840 = vunpack.c.l.b16 %v2398
    %v2841 = vunpack.c.l.b16 %v2400
    %v2842 = vunpack.c.l.b16 %v2402
    %v2843 = vunpack.c.l.b16 %v2404
    %v2844 = vunpack.c.l.b16 %v2406
    %v2845 = vunpack.c.l.b16 %v2408
    %v2846 = vunpack.c.l.b16 %v2410
    %v2847 = vunpack.c.l.b16 %v2412
    %v2848 = vunpack.c.l.b16 %v2414
    %v2849 = vunpack.c.l.b16 %v2416
    %v2850 = vunpack.c.l.b16 %v2418
    %v2851 = vpack.c.b16 %v2836, %v2835
    %v2852 = vpack.c.b16 %v2838, %v2837
    %v2853 = vpack.c.b16 %v2840, %v2839
    %v2854 = vpack.c.b16 %v2842, %v2841
    %v2855 = vpack.c.b16 %v2844, %v2843
    %v2856 = vpack.c.b16 %v2846, %v2845
    %v2857 = vpack.c.b16 %v2848, %v2847
    %v2858 = vpack.c.b16 %v2850, %v2849
    %v2867 = vunpack.c.l.b16 %v2651
    %v2868 = vunpack.c.l.b16 %v2660
    %v2869 = vunpack.c.l.b16 %v2669
    %v2870 = vunpack.c.l.b16 %v2678
    %v2871 = vunpack.c.l.b16 %v2687
    %v2872 = vunpack.c.l.b16 %v2696
    %v2873 = vunpack.c.l.b16 %v2705
    %v2874 = vunpack.c.l.b16 %v2714
    %v2875 = vunpack.c.l.b16 %v2723
    %v2876 = vunpack.c.l.b16 %v2732
    %v2877 = vunpack.c.l.b16 %v2741
    %v2878 = vunpack.c.l.b16 %v2750
    %v2879 = vunpack.c.l.b16 %v2759
    %v2880 = vunpack.c.l.b16 %v2768
    %v2881 = vunpack.c.l.b16 %v2777
    %v2882 = vunpack.c.l.b16 %v2786
    %v2883 = vpack.c.b16 %v2868, %v2867
    %v2884 = vpack.c.b16 %v2870, %v2869
    %v2885 = vpack.c.b16 %v2872, %v2871
    %v2886 = vpack.c.b16 %v2874, %v2873
    %v2887 = vpack.c.b16 %v2876, %v2875
    %v2888 = vpack.c.b16 %v2878, %v2877
    %v2889 = vpack.c.b16 %v2880, %v2879
    %v2890 = vpack.c.b16 %v2882, %v2881
    %v2899 = vld [vmem:[#allocation3 + $0x180] sm:$0xf]
    %v2900 = vld [vmem:[#allocation3 + $0x184] sm:$0xf]
    %v2901 = vld [vmem:[#allocation3 + $0x188] sm:$0xf]
    %v2902 = vld [vmem:[#allocation3 + $0x18c] sm:$0xf]
    %v2903 = vld [vmem:[#allocation3 + $0x190] sm:$0xf]
    %v2904 = vld [vmem:[#allocation3 + $0x194] sm:$0xf]
    %v2905 = vld [vmem:[#allocation3 + $0x198] sm:$0xf]
    %v2906 = vld [vmem:[#allocation3 + $0x19c] sm:$0xf]
    %v2907 = vld [vmem:[#allocation3 + $0x1a0] sm:$0xf]
    %v2908 = vld [vmem:[#allocation3 + $0x1a4] sm:$0xf]
    %v2909 = vld [vmem:[#allocation3 + $0x1a8] sm:$0xf]
    %v2910 = vld [vmem:[#allocation3 + $0x1ac] sm:$0xf]
    %v2911 = vld [vmem:[#allocation3 + $0x1b0] sm:$0xf]
    %v2912 = vld [vmem:[#allocation3 + $0x1b4] sm:$0xf]
    %v2913 = vld [vmem:[#allocation3 + $0x1b8] sm:$0xf]
    %v2914 = vld [vmem:[#allocation3 + $0x1bc] sm:$0xf]
    %v2915 = vld [vmem:[#allocation3 + $0x1c0] sm:$0xf]
    %v2916 = vld [vmem:[#allocation3 + $0x1c4] sm:$0xf]
    %v2917 = vld [vmem:[#allocation3 + $0x1c8] sm:$0xf]
    %v2918 = vld [vmem:[#allocation3 + $0x1cc] sm:$0xf]
    %v2919 = vld [vmem:[#allocation3 + $0x1d0] sm:$0xf]
    %v2920 = vld [vmem:[#allocation3 + $0x1d4] sm:$0xf]
    %v2921 = vld [vmem:[#allocation3 + $0x1d8] sm:$0xf]
    %v2922 = vld [vmem:[#allocation3 + $0x1dc] sm:$0xf]
    %v2923 = vld [vmem:[#allocation3 + $0x1e0] sm:$0xf]
    %v2924 = vld [vmem:[#allocation3 + $0x1e4] sm:$0xf]
    %v2925 = vld [vmem:[#allocation3 + $0x1e8] sm:$0xf]
    %v2926 = vld [vmem:[#allocation3 + $0x1ec] sm:$0xf]
    %v2927 = vld [vmem:[#allocation3 + $0x1f0] sm:$0xf]
    %v2928 = vld [vmem:[#allocation3 + $0x1f4] sm:$0xf]
    %v2929 = vld [vmem:[#allocation3 + $0x1f8] sm:$0xf]
    %v2930 = vld [vmem:[#allocation3 + $0x1fc] sm:$0xf]
    %v2931 = vld [vmem:[#allocation3 + $0x200] sm:$0xf]
    %v2932 = vld [vmem:[#allocation3 + $0x204] sm:$0xf]
    %v2933 = vld [vmem:[#allocation3 + $0x208] sm:$0xf]
    %v2934 = vld [vmem:[#allocation3 + $0x20c] sm:$0xf]
    %v2935 = vld [vmem:[#allocation3 + $0x210] sm:$0xf]
    %v2936 = vld [vmem:[#allocation3 + $0x214] sm:$0xf]
    %v2937 = vld [vmem:[#allocation3 + $0x218] sm:$0xf]
    %v2938 = vld [vmem:[#allocation3 + $0x21c] sm:$0xf]
    %v2939 = vld [vmem:[#allocation3 + $0x220] sm:$0xf]
    %v2940 = vld [vmem:[#allocation3 + $0x224] sm:$0xf]
    %v2941 = vld [vmem:[#allocation3 + $0x228] sm:$0xf]
    %v2942 = vld [vmem:[#allocation3 + $0x22c] sm:$0xf]
    %v2943 = vld [vmem:[#allocation3 + $0x230] sm:$0xf]
    %v2944 = vld [vmem:[#allocation3 + $0x234] sm:$0xf]
    %v2945 = vld [vmem:[#allocation3 + $0x238] sm:$0xf]
    %v2946 = vld [vmem:[#allocation3 + $0x23c] sm:$0xf]
    %v2995 = vunpack.c.l.b16 %v2899
    %v2996 = vunpack.c.l.b16 %v2900
    %v2997 = vunpack.c.l.b16 %v2901
    %v2998 = vunpack.c.l.b16 %v2902
    %v2999 = vunpack.c.l.b16 %v2903
    %v3000 = vunpack.c.l.b16 %v2904
    %v3001 = vunpack.c.l.b16 %v2905
    %v3002 = vunpack.c.l.b16 %v2906
    %v3003 = vunpack.c.l.b16 %v2907
    %v3004 = vunpack.c.l.b16 %v2908
    %v3005 = vunpack.c.l.b16 %v2909
    %v3006 = vunpack.c.l.b16 %v2910
    %v3007 = vunpack.c.l.b16 %v2911
    %v3008 = vunpack.c.l.b16 %v2912
    %v3009 = vunpack.c.l.b16 %v2913
    %v3010 = vunpack.c.l.b16 %v2914
    %v3011 = vunpack.c.l.b16 %v2915
    %v3012 = vunpack.c.l.b16 %v2916
    %v3013 = vunpack.c.l.b16 %v2917
    %v3014 = vunpack.c.l.b16 %v2918
    %v3015 = vunpack.c.l.b16 %v2919
    %v3016 = vunpack.c.l.b16 %v2920
    %v3017 = vunpack.c.l.b16 %v2921
    %v3018 = vunpack.c.l.b16 %v2922
    %v3019 = vunpack.c.l.b16 %v2923
    %v3020 = vunpack.c.l.b16 %v2924
    %v3021 = vunpack.c.l.b16 %v2925
    %v3022 = vunpack.c.l.b16 %v2926
    %v3023 = vunpack.c.l.b16 %v2927
    %v3024 = vunpack.c.l.b16 %v2928
    %v3025 = vunpack.c.l.b16 %v2929
    %v3026 = vunpack.c.l.b16 %v2930
    %v3027 = vunpack.c.l.b16 %v2931
    %v3028 = vunpack.c.l.b16 %v2932
    %v3029 = vunpack.c.l.b16 %v2933
    %v3030 = vunpack.c.l.b16 %v2934
    %v3031 = vunpack.c.l.b16 %v2935
    %v3032 = vunpack.c.l.b16 %v2936
    %v3033 = vunpack.c.l.b16 %v2937
    %v3034 = vunpack.c.l.b16 %v2938
    %v3035 = vunpack.c.l.b16 %v2939
    %v3036 = vunpack.c.l.b16 %v2940
    %v3037 = vunpack.c.l.b16 %v2941
    %v3038 = vunpack.c.l.b16 %v2942
    %v3039 = vunpack.c.l.b16 %v2943
    %v3040 = vunpack.c.l.b16 %v2944
    %v3041 = vunpack.c.l.b16 %v2945
    %v3042 = vunpack.c.l.b16 %v2946
    %v3043 = vpack.c.b16 %v2996, %v2995
    %v3044 = vpack.c.b16 %v2998, %v2997
    %v3045 = vpack.c.b16 %v3000, %v2999
    %v3046 = vpack.c.b16 %v3002, %v3001
    %v3047 = vpack.c.b16 %v3004, %v3003
    %v3048 = vpack.c.b16 %v3006, %v3005
    %v3049 = vpack.c.b16 %v3008, %v3007
    %v3050 = vpack.c.b16 %v3010, %v3009
    %v3051 = vpack.c.b16 %v3012, %v3011
    %v3052 = vpack.c.b16 %v3014, %v3013
    %v3053 = vpack.c.b16 %v3016, %v3015
    %v3054 = vpack.c.b16 %v3018, %v3017
    %v3055 = vpack.c.b16 %v3020, %v3019
    %v3056 = vpack.c.b16 %v3022, %v3021
    %v3057 = vpack.c.b16 %v3024, %v3023
    %v3058 = vpack.c.b16 %v3026, %v3025
    %v3059 = vpack.c.b16 %v3028, %v3027
    %v3060 = vpack.c.b16 %v3030, %v3029
    %v3061 = vpack.c.b16 %v3032, %v3031
    %v3062 = vpack.c.b16 %v3034, %v3033
    %v3063 = vpack.c.b16 %v3036, %v3035
    %v3064 = vpack.c.b16 %v3038, %v3037
    %v3065 = vpack.c.b16 %v3040, %v3039
    %v3066 = vpack.c.b16 %v3042, %v3041
    %3091 = vmatprep.subr.bf16.mxu0 0
    %3092 = vmatpush1.bf16.msra.mxu0 %v3050
    %3093 = vmatprep.subr.bf16.mxu0 0
    %3094 = vmatpush1.bf16.msra.mxu0 %v3049
    %3095 = vmatprep.subr.bf16.mxu0 0
    %3096 = vmatpush1.bf16.msra.mxu0 %v3048
    %3097 = vmatprep.subr.bf16.mxu0 0
    %3098 = vmatpush1.bf16.msra.mxu0 %v3047
    %3099 = vmatprep.subr.bf16.mxu0 0
    %3100 = vmatpush1.bf16.msra.mxu0 %v3046
    %3101 = vmatprep.subr.bf16.mxu0 0
    %3102 = vmatpush1.bf16.msra.mxu0 %v3045
    %3103 = vmatprep.subr.bf16.mxu0 0
    %3104 = vmatpush1.bf16.msra.mxu0 %v3044
    %3105 = vmatprep.subr.bf16.mxu0 0
    %3106 = vmatpush1.bf16.msra.mxu0 %v3043
    %3107 = vmatprep.subr.bf16.mxu0 0
    %3108 = vmatpush2.bf16.msra.mxu0 %v3058
    %3109 = vmatprep.subr.bf16.mxu0 0
    %3110 = vmatpush2.bf16.msra.mxu0 %v3057
    %3111 = vmatprep.subr.bf16.mxu0 0
    %3112 = vmatpush2.bf16.msra.mxu0 %v3056
    %3113 = vmatprep.subr.bf16.mxu0 0
    %3114 = vmatpush2.bf16.msra.mxu0 %v3055
    %3115 = vmatprep.subr.bf16.mxu0 0
    %3116 = vmatpush2.bf16.msra.mxu0 %v3054
    %3117 = vmatprep.subr.bf16.mxu0 0
    %3118 = vmatpush2.bf16.msra.mxu0 %v3053
    %3119 = vmatprep.subr.bf16.mxu0 0
    %3120 = vmatpush2.bf16.msra.mxu0 %v3052
    %3121 = vmatprep.subr.bf16.mxu0 0
    %3122 = vmatpush2.bf16.msra.mxu0 %v3051
    %3123 = vmatprep.mubr.bf16.mxu0 %v2851
    %3124 = vmatmul.mubr.bf16.gmra.mxu0 %v2803
    %v3125 = vpop.f32.mrf.mxu0
    %v3126 = vadd.f32 0.0, %v3125
    %v3127 = vpop.f32.mrf.mxu0
    %v3128 = vpop.f32.mrf.mxu0
    %v3129 = vadd.f32 0.0, %v3128
    %v3130 = vpop.f32.mrf.mxu0
    %3131 = vmatprep.mubr.bf16.mxu0 %v2852
    %3132 = vmatmul.mubr.bf16.gmra.mxu0 %v2804
    %v3133 = vpop.f32.mrf.mxu0
    %v3134 = vadd.f32 0.0, %v3133
    %v3135 = vpop.f32.mrf.mxu0
    %v3136 = vpop.f32.mrf.mxu0
    %v3137 = vadd.f32 0.0, %v3136
    %v3138 = vpop.f32.mrf.mxu0
    %3139 = vmatprep.mubr.bf16.mxu0 %v2853
    %3140 = vmatmul.mubr.bf16.gmra.mxu0 %v2805
    %v3141 = vpop.f32.mrf.mxu0
    %v3142 = vadd.f32 0.0, %v3141
    %v3143 = vpop.f32.mrf.mxu0
    %v3144 = vpop.f32.mrf.mxu0
    %v3145 = vadd.f32 0.0, %v3144
    %v3146 = vpop.f32.mrf.mxu0
    %3147 = vmatprep.mubr.bf16.mxu0 %v2854
    %3148 = vmatmul.mubr.bf16.gmra.mxu0 %v2806
    %v3149 = vpop.f32.mrf.mxu0
    %v3150 = vadd.f32 0.0, %v3149
    %v3151 = vpop.f32.mrf.mxu0
    %v3152 = vpop.f32.mrf.mxu0
    %v3153 = vadd.f32 0.0, %v3152
    %v3154 = vpop.f32.mrf.mxu0
    %3155 = vmatprep.mubr.bf16.mxu0 %v2855
    %3156 = vmatmul.mubr.bf16.gmra.mxu0 %v2807
    %v3157 = vpop.f32.mrf.mxu0
    %v3158 = vadd.f32 0.0, %v3157
    %v3159 = vpop.f32.mrf.mxu0
    %v3160 = vpop.f32.mrf.mxu0
    %v3161 = vadd.f32 0.0, %v3160
    %v3162 = vpop.f32.mrf.mxu0
    %3163 = vmatprep.mubr.bf16.mxu0 %v2856
    %3164 = vmatmul.mubr.bf16.gmra.mxu0 %v2808
    %v3165 = vpop.f32.mrf.mxu0
    %v3166 = vadd.f32 0.0, %v3165
    %v3167 = vpop.f32.mrf.mxu0
    %v3168 = vpop.f32.mrf.mxu0
    %v3169 = vadd.f32 0.0, %v3168
    %v3170 = vpop.f32.mrf.mxu0
    %3171 = vmatprep.mubr.bf16.mxu0 %v2857
    %3172 = vmatmul.mubr.bf16.gmra.mxu0 %v2809
    %v3173 = vpop.f32.mrf.mxu0
    %v3174 = vadd.f32 0.0, %v3173
    %v3175 = vpop.f32.mrf.mxu0
    %v3176 = vpop.f32.mrf.mxu0
    %v3177 = vadd.f32 0.0, %v3176
    %v3178 = vpop.f32.mrf.mxu0
    %3179 = vmatprep.mubr.bf16.mxu0 %v2858
    %3180 = vmatmul.mubr.bf16.gmra.mxu0 %v2810
    %v3181 = vpop.f32.mrf.mxu0
    %v3182 = vadd.f32 0.0, %v3181
    %v3183 = vpop.f32.mrf.mxu0
    %v3184 = vpop.f32.mrf.mxu0
    %v3185 = vadd.f32 0.0, %v3184
    %v3186 = vpop.f32.mrf.mxu0
    %3187 = vdwg.mxu0
    %3188 = vmatprep.subr.bf16.mxu0 0
    %3189 = vmatpush1.bf16.msra.mxu0 %v3066
    %3190 = vmatprep.subr.bf16.mxu0 0
    %3191 = vmatpush1.bf16.msra.mxu0 %v3065
    %3192 = vmatprep.subr.bf16.mxu0 0
    %3193 = vmatpush1.bf16.msra.mxu0 %v3064
    %3194 = vmatprep.subr.bf16.mxu0 0
    %3195 = vmatpush1.bf16.msra.mxu0 %v3063
    %3196 = vmatprep.subr.bf16.mxu0 0
    %3197 = vmatpush1.bf16.msra.mxu0 %v3062
    %3198 = vmatprep.subr.bf16.mxu0 0
    %3199 = vmatpush1.bf16.msra.mxu0 %v3061
    %3200 = vmatprep.subr.bf16.mxu0 0
    %3201 = vmatpush1.bf16.msra.mxu0 %v3060
    %3202 = vmatprep.subr.bf16.mxu0 0
    %3203 = vmatpush1.bf16.msra.mxu0 %v3059
    %3204 = vmatprep.subr.bf16.mxu0 0
    %3205 = vmatpush2.bf16.msra.mxu0 0
    %3206 = vmatprep.subr.bf16.mxu0 0
    %3207 = vmatpush2.bf16.msra.mxu0 0
    %3208 = vmatprep.subr.bf16.mxu0 0
    %3209 = vmatpush2.bf16.msra.mxu0 0
    %3210 = vmatprep.subr.bf16.mxu0 0
    %3211 = vmatpush2.bf16.msra.mxu0 0
    %3212 = vmatprep.subr.bf16.mxu0 0
    %3213 = vmatpush2.bf16.msra.mxu0 0
    %3214 = vmatprep.subr.bf16.mxu0 0
    %3215 = vmatpush2.bf16.msra.mxu0 0
    %3216 = vmatprep.subr.bf16.mxu0 0
    %3217 = vmatpush2.bf16.msra.mxu0 0
    %3218 = vmatprep.subr.bf16.mxu0 0
    %3219 = vmatpush2.bf16.msra.mxu0 0
    %3220 = vmatprep.mubr.bf16.mxu0 0
    %3221 = vmatmul.mubr.bf16.gmra.mxu0 %v2883
    %v3222 = vpop.f32.mrf.mxu0
    %v3223 = vadd.f32 %v3126, %v3222
    %v3224 = vpop.f32.mrf.mxu0
    %v3225 = vpop.f32.mrf.mxu0
    %v3226 = vadd.f32 %v3129, %v3225
    %v3227 = vpop.f32.mrf.mxu0
    %3228 = vmatprep.mubr.bf16.mxu0 0
    %3229 = vmatmul.mubr.bf16.gmra.mxu0 %v2884
    %v3230 = vpop.f32.mrf.mxu0
    %v3231 = vadd.f32 %v3134, %v3230
    %v3232 = vpop.f32.mrf.mxu0
    %v3233 = vpop.f32.mrf.mxu0
    %v3234 = vadd.f32 %v3137, %v3233
    %v3235 = vpop.f32.mrf.mxu0
    %3236 = vmatprep.mubr.bf16.mxu0 0
    %3237 = vmatmul.mubr.bf16.gmra.mxu0 %v2885
    %v3238 = vpop.f32.mrf.mxu0
    %v3239 = vadd.f32 %v3142, %v3238
    %v3240 = vpop.f32.mrf.mxu0
    %v3241 = vpop.f32.mrf.mxu0
    %v3242 = vadd.f32 %v3145, %v3241
    %v3243 = vpop.f32.mrf.mxu0
    %3244 = vmatprep.mubr.bf16.mxu0 0
    %3245 = vmatmul.mubr.bf16.gmra.mxu0 %v2886
    %v3246 = vpop.f32.mrf.mxu0
    %v3247 = vadd.f32 %v3150, %v3246
    %v3248 = vpop.f32.mrf.mxu0
    %v3249 = vpop.f32.mrf.mxu0
    %v3250 = vadd.f32 %v3153, %v3249
    %v3251 = vpop.f32.mrf.mxu0
    %3252 = vmatprep.mubr.bf16.mxu0 0
    %3253 = vmatmul.mubr.bf16.gmra.mxu0 %v2887
    %v3254 = vpop.f32.mrf.mxu0
    %v3255 = vadd.f32 %v3158, %v3254
    %v3256 = vpop.f32.mrf.mxu0
    %v3257 = vpop.f32.mrf.mxu0
    %v3258 = vadd.f32 %v3161, %v3257
    %v3259 = vpop.f32.mrf.mxu0
    %3260 = vmatprep.mubr.bf16.mxu0 0
    %3261 = vmatmul.mubr.bf16.gmra.mxu0 %v2888
    %v3262 = vpop.f32.mrf.mxu0
    %v3263 = vadd.f32 %v3166, %v3262
    %v3264 = vpop.f32.mrf.mxu0
    %v3265 = vpop.f32.mrf.mxu0
    %v3266 = vadd.f32 %v3169, %v3265
    %v3267 = vpop.f32.mrf.mxu0
    %3268 = vmatprep.mubr.bf16.mxu0 0
    %3269 = vmatmul.mubr.bf16.gmra.mxu0 %v2889
    %v3270 = vpop.f32.mrf.mxu0
    %v3271 = vadd.f32 %v3174, %v3270
    %v3272 = vpop.f32.mrf.mxu0
    %v3273 = vpop.f32.mrf.mxu0
    %v3274 = vadd.f32 %v3177, %v3273
    %v3275 = vpop.f32.mrf.mxu0
    %3276 = vmatprep.mubr.bf16.mxu0 0
    %3277 = vmatmul.mubr.bf16.gmra.mxu0 %v2890
    %v3278 = vpop.f32.mrf.mxu0
    %v3279 = vadd.f32 %v3182, %v3278
    %v3280 = vpop.f32.mrf.mxu0
    %v3281 = vpop.f32.mrf.mxu0
    %v3282 = vadd.f32 %v3185, %v3281
    %v3283 = vpop.f32.mrf.mxu0
    %3284 = vdwg.mxu0
    %v3285 = vadd.f32 %v2324, %v3223
    %v3286 = vadd.f32 %v2327, %v3226
    %v3287 = vadd.f32 %v2332, %v3231
    %v3288 = vadd.f32 %v2335, %v3234
    %v3289 = vadd.f32 %v2340, %v3239
    %v3290 = vadd.f32 %v2343, %v3242
    %v3291 = vadd.f32 %v2348, %v3247
    %v3292 = vadd.f32 %v2351, %v3250
    %v3293 = vadd.f32 %v2356, %v3255
    %v3294 = vadd.f32 %v2359, %v3258
    %v3295 = vadd.f32 %v2364, %v3263
    %v3296 = vadd.f32 %v2367, %v3266
    %v3297 = vadd.f32 %v2372, %v3271
    %v3298 = vadd.f32 %v2375, %v3274
    %v3299 = vadd.f32 %v2380, %v3279
    %v3300 = vadd.f32 %v2383, %v3282
    %v3301 = vadd.f32 %v3285, %v3286
    %v3302 = vadd.f32 %v3301, %v3287
    %v3303 = vadd.f32 %v3302, %v3288
    %v3304 = vadd.f32 %v3303, %v3289
    %v3305 = vadd.f32 %v3304, %v3290
    %v3306 = vadd.f32 %v3305, %v3291
    %v3307 = vadd.f32 %v3306, %v3292
    %v3308 = vadd.f32 %v3307, %v3293
    %v3309 = vadd.f32 %v3308, %v3294
    %v3310 = vadd.f32 %v3309, %v3295
    %v3311 = vadd.f32 %v3310, %v3296
    %v3312 = vadd.f32 %v3311, %v3297
    %v3313 = vadd.f32 %v3312, %v3298
    %v3314 = vadd.f32 %v3313, %v3299
    %v3315 = vadd.f32 %v3314, %v3300
    %v3316 = vrot.slane %v3315, 4
    %v3317 = vadd.f32 %v3315, %v3316
    %v3318 = vrot.slane %v3317, 2
    %v3319 = vadd.f32 %v3317, %v3318
    %v3320 = vrot.slane %v3319, 1
    %v3321 = vadd.f32 %v3319, %v3320
    %v3322 = vmul.f32 %v3321, %v300
    %v3323 = vsub.f32 %v3285, %v3322
    %v3324 = vsub.f32 %v3286, %v3322
    %v3325 = vsub.f32 %v3287, %v3322
    %v3326 = vsub.f32 %v3288, %v3322
    %v3327 = vsub.f32 %v3289, %v3322
    %v3328 = vsub.f32 %v3290, %v3322
    %v3329 = vsub.f32 %v3291, %v3322
    %v3330 = vsub.f32 %v3292, %v3322
    %v3331 = vsub.f32 %v3293, %v3322
    %v3332 = vsub.f32 %v3294, %v3322
    %v3333 = vsub.f32 %v3295, %v3322
    %v3334 = vsub.f32 %v3296, %v3322
    %v3335 = vsub.f32 %v3297, %v3322
    %v3336 = vsub.f32 %v3298, %v3322
    %v3337 = vsub.f32 %v3299, %v3322
    %v3338 = vsub.f32 %v3300, %v3322
    %v3339 = vmul.f32 %v3323, %v3323
    %v3340 = vmul.f32 %v3324, %v3324
    %v3341 = vmul.f32 %v3325, %v3325
    %v3342 = vmul.f32 %v3326, %v3326
    %v3343 = vmul.f32 %v3327, %v3327
    %v3344 = vmul.f32 %v3328, %v3328
    %v3345 = vmul.f32 %v3329, %v3329
    %v3346 = vmul.f32 %v3330, %v3330
    %v3347 = vmul.f32 %v3331, %v3331
    %v3348 = vmul.f32 %v3332, %v3332
    %v3349 = vmul.f32 %v3333, %v3333
    %v3350 = vmul.f32 %v3334, %v3334
    %v3351 = vmul.f32 %v3335, %v3335
    %v3352 = vmul.f32 %v3336, %v3336
    %v3353 = vmul.f32 %v3337, %v3337
    %v3354 = vmul.f32 %v3338, %v3338
    %v3355 = vadd.f32 %v3339, %v3340
    %v3356 = vadd.f32 %v3355, %v3341
    %v3357 = vadd.f32 %v3356, %v3342
    %v3358 = vadd.f32 %v3357, %v3343
    %v3359 = vadd.f32 %v3358, %v3344
    %v3360 = vadd.f32 %v3359, %v3345
    %v3361 = vadd.f32 %v3360, %v3346
    %v3362 = vadd.f32 %v3361, %v3347
    %v3363 = vadd.f32 %v3362, %v3348
    %v3364 = vadd.f32 %v3363, %v3349
    %v3365 = vadd.f32 %v3364, %v3350
    %v3366 = vadd.f32 %v3365, %v3351
    %v3367 = vadd.f32 %v3366, %v3352
    %v3368 = vadd.f32 %v3367, %v3353
    %v3369 = vadd.f32 %v3368, %v3354
    %v3370 = vrot.slane %v3369, 4
    %v3371 = vadd.f32 %v3369, %v3370
    %v3372 = vrot.slane %v3371, 2
    %v3373 = vadd.f32 %v3371, %v3372
    %v3374 = vrot.slane %v3373, 1
    %v3375 = vadd.f32 %v3373, %v3374
    %v3376 = vmul.f32 %v3375, %v300
    %v3377 = vld [vmem:[%s5] sm:$0x1]
    %v3378 = vadd.f32 %v3376, 1e-05
    %v3379 = vrsqrt.pop %v3378
    %v3380 = vmul.f32 %v3377, %v3379
    %v3382 = vlaneseq
    %v3383 = vshrl.u32 %v3382, 7
    %v3384 = vsub.s32 0, %v3383
    %v3385 = vrot.slane %v3380, %v3384
    %v3387 = vmul.f32 %v3323, %v3385
    %v3388 = vmul.f32 %v3324, %v3385
    %v3389 = vmul.f32 %v3325, %v3385
    %v3390 = vmul.f32 %v3326, %v3385
    %v3391 = vmul.f32 %v3327, %v3385
    %v3392 = vmul.f32 %v3328, %v3385
    %v3393 = vmul.f32 %v3329, %v3385
    %v3394 = vmul.f32 %v3330, %v3385
    %v3395 = vmul.f32 %v3331, %v3385
    %v3396 = vmul.f32 %v3332, %v3385
    %v3397 = vmul.f32 %v3333, %v3385
    %v3398 = vmul.f32 %v3334, %v3385
    %v3399 = vmul.f32 %v3335, %v3385
    %v3400 = vmul.f32 %v3336, %v3385
    %v3401 = vmul.f32 %v3337, %v3385
    %v3402 = vmul.f32 %v3338, %v3385
    %v3403 = vld [vmem:[%s6] sm:$0x1]
    %v3405 = vlaneseq
    %v3406 = vshrl.u32 %v3405, 7
    %v3407 = vsub.s32 0, %v3406
    %v3408 = vrot.slane %v3403, %v3407
    %v3410 = vadd.f32 %v3387, %v3408
    %v3411 = vadd.f32 %v3388, %v3408
    %v3412 = vadd.f32 %v3389, %v3408
    %v3413 = vadd.f32 %v3390, %v3408
    %v3414 = vadd.f32 %v3391, %v3408
    %v3415 = vadd.f32 %v3392, %v3408
    %v3416 = vadd.f32 %v3393, %v3408
    %v3417 = vadd.f32 %v3394, %v3408
    %v3418 = vadd.f32 %v3395, %v3408
    %v3419 = vadd.f32 %v3396, %v3408
    %v3420 = vadd.f32 %v3397, %v3408
    %v3421 = vadd.f32 %v3398, %v3408
    %v3422 = vadd.f32 %v3399, %v3408
    %v3423 = vadd.f32 %v3400, %v3408
    %v3424 = vadd.f32 %v3401, %v3408
    %v3425 = vadd.f32 %v3402, %v3408
    %v3426 = vmax.f32 %v3410, 0.0
    %v3427 = vmax.f32 %v3411, 0.0
    %v3428 = vmax.f32 %v3412, 0.0
    %v3429 = vmax.f32 %v3413, 0.0
    %v3430 = vmax.f32 %v3414, 0.0
    %v3431 = vmax.f32 %v3415, 0.0
    %v3432 = vmax.f32 %v3416, 0.0
    %v3433 = vmax.f32 %v3417, 0.0
    %v3434 = vmax.f32 %v3418, 0.0
    %v3435 = vmax.f32 %v3419, 0.0
    %v3436 = vmax.f32 %v3420, 0.0
    %v3437 = vmax.f32 %v3421, 0.0
    %v3438 = vmax.f32 %v3422, 0.0
    %v3439 = vmax.f32 %v3423, 0.0
    %v3440 = vmax.f32 %v3424, 0.0
    %v3441 = vmax.f32 %v3425, 0.0
    %v3442 = vpack.c.bf16 %v3427, %v3426
    %v3443 = vpack.c.bf16 %v3429, %v3428
    %v3444 = vpack.c.bf16 %v3431, %v3430
    %v3445 = vpack.c.bf16 %v3433, %v3432
    %v3446 = vpack.c.bf16 %v3435, %v3434
    %v3447 = vpack.c.bf16 %v3437, %v3436
    %v3448 = vpack.c.bf16 %v3439, %v3438
    %v3449 = vpack.c.bf16 %v3441, %v3440
    %v3450 = vld [vmem:[%s7] sm:$0xf]
    %v3451 = vld [vmem:[%s7 + $0x4] sm:$0xf]
    %v3452 = vld [vmem:[%s7 + $0x8] sm:$0xf]
    %v3453 = vld [vmem:[%s7 + $0xc] sm:$0xf]
    %v3454 = vld [vmem:[%s7 + $0x10] sm:$0xf]
    %v3455 = vld [vmem:[%s7 + $0x14] sm:$0xf]
    %v3456 = vld [vmem:[%s7 + $0x18] sm:$0xf]
    %v3457 = vld [vmem:[%s7 + $0x1c] sm:$0xf]
    %v3458 = vld [vmem:[%s7 + $0x20] sm:$0xf]
    %v3459 = vld [vmem:[%s7 + $0x24] sm:$0xf]
    %v3460 = vld [vmem:[%s7 + $0x28] sm:$0xf]
    %v3461 = vld [vmem:[%s7 + $0x2c] sm:$0xf]
    %v3462 = vld [vmem:[%s7 + $0x30] sm:$0xf]
    %v3463 = vld [vmem:[%s7 + $0x34] sm:$0xf]
    %v3464 = vld [vmem:[%s7 + $0x38] sm:$0xf]
    %v3465 = vld [vmem:[%s7 + $0x3c] sm:$0xf]
    %v3482 = vunpack.c.l.b16 %v3450
    %v3483 = vunpack.c.l.b16 %v3451
    %v3484 = vunpack.c.l.b16 %v3452
    %v3485 = vunpack.c.l.b16 %v3453
    %v3486 = vunpack.c.l.b16 %v3454
    %v3487 = vunpack.c.l.b16 %v3455
    %v3488 = vunpack.c.l.b16 %v3456
    %v3489 = vunpack.c.l.b16 %v3457
    %v3490 = vunpack.c.l.b16 %v3458
    %v3491 = vunpack.c.l.b16 %v3459
    %v3492 = vunpack.c.l.b16 %v3460
    %v3493 = vunpack.c.l.b16 %v3461
    %v3494 = vunpack.c.l.b16 %v3462
    %v3495 = vunpack.c.l.b16 %v3463
    %v3496 = vunpack.c.l.b16 %v3464
    %v3497 = vunpack.c.l.b16 %v3465
    %v3498 = vpack.c.b16 %v3483, %v3482
    %v3499 = vpack.c.b16 %v3485, %v3484
    %v3500 = vpack.c.b16 %v3487, %v3486
    %v3501 = vpack.c.b16 %v3489, %v3488
    %v3502 = vpack.c.b16 %v3491, %v3490
    %v3503 = vpack.c.b16 %v3493, %v3492
    %v3504 = vpack.c.b16 %v3495, %v3494
    %v3505 = vpack.c.b16 %v3497, %v3496
    %3514 = vmatprep.subr.bf16.mxu0 0
    %3515 = vmatpush1.bf16.msra.mxu0 %v3505
    %3516 = vmatprep.subr.bf16.mxu0 0
    %3517 = vmatpush1.bf16.msra.mxu0 %v3504
    %3518 = vmatprep.subr.bf16.mxu0 0
    %3519 = vmatpush1.bf16.msra.mxu0 %v3503
    %3520 = vmatprep.subr.bf16.mxu0 0
    %3521 = vmatpush1.bf16.msra.mxu0 %v3502
    %3522 = vmatprep.subr.bf16.mxu0 0
    %3523 = vmatpush1.bf16.msra.mxu0 %v3501
    %3524 = vmatprep.subr.bf16.mxu0 0
    %3525 = vmatpush1.bf16.msra.mxu0 %v3500
    %3526 = vmatprep.subr.bf16.mxu0 0
    %3527 = vmatpush1.bf16.msra.mxu0 %v3499
    %3528 = vmatprep.subr.bf16.mxu0 0
    %3529 = vmatpush1.bf16.msra.mxu0 %v3498
    %3530 = vmatprep.subr.bf16.mxu0 0
    %3531 = vmatpush2.bf16.msra.mxu0 0
    %3532 = vmatprep.subr.bf16.mxu0 0
    %3533 = vmatpush2.bf16.msra.mxu0 0
    %3534 = vmatprep.subr.bf16.mxu0 0
    %3535 = vmatpush2.bf16.msra.mxu0 0
    %3536 = vmatprep.subr.bf16.mxu0 0
    %3537 = vmatpush2.bf16.msra.mxu0 0
    %3538 = vmatprep.subr.bf16.mxu0 0
    %3539 = vmatpush2.bf16.msra.mxu0 0
    %3540 = vmatprep.subr.bf16.mxu0 0
    %3541 = vmatpush2.bf16.msra.mxu0 0
    %3542 = vmatprep.subr.bf16.mxu0 0
    %3543 = vmatpush2.bf16.msra.mxu0 0
    %3544 = vmatprep.subr.bf16.mxu0 0
    %3545 = vmatpush2.bf16.msra.mxu0 0
    %3546 = vmatprep.mubr.bf16.mxu0 0
    %3547 = vmatmul.mubr.bf16.gmra.mxu0 %v3442
    %v3548 = vpop.f32.mrf.mxu0
    %v3549 = vadd.f32 0.0, %v3548
    %v3550 = vpop.f32.mrf.mxu0
    %v3551 = vpop.f32.mrf.mxu0
    %v3552 = vadd.f32 0.0, %v3551
    %v3553 = vpop.f32.mrf.mxu0
    %3554 = vmatprep.mubr.bf16.mxu0 0
    %3555 = vmatmul.mubr.bf16.gmra.mxu0 %v3443
    %v3556 = vpop.f32.mrf.mxu0
    %v3557 = vadd.f32 0.0, %v3556
    %v3558 = vpop.f32.mrf.mxu0
    %v3559 = vpop.f32.mrf.mxu0
    %v3560 = vadd.f32 0.0, %v3559
    %v3561 = vpop.f32.mrf.mxu0
    %3562 = vmatprep.mubr.bf16.mxu0 0
    %3563 = vmatmul.mubr.bf16.gmra.mxu0 %v3444
    %v3564 = vpop.f32.mrf.mxu0
    %v3565 = vadd.f32 0.0, %v3564
    %v3566 = vpop.f32.mrf.mxu0
    %v3567 = vpop.f32.mrf.mxu0
    %v3568 = vadd.f32 0.0, %v3567
    %v3569 = vpop.f32.mrf.mxu0
    %3570 = vmatprep.mubr.bf16.mxu0 0
    %3571 = vmatmul.mubr.bf16.gmra.mxu0 %v3445
    %v3572 = vpop.f32.mrf.mxu0
    %v3573 = vadd.f32 0.0, %v3572
    %v3574 = vpop.f32.mrf.mxu0
    %v3575 = vpop.f32.mrf.mxu0
    %v3576 = vadd.f32 0.0, %v3575
    %v3577 = vpop.f32.mrf.mxu0
    %3578 = vmatprep.mubr.bf16.mxu0 0
    %3579 = vmatmul.mubr.bf16.gmra.mxu0 %v3446
    %v3580 = vpop.f32.mrf.mxu0
    %v3581 = vadd.f32 0.0, %v3580
    %v3582 = vpop.f32.mrf.mxu0
    %v3583 = vpop.f32.mrf.mxu0
    %v3584 = vadd.f32 0.0, %v3583
    %v3585 = vpop.f32.mrf.mxu0
    %3586 = vmatprep.mubr.bf16.mxu0 0
    %3587 = vmatmul.mubr.bf16.gmra.mxu0 %v3447
    %v3588 = vpop.f32.mrf.mxu0
    %v3589 = vadd.f32 0.0, %v3588
    %v3590 = vpop.f32.mrf.mxu0
    %v3591 = vpop.f32.mrf.mxu0
    %v3592 = vadd.f32 0.0, %v3591
    %v3593 = vpop.f32.mrf.mxu0
    %3594 = vmatprep.mubr.bf16.mxu0 0
    %3595 = vmatmul.mubr.bf16.gmra.mxu0 %v3448
    %v3596 = vpop.f32.mrf.mxu0
    %v3597 = vadd.f32 0.0, %v3596
    %v3598 = vpop.f32.mrf.mxu0
    %v3599 = vpop.f32.mrf.mxu0
    %v3600 = vadd.f32 0.0, %v3599
    %v3601 = vpop.f32.mrf.mxu0
    %3602 = vmatprep.mubr.bf16.mxu0 0
    %3603 = vmatmul.mubr.bf16.gmra.mxu0 %v3449
    %v3604 = vpop.f32.mrf.mxu0
    %v3605 = vadd.f32 0.0, %v3604
    %v3606 = vpop.f32.mrf.mxu0
    %v3607 = vpop.f32.mrf.mxu0
    %v3608 = vadd.f32 0.0, %v3607
    %v3609 = vpop.f32.mrf.mxu0
    %3610 = vdwg.mxu0
    %v3611 = vadd.f32 %v3549, %v3552
    %v3612 = vadd.f32 %v3611, %v3557
    %v3613 = vadd.f32 %v3612, %v3560
    %v3614 = vadd.f32 %v3613, %v3565
    %v3615 = vadd.f32 %v3614, %v3568
    %v3616 = vadd.f32 %v3615, %v3573
    %v3617 = vadd.f32 %v3616, %v3576
    %v3618 = vadd.f32 %v3617, %v3581
    %v3619 = vadd.f32 %v3618, %v3584
    %v3620 = vadd.f32 %v3619, %v3589
    %v3621 = vadd.f32 %v3620, %v3592
    %v3622 = vadd.f32 %v3621, %v3597
    %v3623 = vadd.f32 %v3622, %v3600
    %v3624 = vadd.f32 %v3623, %v3605
    %v3625 = vadd.f32 %v3624, %v3608
    %v3626 = vrot.slane %v3625, 4
    %v3627 = vadd.f32 %v3625, %v3626
    %v3628 = vrot.slane %v3627, 2
    %v3629 = vadd.f32 %v3627, %v3628
    %v3630 = vrot.slane %v3629, 1
    %v3631 = vadd.f32 %v3629, %v3630
    %v3632 = vmul.f32 %v3631, %v300
    %v3633 = vsub.f32 %v3549, %v3632
    %v3634 = vsub.f32 %v3552, %v3632
    %v3635 = vsub.f32 %v3557, %v3632
    %v3636 = vsub.f32 %v3560, %v3632
    %v3637 = vsub.f32 %v3565, %v3632
    %v3638 = vsub.f32 %v3568, %v3632
    %v3639 = vsub.f32 %v3573, %v3632
    %v3640 = vsub.f32 %v3576, %v3632
    %v3641 = vsub.f32 %v3581, %v3632
    %v3642 = vsub.f32 %v3584, %v3632
    %v3643 = vsub.f32 %v3589, %v3632
    %v3644 = vsub.f32 %v3592, %v3632
    %v3645 = vsub.f32 %v3597, %v3632
    %v3646 = vsub.f32 %v3600, %v3632
    %v3647 = vsub.f32 %v3605, %v3632
    %v3648 = vsub.f32 %v3608, %v3632
    %v3649 = vmul.f32 %v3633, %v3633
    %v3650 = vmul.f32 %v3634, %v3634
    %v3651 = vmul.f32 %v3635, %v3635
    %v3652 = vmul.f32 %v3636, %v3636
    %v3653 = vmul.f32 %v3637, %v3637
    %v3654 = vmul.f32 %v3638, %v3638
    %v3655 = vmul.f32 %v3639, %v3639
    %v3656 = vmul.f32 %v3640, %v3640
    %v3657 = vmul.f32 %v3641, %v3641
    %v3658 = vmul.f32 %v3642, %v3642
    %v3659 = vmul.f32 %v3643, %v3643
    %v3660 = vmul.f32 %v3644, %v3644
    %v3661 = vmul.f32 %v3645, %v3645
    %v3662 = vmul.f32 %v3646, %v3646
    %v3663 = vmul.f32 %v3647, %v3647
    %v3664 = vmul.f32 %v3648, %v3648
    %v3665 = vadd.f32 %v3649, %v3650
    %v3666 = vadd.f32 %v3665, %v3651
    %v3667 = vadd.f32 %v3666, %v3652
    %v3668 = vadd.f32 %v3667, %v3653
    %v3669 = vadd.f32 %v3668, %v3654
    %v3670 = vadd.f32 %v3669, %v3655
    %v3671 = vadd.f32 %v3670, %v3656
    %v3672 = vadd.f32 %v3671, %v3657
    %v3673 = vadd.f32 %v3672, %v3658
    %v3674 = vadd.f32 %v3673, %v3659
    %v3675 = vadd.f32 %v3674, %v3660
    %v3676 = vadd.f32 %v3675, %v3661
    %v3677 = vadd.f32 %v3676, %v3662
    %v3678 = vadd.f32 %v3677, %v3663
    %v3679 = vadd.f32 %v3678, %v3664
    %v3680 = vrot.slane %v3679, 4
    %v3681 = vadd.f32 %v3679, %v3680
    %v3682 = vrot.slane %v3681, 2
    %v3683 = vadd.f32 %v3681, %v3682
    %v3684 = vrot.slane %v3683, 1
    %v3685 = vadd.f32 %v3683, %v3684
    %v3686 = vmul.f32 %v3685, %v300
    %v3687 = vld [vmem:[%s8] sm:$0x1]
    %v3688 = vadd.f32 %v3686, 1e-05
    %v3689 = vrsqrt.pop %v3688
    %v3690 = vmul.f32 %v3687, %v3689
    %v3692 = vlaneseq
    %v3693 = vshrl.u32 %v3692, 7
    %v3694 = vsub.s32 0, %v3693
    %v3695 = vrot.slane %v3690, %v3694
    %v3697 = vmul.f32 %v3633, %v3695
    %v3698 = vmul.f32 %v3634, %v3695
    %v3699 = vmul.f32 %v3635, %v3695
    %v3700 = vmul.f32 %v3636, %v3695
    %v3701 = vmul.f32 %v3637, %v3695
    %v3702 = vmul.f32 %v3638, %v3695
    %v3703 = vmul.f32 %v3639, %v3695
    %v3704 = vmul.f32 %v3640, %v3695
    %v3705 = vmul.f32 %v3641, %v3695
    %v3706 = vmul.f32 %v3642, %v3695
    %v3707 = vmul.f32 %v3643, %v3695
    %v3708 = vmul.f32 %v3644, %v3695
    %v3709 = vmul.f32 %v3645, %v3695
    %v3710 = vmul.f32 %v3646, %v3695
    %v3711 = vmul.f32 %v3647, %v3695
    %v3712 = vmul.f32 %v3648, %v3695
    %v3713 = vld [vmem:[%s9] sm:$0x1]
    %v3715 = vlaneseq
    %v3716 = vshrl.u32 %v3715, 7
    %v3717 = vsub.s32 0, %v3716
    %v3718 = vrot.slane %v3713, %v3717
    %v3720 = vadd.f32 %v3697, %v3718
    %v3721 = vadd.f32 %v3698, %v3718
    %v3722 = vadd.f32 %v3699, %v3718
    %v3723 = vadd.f32 %v3700, %v3718
    %v3724 = vadd.f32 %v3701, %v3718
    %v3725 = vadd.f32 %v3702, %v3718
    %v3726 = vadd.f32 %v3703, %v3718
    %v3727 = vadd.f32 %v3704, %v3718
    %v3728 = vadd.f32 %v3705, %v3718
    %v3729 = vadd.f32 %v3706, %v3718
    %v3730 = vadd.f32 %v3707, %v3718
    %v3731 = vadd.f32 %v3708, %v3718
    %v3732 = vadd.f32 %v3709, %v3718
    %v3733 = vadd.f32 %v3710, %v3718
    %v3734 = vadd.f32 %v3711, %v3718
    %v3735 = vadd.f32 %v3712, %v3718
    %v3736 = vunpack.c.l.bf16 %v54
    %v3737 = vunpack.c.l.bf16 %v55
    %v3738 = vunpack.c.l.bf16 %v56
    %v3739 = vunpack.c.l.bf16 %v57
    %v3740 = vunpack.c.l.bf16 %v58
    %v3741 = vunpack.c.l.bf16 %v59
    %v3742 = vunpack.c.l.bf16 %v60
    %v3743 = vunpack.c.l.bf16 %v61
    %v3744 = vunpack.c.l.bf16 %v62
    %v3745 = vunpack.c.l.bf16 %v63
    %v3746 = vunpack.c.l.bf16 %v64
    %v3747 = vunpack.c.l.bf16 %v65
    %v3748 = vunpack.c.l.bf16 %v66
    %v3749 = vunpack.c.l.bf16 %v67
    %v3750 = vunpack.c.l.bf16 %v68
    %v3751 = vunpack.c.l.bf16 %v69
    %v3752 = vadd.f32 %v3720, %v3736
    %v3753 = vadd.f32 %v3721, %v3737
    %v3754 = vadd.f32 %v3722, %v3738
    %v3755 = vadd.f32 %v3723, %v3739
    %v3756 = vadd.f32 %v3724, %v3740
    %v3757 = vadd.f32 %v3725, %v3741
    %v3758 = vadd.f32 %v3726, %v3742
    %v3759 = vadd.f32 %v3727, %v3743
    %v3760 = vadd.f32 %v3728, %v3744
    %v3761 = vadd.f32 %v3729, %v3745
    %v3762 = vadd.f32 %v3730, %v3746
    %v3763 = vadd.f32 %v3731, %v3747
    %v3764 = vadd.f32 %v3732, %v3748
    %v3765 = vadd.f32 %v3733, %v3749
    %v3766 = vadd.f32 %v3734, %v3750
    %v3767 = vadd.f32 %v3735, %v3751
    %3768 = vst [vmem:[#allocation7] sm:$0xff] %v3752
    %3769 = vst [vmem:[#allocation7 + $0x8] sm:$0xff] %v3753
    %3770 = vst [vmem:[#allocation7 + $0x10] sm:$0xff] %v3754
    %3771 = vst [vmem:[#allocation7 + $0x18] sm:$0xff] %v3755
    %3772 = vst [vmem:[#allocation7 + $0x20] sm:$0xff] %v3756
    %3773 = vst [vmem:[#allocation7 + $0x28] sm:$0xff] %v3757
    %3774 = vst [vmem:[#allocation7 + $0x30] sm:$0xff] %v3758
    %3775 = vst [vmem:[#allocation7 + $0x38] sm:$0xff] %v3759
    %3776 = vst [vmem:[#allocation7 + $0x40] sm:$0xff] %v3760
    %3777 = vst [vmem:[#allocation7 + $0x48] sm:$0xff] %v3761
    %3778 = vst [vmem:[#allocation7 + $0x50] sm:$0xff] %v3762
    %3779 = vst [vmem:[#allocation7 + $0x58] sm:$0xff] %v3763
    %3780 = vst [vmem:[#allocation7 + $0x60] sm:$0xff] %v3764
    %3781 = vst [vmem:[#allocation7 + $0x68] sm:$0xff] %v3765
    %3782 = vst [vmem:[#allocation7 + $0x70] sm:$0xff] %v3766
    %3783 = vst [vmem:[#allocation7 + $0x78] sm:$0xff] %v3767
    %v3784 = vmax.f32 %v3752, 0.0
    %v3785 = vmax.f32 %v3753, 0.0
    %v3786 = vmax.f32 %v3754, 0.0
    %v3787 = vmax.f32 %v3755, 0.0
    %v3788 = vmax.f32 %v3756, 0.0
    %v3789 = vmax.f32 %v3757, 0.0
    %v3790 = vmax.f32 %v3758, 0.0
    %v3791 = vmax.f32 %v3759, 0.0
    %v3792 = vmax.f32 %v3760, 0.0
    %v3793 = vmax.f32 %v3761, 0.0
    %v3794 = vmax.f32 %v3762, 0.0
    %v3795 = vmax.f32 %v3763, 0.0
    %v3796 = vmax.f32 %v3764, 0.0
    %v3797 = vmax.f32 %v3765, 0.0
    %v3798 = vmax.f32 %v3766, 0.0
    %v3799 = vmax.f32 %v3767, 0.0
    %3800 = vst [vmem:[#allocation6] sm:$0xff] %v3784
    %3801 = vst [vmem:[#allocation6 + $0x8] sm:$0xff] %v3785
    %3802 = vst [vmem:[#allocation6 + $0x10] sm:$0xff] %v3786
    %3803 = vst [vmem:[#allocation6 + $0x18] sm:$0xff] %v3787
    %3804 = vst [vmem:[#allocation6 + $0x20] sm:$0xff] %v3788
    %3805 = vst [vmem:[#allocation6 + $0x28] sm:$0xff] %v3789
    %3806 = vst [vmem:[#allocation6 + $0x30] sm:$0xff] %v3790
    %3807 = vst [vmem:[#allocation6 + $0x38] sm:$0xff] %v3791
    %3808 = vst [vmem:[#allocation6 + $0x40] sm:$0xff] %v3792
    %3809 = vst [vmem:[#allocation6 + $0x48] sm:$0xff] %v3793
    %3810 = vst [vmem:[#allocation6 + $0x50] sm:$0xff] %v3794
    %3811 = vst [vmem:[#allocation6 + $0x58] sm:$0xff] %v3795
    %3812 = vst [vmem:[#allocation6 + $0x60] sm:$0xff] %v3796
    %3813 = vst [vmem:[#allocation6 + $0x68] sm:$0xff] %v3797
    %3814 = vst [vmem:[#allocation6 + $0x70] sm:$0xff] %v3798
    %3815 = vst [vmem:[#allocation6 + $0x78] sm:$0xff] %v3799
    // Predicated region
    $region46: #{bottleneck_cifar_forward.1} parent=1 // pred_check
      _
    $region47: #{bottleneck_cifar_forward.1} parent=1 // pred_check_branch
      %3817 = sbr.rel (0) target = $region49
    $region48: #{bottleneck_cifar_forward.1} parent=1 // pred_region
      %s3819 = ssub.s32 2048, 2048
      %3820 = vsyncadd [#allocation5], %s3819
      %s3821 = sshll.u32 [#allocation6], 4
      %s3822 = int_to_ptr.vmem [resolvable:$true] %s3821
      %3827 = dma.vmem_to_hbm [thread:$0]  %s3822, 2048, %s10, [#allocation5], 128, 128, 8
    $region49: #{bottleneck_cifar_forward.1} parent=1 // pred_fallthru
      _
    // Predicated region
    $region50: #{bottleneck_cifar_forward.1} parent=1 // pred_check
      _
    $region51: #{bottleneck_cifar_forward.1} parent=1 // pred_check_branch
      %3829 = sbr.rel (0) target = $region53
    $region52: #{bottleneck_cifar_forward.1} parent=1 // pred_region
      %s3831 = ssub.s32 2048, 2048
      %3832 = vsyncadd [#allocation8], %s3831
      %s3833 = sshll.u32 [#allocation7], 4
      %s3834 = int_to_ptr.vmem [resolvable:$true] %s3833
      %3839 = dma.vmem_to_hbm [thread:$0]  %s3834, 2048, %s11, [#allocation8], 128, 128, 8
    $region53: #{bottleneck_cifar_forward.1} parent=1 // pred_fallthru
      _
    // Predicated region
    $region54: #{bottleneck_cifar_forward.1} parent=1 // pred_check
      _
    $region55: #{bottleneck_cifar_forward.1} parent=1 // pred_check_branch
      %3841 = sbr.rel (0) target = $region57
    $region56: #{bottleneck_cifar_forward.1} parent=1 // pred_region
      %3842 = dma.done [#allocation5], 2048
    $region57: #{bottleneck_cifar_forward.1} parent=1 // pred_fallthru
      _
    // Predicated region
    $region58: #{bottleneck_cifar_forward.1} parent=1 // pred_check
      _
    $region59: #{bottleneck_cifar_forward.1} parent=1 // pred_check_branch
      %3844 = sbr.rel (0) target = $region61
    $region60: #{bottleneck_cifar_forward.1} parent=1 // pred_region
      %3845 = dma.done [#allocation8], 2048
    $region61: #{bottleneck_cifar_forward.1} parent=1 // pred_fallthru
      _
    %3846 = vsyncpa [#allocation4], 1
    %3847 = vsyncpa [#allocation5], 1
    %3848 = vsyncpa [#allocation8], 1

</llo_original>
